<compile_context>
chip_gen: v5e
topology: v5e:2x2
jax: 0.10.0
libtpu: 0.0.40
codegen_flags: <defaults>
</compile_context>

<pallas_src>
import functools
import math

import jax
import jax.numpy as jnp
from jax.experimental import pallas as pl
from jax.experimental.pallas import tpu as pltpu


# ----------------------------------------------------------------------------
# Fused 3x3 conv kernel: multi-input im2col + single MXU dot + epilogue
# (bias, residual adds, LeakyReLU, stride-2 subsample, fused 2x2 avg pool).
# ----------------------------------------------------------------------------
def _conv3x3_kernel(*refs, n_in, n_res, cins, H, W, cout, stride, slope,
                    out_scale, res_first_scale, res_scales, pool, pool_slope,
                    pool_scale, big_dot, lane_dense):
    # refs = [x_0 .. x_{n_in-1}] (each (1, H+2, W+2, cin_i), bf16, pre-padded),
    #        w (9*sum(cins), cout) bf16, b (1, cout) f32,
    #        [res_0 .. res_{n_res-1}] (each (1, H, W, cout), bf16),
    #        o_ref, [pool_ref]
    x_refs = refs[:n_in]
    w_ref = refs[n_in]
    b_ref = refs[n_in + 1]
    res_refs = refs[n_in + 2:n_in + 2 + n_res]
    o_ref = refs[n_in + 2 + n_res]
    pool_ref = refs[n_in + 2 + n_res + 1] if pool else None

    HW = H * W

    if big_dot:
        # im2col slab (HW, 9*sum(cins)); column order = (tap major, then the
        # concatenated channel order), matching w.reshape(9*cin_total, cout).
        tap_slabs = []
        for dy in range(3):
            for dx in range(3):
                parts = [
                    x_refs[i][0, dy:dy + H, dx:dx + W, :].reshape(HW, cins[i])
                    for i in range(n_in)
                ]
                tap_slabs.append(parts[0] if n_in == 1
                                 else jnp.concatenate(parts, axis=-1))
        slab = (tap_slabs[0] if len(tap_slabs) == 1
                else jnp.concatenate(tap_slabs, axis=-1))
        acc = jnp.dot(slab, w_ref[...], preferred_element_type=jnp.float32)
    else:
        # Fallback: per-tap / per-input dots accumulated in f32 (proven path).
        acc = jnp.zeros((HW, cout), jnp.float32)
        row = 0
        for dy in range(3):
            for dx in range(3):
                for i in range(n_in):
                    piece = x_refs[i][0, dy:dy + H, dx:dx + W, :]
                    piece = piece.reshape(HW, cins[i])
                    acc = acc + jnp.dot(piece, w_ref[row:row + cins[i], :],
                                        preferred_element_type=jnp.float32)
                    row += cins[i]

    # Epilogue (f32): bias, output scale, fused residuals, LeakyReLU.
    out = acc + b_ref[...].astype(jnp.float32)
    if out_scale != 1.0:
        out = out * out_scale
    if res_first_scale is not None:
        # Residual == (unpadded) first input: take its center crop, no extra
        # HBM read of the same tensor.
        r0 = x_refs[0][0, 1:1 + H, 1:1 + W, :].reshape(HW, cout)
        out = out + res_first_scale * r0.astype(jnp.float32)
    for j in range(n_res):
        rj = res_refs[j][0].reshape(HW, cout).astype(jnp.float32)
        out = out + res_scales[j] * rj
    if slope is not None:
        out = jnp.where(out >= 0, out, out * slope)

    # Main output (stride-2 subsampled in-kernel; TODO(synk): the odd rows/cols
    # are still multiplied-and-dropped -- only the HBM writes are reduced 4x).
    if stride == 2:
        Ho, Wo = H // 2, W // 2
        ev_rows = out.reshape(Ho, 2, W, cout)[:, 0]          # (Ho, W, cout)
        out_sp = ev_rows.reshape(Ho, Wo, 2, cout)[:, :, 0, :]  # (Ho, Wo, cout)
    else:
        Ho, Wo = H, W
        out_sp = out.reshape(Ho, Wo, cout)
    if lane_dense:
        o_ref[0] = out_sp.reshape(Ho, Wo * cout).astype(o_ref.dtype)
    else:
        o_ref[0] = out_sp.astype(o_ref.dtype)

    # Optional fused 2x2 average pool of (scaled / LeakyReLU'd) output.
    if pool:
        pin = out
        if pool_slope is not None:
            pin = jnp.where(pin >= 0, pin, pin * pool_slope)
        Hp, Wp = H // 2, W // 2
        rows = pin.reshape(Hp, 2, W, cout)
        rsum = rows[:, 0] + rows[:, 1]                        # (Hp, W, cout)
        cols = rsum.reshape(Hp, Wp, 2, cout)
        pooled = (cols[:, :, 0, :] + cols[:, :, 1, :]) * (0.25 * pool_scale)
        if lane_dense:
            pool_ref[0] = pooled.reshape(Hp, Wp * cout).astype(pool_ref.dtype)
        else:
            pool_ref[0] = pooled.astype(pool_ref.dtype)


# ----------------------------------------------------------------------------
# One-shot feature probes: unaligned lane concat (im2col fast path) and the
# lane-merging reshape (lane-dense stores).  If Mosaic rejects either, we fall
# back to the previously-proven formulation so the script always runs.
# ----------------------------------------------------------------------------
def _probe_lane_concat():
    M, widths = 16, (3, 8, 16)
    try:
        def kern(a_ref, b_ref, c_ref, o_ref):
            o_ref[...] = jnp.concatenate(
                [a_ref[...], b_ref[...], c_ref[...]], axis=-1)
        f = pl.pallas_call(
            kern,
            out_shape=jax.ShapeDtypeStruct((M, sum(widths)), jnp.bfloat16),
            grid=(1,),
            in_specs=[pl.BlockSpec((M, w), lambda n: (0, 0)) for w in widths],
            out_specs=pl.BlockSpec((M, sum(widths)), lambda n: (0, 0)),
        )
        arrs = [(jnp.arange(M * w, dtype=jnp.float32) % 37)
                .reshape(M, w).astype(jnp.bfloat16) for w in widths]
        got = jax.block_until_ready(f(*arrs))
        want = jnp.concatenate(arrs, axis=-1)
        return bool(jnp.array_equal(got, want))
    except Exception:
        return False


def _probe_lane_dense_store():
    try:
        for (H, W, C) in ((8, 8, 8), (8, 16, 16)):
            def kern(x_ref, o_ref):
                v = x_ref[0].astype(jnp.float32)
                o_ref[0] = v.reshape(H, W * C).astype(o_ref.dtype)
            f = pl.pallas_call(
                kern,
                out_shape=jax.ShapeDtypeStruct((1, H, W * C), jnp.bfloat16),
                grid=(1,),
                in_specs=[pl.BlockSpec((1, H, W, C), lambda n: (n, 0, 0, 0))],
                out_specs=pl.BlockSpec((1, H, W * C), lambda n: (n, 0, 0)),
            )
            x = (jnp.arange(H * W * C, dtype=jnp.float32) % 51)
            x = x.reshape(1, H, W, C).astype(jnp.bfloat16)
            got = jax.block_until_ready(f(x))
            if not bool(jnp.array_equal(got.reshape(1, H, W, C), x)):
                return False
        return True
    except Exception:
        return False


@functools.lru_cache(maxsize=None)
def _features():
    return _probe_lane_concat(), _probe_lane_dense_store()


# ----------------------------------------------------------------------------
# pallas_call builder (memoized: each distinct config compiles exactly once)
# ----------------------------------------------------------------------------
@functools.lru_cache(maxsize=None)
def _build_conv(N, H, W, cins, cout, stride, slope, out_scale, res_first_scale,
                res_scales, pool, pool_slope, pool_scale, big_dot, lane_dense):
    n_res = len(res_scales)
    K = 9 * sum(cins)
    Ho, Wo = (H // 2, W // 2) if stride == 2 else (H, W)

    kernel = functools.partial(
        _conv3x3_kernel, n_in=len(cins), n_res=n_res, cins=cins, H=H, W=W,
        cout=cout, stride=stride, slope=slope, out_scale=out_scale,
        res_first_scale=res_first_scale, res_scales=res_scales, pool=pool,
        pool_slope=pool_slope, pool_scale=pool_scale, big_dot=big_dot,
        lane_dense=lane_dense)

    in_specs = [pl.BlockSpec((1, H + 2, W + 2, c), lambda n: (n, 0, 0, 0))
                for c in cins]
    in_specs.append(pl.BlockSpec((K, cout), lambda n: (0, 0)))       # weight
    in_specs.append(pl.BlockSpec((1, cout), lambda n: (0, 0)))       # bias
    in_specs += [pl.BlockSpec((1, H, W, cout), lambda n: (n, 0, 0, 0))
                 for _ in range(n_res)]                              # residuals

    if lane_dense:
        main_shape = jax.ShapeDtypeStruct((N, Ho, Wo * cout), jnp.bfloat16)
        main_spec = pl.BlockSpec((1, Ho, Wo * cout), lambda n: (n, 0, 0))
    else:
        main_shape = jax.ShapeDtypeStruct((N, Ho, Wo, cout), jnp.bfloat16)
        main_spec = pl.BlockSpec((1, Ho, Wo, cout), lambda n: (n, 0, 0, 0))

    if pool:
        Hp, Wp = Ho // 2, Wo // 2
        if lane_dense:
            pool_shape = jax.ShapeDtypeStruct((N, Hp, Wp * cout), jnp.bfloat16)
            pool_spec = pl.BlockSpec((1, Hp, Wp * cout), lambda n: (n, 0, 0))
        else:
            pool_shape = jax.ShapeDtypeStruct((N, Hp, Wp, cout), jnp.bfloat16)
            pool_spec = pl.BlockSpec((1, Hp, Wp, cout), lambda n: (n, 0, 0, 0))
        out_shape = (main_shape, pool_shape)
        out_specs = (main_spec, pool_spec)
    else:
        out_shape = main_shape
        out_specs = main_spec

    return pl.pallas_call(
        kernel,
        out_shape=out_shape,
        grid=(N,),
        in_specs=in_specs,
        out_specs=out_specs,
        compiler_params=pltpu.CompilerParams(
            dimension_semantics=("parallel",),
            vmem_limit_bytes=64 * 1024 * 1024),
    )


# ----------------------------------------------------------------------------
# Layer wrappers
# ----------------------------------------------------------------------------
def pad1(x):
    """Zero-pad spatial dims by 1 (done once per feature map, NHWC)."""
    return jnp.pad(x, ((0, 0), (1, 1), (1, 1), (0, 0)))


def conv3x3(xs_pad, w, b, *, slope=None, stride=1, out_scale=1.0,
            res_first_scale=None, residuals=(), pool=False, pool_slope=None,
            pool_scale=1.0):
    """Fused 3x3 conv over the channel-concatenation of `xs_pad`.

    xs_pad: list of NHWC inputs, each already zero-padded by 1 (bf16).
    w: (3, 3, sum(cin_i), cout) HWIO; b: (cout,).
    out = lrelu_slope( (conv + b) * out_scale
                       + res_first_scale * xs_pad[0](center crop)
                       + sum_j scale_j * residual_j )
    Optionally also returns avgpool2x2(pool_scale * lrelu_pool_slope(out)).
    """
    big_dot, lane_dense = _features()
    N, Hp2, Wp2, _ = xs_pad[0].shape
    H, W = Hp2 - 2, Wp2 - 2
    cins = tuple(int(x.shape[-1]) for x in xs_pad)
    cout = int(w.shape[-1])
    assert w.shape == (3, 3, sum(cins), cout)
    if res_first_scale is not None:
        assert cins[0] == cout
    if stride == 2:
        # kernel=3 / pad=1 / stride=2 only (even output grid); no fused extras.
        assert H % 2 == 0 and W % 2 == 0
        assert not pool and res_first_scale is None and not residuals
    if pool:
        assert stride == 1 and H % 2 == 0 and W % 2 == 0

    res_arrays = tuple(a for a, _ in residuals)
    res_scales = tuple(float(s) for _, s in residuals)

    w2 = w.reshape(9 * sum(cins), cout).astype(jnp.bfloat16)
    b2 = b.reshape(1, cout).astype(jnp.float32)

    fn = _build_conv(N, H, W, cins, cout, stride,
                     None if slope is None else float(slope),
                     float(out_scale),
                     None if res_first_scale is None else float(res_first_scale),
                     res_scales, bool(pool),
                     None if pool_slope is None else float(pool_slope),
                     float(pool_scale), big_dot, lane_dense)

    args = list(xs_pad) + [w2, b2] + [a.astype(jnp.bfloat16) for a in res_arrays]
    out = fn(*args)

    Ho, Wo = (H // 2, W // 2) if stride == 2 else (H, W)
    if pool:
        main, pooled = out
        if lane_dense:
            main = main.reshape(N, Ho, Wo, cout)
            pooled = pooled.reshape(N, Ho // 2, Wo // 2, cout)
        return main, pooled
    main = out
    if lane_dense:
        main = main.reshape(N, Ho, Wo, cout)
    return main


# ----------------------------------------------------------------------------
# Parameter init (deterministic, synthetic; HWIO weights)
# ----------------------------------------------------------------------------
def init_conv_params(key, cin, cout):
    kw, kb = jax.random.split(key)
    std = 0.1 / (3.0 * math.sqrt(cin))
    w = jax.random.normal(kw, (3, 3, cin, cout), jnp.float32) * std
    b = jax.random.normal(kb, (cout,), jnp.float32) * 0.01
    return w, b


def init_rdb(key, nf, gc):
    cins = [nf, nf + gc, nf + 2 * gc, nf + 3 * gc, nf + 4 * gc]
    couts = [gc, gc, gc, gc, nf]
    keys = jax.random.split(key, 5)
    return [init_conv_params(k, ci, co) for k, ci, co in zip(keys, cins, couts)]


def init_params(key, nf, gc, n_rrdb):
    keys = jax.random.split(key, 4 + n_rrdb)
    params = {
        'conv_first_1': init_conv_params(keys[0], 3, nf),
        'conv_first_2': init_conv_params(keys[1], nf, nf),
        'downconv1': init_conv_params(keys[2], nf, nf),
        'downconv2': init_conv_params(keys[3], nf, nf),
        'rrdb': [],
    }
    for i in range(n_rrdb):
        rk = jax.random.split(keys[4 + i], 3)
        params['rrdb'].append([init_rdb(rk[j], nf, gc) for j in range(3)])
    return params


# ----------------------------------------------------------------------------
# RRDB feature extraction (standard ESRGAN RRDB = 3x ResidualDenseBlock_5C),
# dense connections and residual adds fused into the conv kernels.
# ----------------------------------------------------------------------------
def rdb_forward(x_pad, p, *, out_scale=0.2, res_first_scale=1.0,
                extra_residuals=(), pool=False, pool_slope=None, pool_scale=1.0):
    x1 = conv3x3([x_pad], *p[0], slope=0.2)
    x1p = pad1(x1)
    x2 = conv3x3([x_pad, x1p], *p[1], slope=0.2)
    x2p = pad1(x2)
    x3 = conv3x3([x_pad, x1p, x2p], *p[2], slope=0.2)
    x3p = pad1(x3)
    x4 = conv3x3([x_pad, x1p, x2p, x3p], *p[3], slope=0.2)
    x4p = pad1(x4)
    # conv5: epilogue fuses "x5*0.2 + x" (and, for the RRDB-final RDB, also the
    # RRDB-level residual and the optional pooled side output).
    return conv3x3([x_pad, x1p, x2p, x3p, x4p], *p[4], slope=None,
                   out_scale=out_scale, res_first_scale=res_first_scale,
                   residuals=extra_residuals, pool=pool, pool_slope=pool_slope,
                   pool_scale=pool_scale)


def rrdb_forward(fea, fea_pad, p, *, pool=False, pool_scale=1.0):
    r1 = rdb_forward(fea_pad, p[0])
    r2 = rdb_forward(pad1(r1), p[1])
    # rrdb_out = (x5*0.2 + r2)*0.2 + fea  ==  x5*0.04 + 0.2*r2 + fea, fused.
    return rdb_forward(pad1(r2), p[2], out_scale=0.04, res_first_scale=0.2,
                       extra_residuals=((fea, 1.0),), pool=pool,
                       pool_slope=None, pool_scale=pool_scale)


# ----------------------------------------------------------------------------
# low_light_transformer.forward  (HR_in=True path, as implied by the forward)
# ----------------------------------------------------------------------------
def low_light_transformer_forward(params, x_nchw):
    x_center = jnp.transpose(x_nchw, (0, 2, 3, 1)).astype(jnp.bfloat16)  # NHWC

    L1_fea_1 = conv3x3([pad1(x_center)], *params['conv_first_1'], slope=0.1)
    L1_fea_2 = conv3x3([pad1(L1_fea_1)], *params['conv_first_2'], slope=0.1,
                       stride=2)
    fea = L1_fea_2

    block_results = {}
    pooled_fea_down2 = None
    n_blocks = len(params['rrdb'])
    for idx, p_rrdb in enumerate(params['rrdb']):
        fea_pad = pad1(fea)
        if idx == n_blocks - 1:
            # Fuse avgpool2x2(3 * fea) (the downconv1 input) into the last
            # RRDB's final conv; the factor 3 comes from the identity
            # TransConv placeholder below.
            fea, pooled_fea_down2 = rrdb_forward(fea, fea_pad, p_rrdb,
                                                 pool=True, pool_scale=3.0)
        else:
            fea = rrdb_forward(fea, fea_pad, p_rrdb)
        block_results['block_{}'.format(idx)] = fea

    # TODO(synk): TransConvNet (self.TransConv_Hybrid) is defined in an
    # external module not provided; treated as identity, so
    # fea + fea_trans + fea_conv == 3 * fea.
    fea_down2 = fea * 3.0                                   # 'fea_up2'

    # downconv1 also emits avgpool2x2(lrelu_0.1(out)) as a fused side output
    # (the downconv2 input), avoiding an HBM round trip of fea_down4.
    fea_down4, pooled_lrelu4 = conv3x3([pad1(pooled_fea_down2)],
                                       *params['downconv1'], slope=None,
                                       pool=True, pool_slope=0.1,
                                       pool_scale=1.0)
    fea_down8 = conv3x3([pad1(pooled_lrelu4)], *params['downconv2'], slope=None)

    results = {'fea_up0': fea_down8, 'fea_up1': fea_down4, 'fea_up2': fea_down2}
    results.update(block_results)
    # Back to NCHW / float32 (PyTorch convention) for the returned dict only.
    return {k: jnp.transpose(v, (0, 3, 1, 2)).astype(jnp.float32)
            for k, v in results.items()}


# ----------------------------------------------------------------------------
if __name__ == "__main__":
    nf, gc, n_rrdb = 16, 8, 6   # nf scaled down from 64 (gc from 32) for a small run
    key = jax.random.PRNGKey(0)
    k_in, k_par = jax.random.split(key)

    x = jax.random.normal(k_in, (2, 3, 16, 16), jnp.float32)  # NCHW, like PyTorch
    params = init_params(k_par, nf, gc, n_rrdb)

    results = low_light_transformer_forward(params, x)
    results = jax.tree_util.tree_map(lambda a: a.block_until_ready(), results)

    assert results['fea_up2'].shape == (2, nf, 8, 8)
    assert results['fea_up1'].shape == (2, nf, 4, 4)
    assert results['fea_up0'].shape == (2, nf, 2, 2)
    for i in range(n_rrdb):
        assert results['block_{}'.format(i)].shape == (2, nf, 8, 8)
    for v in results.values():
        assert bool(jnp.all(jnp.isfinite(v)))

    print("KERNEL_OK")
</pallas_src>

<mosaic_0001>
module attributes {stable_mosaic.version = 11 : i64} {
  func.func @kern(%arg0: i32, %arg1: memref<16x3xbf16, #tpu.memory_space<vmem>>, %arg2: memref<16x8xbf16, #tpu.memory_space<vmem>>, %arg3: memref<16x16xbf16, #tpu.memory_space<vmem>>, %arg4: memref<16x27xbf16, #tpu.memory_space<vmem>>) attributes {dimension_semantics = [#tpu.dimension_semantics<arbitrary>], iteration_bounds = array<i64: 1>, scalar_prefetch = 0 : i64, scratch_operands = 0 : i64, tpu.core_type = #tpu.core_type<tc>, window_params = [{pipeline_mode = #tpu.pipeline_mode<synchronous>, transform_indices = @transform_0, window_bounds = array<i64: 16, 3>}, {pipeline_mode = #tpu.pipeline_mode<synchronous>, transform_indices = @transform_1, window_bounds = array<i64: 16, 8>}, {pipeline_mode = #tpu.pipeline_mode<synchronous>, transform_indices = @transform_2, window_bounds = array<i64: 16, 16>}, {pipeline_mode = #tpu.pipeline_mode<synchronous>, transform_indices = @transform_3, window_bounds = array<i64: 16, 27>}]} {
    %c0 = arith.constant 0 : index
    %c0_0 = arith.constant 0 : index
    %0 = vector.load %arg1[%c0, %c0_0] : memref<16x3xbf16, #tpu.memory_space<vmem>>, vector<16x3xbf16>
    %c0_1 = arith.constant 0 : index
    %c0_2 = arith.constant 0 : index
    %1 = vector.load %arg2[%c0_1, %c0_2] : memref<16x8xbf16, #tpu.memory_space<vmem>>, vector<16x8xbf16>
    %c0_3 = arith.constant 0 : index
    %c0_4 = arith.constant 0 : index
    %2 = vector.load %arg3[%c0_3, %c0_4] : memref<16x16xbf16, #tpu.memory_space<vmem>>, vector<16x16xbf16>
    %3 = tpu.concatenate %0, %1, %2 in 1 : vector<16x3xbf16>, vector<16x8xbf16>, vector<16x16xbf16> -> vector<16x27xbf16>
    %c0_5 = arith.constant 0 : index
    %c0_6 = arith.constant 0 : index
    %4 = vector.load %arg4[%c0_5, %c0_6] : memref<16x27xbf16, #tpu.memory_space<vmem>>, vector<16x27xbf16>
    tpu.vector_store %arg4[%c0_5, %c0_6], %3 {strides = array<i32>} : memref<16x27xbf16, #tpu.memory_space<vmem>>, vector<16x27xbf16>,
    return
  }
  func.func @transform_0(%arg0: i32) -> (i32, i32) {
    %c0_i32 = arith.constant 0 : i32
    %c0_i32_0 = arith.constant 0 : i32
    %c0_i32_1 = arith.constant 0 : i32
    return %c0_i32, %c0_i32_0 : i32, i32
  }
  func.func @transform_1(%arg0: i32) -> (i32, i32) {
    %c0_i32 = arith.constant 0 : i32
    %c0_i32_0 = arith.constant 0 : i32
    %c0_i32_1 = arith.constant 0 : i32
    return %c0_i32, %c0_i32_0 : i32, i32
  }
  func.func @transform_2(%arg0: i32) -> (i32, i32) {
    %c0_i32 = arith.constant 0 : i32
    %c0_i32_0 = arith.constant 0 : i32
    %c0_i32_1 = arith.constant 0 : i32
    return %c0_i32, %c0_i32_0 : i32, i32
  }
  func.func @transform_3(%arg0: i32) -> (i32, i32) {
    %c0_i32 = arith.constant 0 : i32
    %c0_i32_0 = arith.constant 0 : i32
    %c0_i32_1 = arith.constant 0 : i32
    return %c0_i32, %c0_i32_0 : i32, i32
  }
}

module attributes {stable_mosaic.version = 11 : i64} {
  func.func @kern(%arg0: i32, %arg1: memref<1x8x8x8xbf16, #tpu.memory_space<vmem>>, %arg2: memref<1x8x64xbf16, #tpu.memory_space<vmem>>) attributes {dimension_semantics = [#tpu.dimension_semantics<arbitrary>], iteration_bounds = array<i64: 1>, scalar_prefetch = 0 : i64, scratch_operands = 0 : i64, tpu.core_type = #tpu.core_type<tc>, window_params = [{transform_indices = @transform_0, window_bounds = array<i64: 1, 8, 8, 8>}, {transform_indices = @transform_1, window_bounds = array<i64: 1, 8, 64>}]} {
    %c0 = arith.constant 0 : index
    %c0_0 = arith.constant 0 : index
    %c0_1 = arith.constant 0 : index
    %c0_2 = arith.constant 0 : index
    %0 = vector.load %arg1[%c0, %c0_0, %c0_1, %c0_2] : memref<1x8x8x8xbf16, #tpu.memory_space<vmem>>, vector<1x8x8x8xbf16>
    %1 = vector.shape_cast %0 : vector<1x8x8x8xbf16> to vector<8x8x8xbf16>
    %2 = arith.extf %1 : vector<8x8x8xbf16> to vector<8x8x8xf32>
    %3 = vector.shape_cast %2 : vector<8x8x8xf32> to vector<8x64xf32>
    %4 = arith.truncf %3 : vector<8x64xf32> to vector<8x64xbf16>
    %c0_3 = arith.constant 0 : index
    %c0_4 = arith.constant 0 : index
    %c0_5 = arith.constant 0 : index
    %5 = vector.load %arg2[%c0_3, %c0_4, %c0_5] : memref<1x8x64xbf16, #tpu.memory_space<vmem>>, vector<1x8x64xbf16>
    %6 = vector.shape_cast %5 : vector<1x8x64xbf16> to vector<8x64xbf16>
    %7 = vector.shape_cast %4 : vector<8x64xbf16> to vector<1x8x64xbf16>
    tpu.vector_store %arg2[%c0_3, %c0_4, %c0_5], %7 {strides = array<i32>} : memref<1x8x64xbf16, #tpu.memory_space<vmem>>, vector<1x8x64xbf16>,
    return
  }
  func.func @transform_0(%arg0: i32) -> (i32, i32, i32, i32) {
    %c0_i32 = arith.constant 0 : i32
    %c0_i32_0 = arith.constant 0 : i32
    %c0_i32_1 = arith.constant 0 : i32
    %c0_i32_2 = arith.constant 0 : i32
    return %arg0, %c0_i32, %c0_i32_0, %c0_i32_1 : i32, i32, i32, i32
  }
  func.func @transform_1(%arg0: i32) -> (i32, i32, i32) {
    %c0_i32 = arith.constant 0 : i32
    %c0_i32_0 = arith.constant 0 : i32
    %c0_i32_1 = arith.constant 0 : i32
    return %arg0, %c0_i32, %c0_i32_0 : i32, i32, i32
  }
}

module attributes {stable_mosaic.version = 11 : i64} {
  func.func @_conv3x3_kernel(%arg0: i32, %arg1: memref<1x18x18x3xbf16, #tpu.memory_space<vmem>>, %arg2: memref<27x16xbf16, #tpu.memory_space<vmem>>, %arg3: memref<1x16xf32, #tpu.memory_space<vmem>>, %arg4: memref<1x16x16x16xbf16, #tpu.memory_space<vmem>>) attributes {dimension_semantics = [#tpu.dimension_semantics<parallel>], iteration_bounds = array<i64: 2>, scalar_prefetch = 0 : i64, scratch_operands = 0 : i64, tpu.core_type = #tpu.core_type<tc>, window_params = [{transform_indices = @transform_0, window_bounds = array<i64: 1, 18, 18, 3>}, {pipeline_mode = #tpu.pipeline_mode<synchronous>, transform_indices = @transform_1, window_bounds = array<i64: 27, 16>}, {pipeline_mode = #tpu.pipeline_mode<synchronous>, transform_indices = @transform_2, window_bounds = array<i64: 1, 16>}, {transform_indices = @transform_3, window_bounds = array<i64: 1, 16, 16, 16>}]} {
    %cst = arith.constant 0.000000e+00 : f32
    %0 = vector.broadcast %cst : f32 to vector<256x16xf32>
    %c0 = arith.constant 0 : index
    %c0_0 = arith.constant 0 : index
    %c0_1 = arith.constant 0 : index
    %c0_2 = arith.constant 0 : index
    %1 = vector.load %arg1[%c0, %c0_0, %c0_1, %c0_2] : memref<1x18x18x3xbf16, #tpu.memory_space<vmem>>, vector<1x16x16x3xbf16>
    %2 = vector.shape_cast %1 : vector<1x16x16x3xbf16> to vector<16x16x3xbf16>
    %3 = vector.shape_cast %2 : vector<16x16x3xbf16> to vector<256x3xbf16>
    %c0_3 = arith.constant 0 : index
    %c0_4 = arith.constant 0 : index
    %4 = vector.load %arg2[%c0_3, %c0_4] : memref<27x16xbf16, #tpu.memory_space<vmem>>, vector<3x16xbf16>
    %cst_5 = arith.constant dense<0.000000e+00> : vector<256x16xf32>
    %5 = tpu.matmul %3, %4, %cst_5 {dimension_numbers = #tpu.dot_dimension_numbers<[1], [0], [0], [1], [0, 0, 1, 1], [], []>} : vector<256x3xbf16>, vector<3x16xbf16>, vector<256x16xf32> -> vector<256x16xf32>
    %6 = arith.addf %0, %5 : vector<256x16xf32>
    %c0_6 = arith.constant 0 : index
    %c0_7 = arith.constant 0 : index
    %c1 = arith.constant 1 : index
    %c0_8 = arith.constant 0 : index
    %7 = vector.load %arg1[%c0_6, %c0_7, %c1, %c0_8] : memref<1x18x18x3xbf16, #tpu.memory_space<vmem>>, vector<1x16x16x3xbf16>
    %8 = vector.shape_cast %7 : vector<1x16x16x3xbf16> to vector<16x16x3xbf16>
    %9 = vector.shape_cast %8 : vector<16x16x3xbf16> to vector<256x3xbf16>
    %c3 = arith.constant 3 : index
    %c0_9 = arith.constant 0 : index
    %10 = vector.load %arg2[%c3, %c0_9] : memref<27x16xbf16, #tpu.memory_space<vmem>>, vector<3x16xbf16>
    %cst_10 = arith.constant dense<0.000000e+00> : vector<256x16xf32>
    %11 = tpu.matmul %9, %10, %cst_10 {dimension_numbers = #tpu.dot_dimension_numbers<[1], [0], [0], [1], [0, 0, 1, 1], [], []>} : vector<256x3xbf16>, vector<3x16xbf16>, vector<256x16xf32> -> vector<256x16xf32>
    %12 = arith.addf %6, %11 : vector<256x16xf32>
    %c0_11 = arith.constant 0 : index
    %c0_12 = arith.constant 0 : index
    %c2 = arith.constant 2 : index
    %c0_13 = arith.constant 0 : index
    %13 = vector.load %arg1[%c0_11, %c0_12, %c2, %c0_13] : memref<1x18x18x3xbf16, #tpu.memory_space<vmem>>, vector<1x16x16x3xbf16>
    %14 = vector.shape_cast %13 : vector<1x16x16x3xbf16> to vector<16x16x3xbf16>
    %15 = vector.shape_cast %14 : vector<16x16x3xbf16> to vector<256x3xbf16>
    %c6 = arith.constant 6 : index
    %c0_14 = arith.constant 0 : index
    %16 = vector.load %arg2[%c6, %c0_14] : memref<27x16xbf16, #tpu.memory_space<vmem>>, vector<3x16xbf16>
    %cst_15 = arith.constant dense<0.000000e+00> : vector<256x16xf32>
    %17 = tpu.matmul %15, %16, %cst_15 {dimension_numbers = #tpu.dot_dimension_numbers<[1], [0], [0], [1], [0, 0, 1, 1], [], []>} : vector<256x3xbf16>, vector<3x16xbf16>, vector<256x16xf32> -> vector<256x16xf32>
    %18 = arith.addf %12, %17 : vector<256x16xf32>
    %c0_16 = arith.constant 0 : index
    %c1_17 = arith.constant 1 : index
    %c0_18 = arith.constant 0 : index
    %c0_19 = arith.constant 0 : index
    %19 = vector.load %arg1[%c0_16, %c1_17, %c0_18, %c0_19] : memref<1x18x18x3xbf16, #tpu.memory_space<vmem>>, vector<1x16x16x3xbf16>
    %20 = vector.shape_cast %19 : vector<1x16x16x3xbf16> to vector<16x16x3xbf16>
    %21 = vector.shape_cast %20 : vector<16x16x3xbf16> to vector<256x3xbf16>
    %c9 = arith.constant 9 : index
    %c0_20 = arith.constant 0 : index
    %22 = vector.load %arg2[%c9, %c0_20] : memref<27x16xbf16, #tpu.memory_space<vmem>>, vector<3x16xbf16>
    %cst_21 = arith.constant dense<0.000000e+00> : vector<256x16xf32>
    %23 = tpu.matmul %21, %22, %cst_21 {dimension_numbers = #tpu.dot_dimension_numbers<[1], [0], [0], [1], [0, 0, 1, 1], [], []>} : vector<256x3xbf16>, vector<3x16xbf16>, vector<256x16xf32> -> vector<256x16xf32>
    %24 = arith.addf %18, %23 : vector<256x16xf32>
    %c0_22 = arith.constant 0 : index
    %c1_23 = arith.constant 1 : index
    %c1_24 = arith.constant 1 : index
    %c0_25 = arith.constant 0 : index
    %25 = vector.load %arg1[%c0_22, %c1_23, %c1_24, %c0_25] : memref<1x18x18x3xbf16, #tpu.memory_space<vmem>>, vector<1x16x16x3xbf16>
    %26 = vector.shape_cast %25 : vector<1x16x16x3xbf16> to vector<16x16x3xbf16>
    %27 = vector.shape_cast %26 : vector<16x16x3xbf16> to vector<256x3xbf16>
    %c12 = arith.constant 12 : index
    %c0_26 = arith.constant 0 : index
    %28 = vector.load %arg2[%c12, %c0_26] : memref<27x16xbf16, #tpu.memory_space<vmem>>, vector<3x16xbf16>
    %cst_27 = arith.constant dense<0.000000e+00> : vector<256x16xf32>
    %29 = tpu.matmul %27, %28, %cst_27 {dimension_numbers = #tpu.dot_dimension_numbers<[1], [0], [0], [1], [0, 0, 1, 1], [], []>} : vector<256x3xbf16>, vector<3x16xbf16>, vector<256x16xf32> -> vector<256x16xf32>
    %30 = arith.addf %24, %29 : vector<256x16xf32>
    %c0_28 = arith.constant 0 : index
    %c1_29 = arith.constant 1 : index
    %c2_30 = arith.constant 2 : index
    %c0_31 = arith.constant 0 : index
    %31 = vector.load %arg1[%c0_28, %c1_29, %c2_30, %c0_31] : memref<1x18x18x3xbf16, #tpu.memory_space<vmem>>, vector<1x16x16x3xbf16>
    %32 = vector.shape_cast %31 : vector<1x16x16x3xbf16> to vector<16x16x3xbf16>
    %33 = vector.shape_cast %32 : vector<16x16x3xbf16> to vector<256x3xbf16>
    %c15 = arith.constant 15 : index
    %c0_32 = arith.constant 0 : index
    %34 = vector.load %arg2[%c15, %c0_32] : memref<27x16xbf16, #tpu.memory_space<vmem>>, vector<3x16xbf16>
    %cst_33 = arith.constant dense<0.000000e+00> : vector<256x16xf32>
    %35 = tpu.matmul %33, %34, %cst_33 {dimension_numbers = #tpu.dot_dimension_numbers<[1], [0], [0], [1], [0, 0, 1, 1], [], []>} : vector<256x3xbf16>, vector<3x16xbf16>, vector<256x16xf32> -> vector<256x16xf32>
    %36 = arith.addf %30, %35 : vector<256x16xf32>
    %c0_34 = arith.constant 0 : index
    %c2_35 = arith.constant 2 : index
    %c0_36 = arith.constant 0 : index
    %c0_37 = arith.constant 0 : index
    %37 = vector.load %arg1[%c0_34, %c2_35, %c0_36, %c0_37] : memref<1x18x18x3xbf16, #tpu.memory_space<vmem>>, vector<1x16x16x3xbf16>
    %38 = vector.shape_cast %37 : vector<1x16x16x3xbf16> to vector<16x16x3xbf16>
    %39 = vector.shape_cast %38 : vector<16x16x3xbf16> to vector<256x3xbf16>
    %c18 = arith.constant 18 : index
    %c0_38 = arith.constant 0 : index
    %40 = vector.load %arg2[%c18, %c0_38] : memref<27x16xbf16, #tpu.memory_space<vmem>>, vector<3x16xbf16>
    %cst_39 = arith.constant dense<0.000000e+00> : vector<256x16xf32>
    %41 = tpu.matmul %39, %40, %cst_39 {dimension_numbers = #tpu.dot_dimension_numbers<[1], [0], [0], [1], [0, 0, 1, 1], [], []>} : vector<256x3xbf16>, vector<3x16xbf16>, vector<256x16xf32> -> vector<256x16xf32>
    %42 = arith.addf %36, %41 : vector<256x16xf32>
    %c0_40 = arith.constant 0 : index
    %c2_41 = arith.constant 2 : index
    %c1_42 = arith.constant 1 : index
    %c0_43 = arith.constant 0 : index
    %43 = vector.load %arg1[%c0_40, %c2_41, %c1_42, %c0_43] : memref<1x18x18x3xbf16, #tpu.memory_space<vmem>>, vector<1x16x16x3xbf16>
    %44 = vector.shape_cast %43 : vector<1x16x16x3xbf16> to vector<16x16x3xbf16>
    %45 = vector.shape_cast %44 : vector<16x16x3xbf16> to vector<256x3xbf16>
    %c21 = arith.constant 21 : index
    %c0_44 = arith.constant 0 : index
    %46 = vector.load %arg2[%c21, %c0_44] : memref<27x16xbf16, #tpu.memory_space<vmem>>, vector<3x16xbf16>
    %cst_45 = arith.constant dense<0.000000e+00> : vector<256x16xf32>
    %47 = tpu.matmul %45, %46, %cst_45 {dimension_numbers = #tpu.dot_dimension_numbers<[1], [0], [0], [1], [0, 0, 1, 1], [], []>} : vector<256x3xbf16>, vector<3x16xbf16>, vector<256x16xf32> -> vector<256x16xf32>
    %48 = arith.addf %42, %47 : vector<256x16xf32>
    %c0_46 = arith.constant 0 : index
    %c2_47 = arith.constant 2 : index
    %c2_48 = arith.constant 2 : index
    %c0_49 = arith.constant 0 : index
    %49 = vector.load %arg1[%c0_46, %c2_47, %c2_48, %c0_49] : memref<1x18x18x3xbf16, #tpu.memory_space<vmem>>, vector<1x16x16x3xbf16>
    %50 = vector.shape_cast %49 : vector<1x16x16x3xbf16> to vector<16x16x3xbf16>
    %51 = vector.shape_cast %50 : vector<16x16x3xbf16> to vector<256x3xbf16>
    %c24 = arith.constant 24 : index
    %c0_50 = arith.constant 0 : index
    %52 = vector.load %arg2[%c24, %c0_50] : memref<27x16xbf16, #tpu.memory_space<vmem>>, vector<3x16xbf16>
    %cst_51 = arith.constant dense<0.000000e+00> : vector<256x16xf32>
    %53 = tpu.matmul %51, %52, %cst_51 {dimension_numbers = #tpu.dot_dimension_numbers<[1], [0], [0], [1], [0, 0, 1, 1], [], []>} : vector<256x3xbf16>, vector<3x16xbf16>, vector<256x16xf32> -> vector<256x16xf32>
    %54 = arith.addf %48, %53 : vector<256x16xf32>
    %c0_52 = arith.constant 0 : index
    %c0_53 = arith.constant 0 : index
    %55 = vector.load %arg3[%c0_52, %c0_53] : memref<1x16xf32, #tpu.memory_space<vmem>>, vector<1x16xf32>
    %56 = vector.broadcast %55 : vector<1x16xf32> to vector<256x16xf32>
    %57 = arith.addf %54, %56 : vector<256x16xf32>
    %cst_54 = arith.constant 0.000000e+00 : f32
    %58 = vector.broadcast %cst_54 : f32 to vector<256x16xf32>
    %59 = arith.cmpf oge, %57, %58 : vector<256x16xf32>
    %cst_55 = arith.constant 1.000000e-01 : f32
    %60 = vector.broadcast %cst_55 : f32 to vector<256x16xf32>
    %61 = arith.mulf %57, %60 : vector<256x16xf32>
    %62 = arith.select %59, %57, %61 : vector<256x16xi1>, vector<256x16xf32>
    %63 = vector.shape_cast %62 : vector<256x16xf32> to vector<16x16x16xf32>
    %64 = arith.truncf %63 : vector<16x16x16xf32> to vector<16x16x16xbf16>
    %c0_56 = arith.constant 0 : index
    %c0_57 = arith.constant 0 : index
    %c0_58 = arith.constant 0 : index
    %c0_59 = arith.constant 0 : index
    %65 = vector.load %arg4[%c0_56, %c0_57, %c0_58, %c0_59] : memref<1x16x16x16xbf16, #tpu.memory_space<vmem>>, vector<1x16x16x16xbf16>
    %66 = vector.shape_cast %65 : vector<1x16x16x16xbf16> to vector<16x16x16xbf16>
    %67 = vector.shape_cast %64 : vector<16x16x16xbf16> to vector<1x16x16x16xbf16>
    tpu.vector_store %arg4[%c0_56, %c0_57, %c0_58, %c0_59], %67 {strides = array<i32>} : memref<1x16x16x16xbf16, #tpu.memory_space<vmem>>, vector<1x16x16x16xbf16>,
    return
  }
  func.func @transform_0(%arg0: i32) -> (i32, i32, i32, i32) {
    %c0_i32 = arith.constant 0 : i32
    %c0_i32_0 = arith.constant 0 : i32
    %c0_i32_1 = arith.constant 0 : i32
    %c0_i32_2 = arith.constant 0 : i32
    return %arg0, %c0_i32, %c0_i32_0, %c0_i32_1 : i32, i32, i32, i32
  }
  func.func @transform_1(%arg0: i32) -> (i32, i32) {
    %c0_i32 = arith.constant 0 : i32
    %c0_i32_0 = arith.constant 0 : i32
    %c0_i32_1 = arith.constant 0 : i32
    return %c0_i32, %c0_i32_0 : i32, i32
  }
  func.func @transform_2(%arg0: i32) -> (i32, i32) {
    %c0_i32 = arith.constant 0 : i32
    %c0_i32_0 = arith.constant 0 : i32
    %c0_i32_1 = arith.constant 0 : i32
    return %c0_i32, %c0_i32_0 : i32, i32
  }
  func.func @transform_3(%arg0: i32) -> (i32, i32, i32, i32) {
    %c0_i32 = arith.constant 0 : i32
    %c0_i32_0 = arith.constant 0 : i32
    %c0_i32_1 = arith.constant 0 : i32
    %c0_i32_2 = arith.constant 0 : i32
    return %arg0, %c0_i32, %c0_i32_0, %c0_i32_1 : i32, i32, i32, i32
  }
}

</mosaic_0001>

<llo_original>
// kernel: tpu_custom_call.1
$region0: #{tpu_custom_call.1}
  #allocation0 [shape = 'u32[]', space=smem, size = 0x4, offset = 0x4, fixed_abs, tag = 'smem constant byte address 0x4 - core index']
  #allocation1 [shape = 'u32[72,128]{1,0:T(1,128)}', space=vmem, size = 0x9000, scoped, tag = 'internal scratch']
  %s0 = inlined_call_operand.vmem [shape: bf16[16,3], index: 0, kind: input, shape index: {}]
  %s1 = inlined_call_operand.vmem [shape: bf16[16,8], index: 1, kind: input, shape index: {}]
  %s2 = inlined_call_operand.vmem [shape: bf16[16,16], index: 2, kind: input, shape index: {}]
  %s3 = inlined_call_operand.hbm [shape: bf16[16,27], index: 3, kind: output, shape index: {}]
  %s4 = sld [smem:[#allocation0]]
  $region22: #{tpu_custom_call.1} parent=0
    _
  %s6 = ssub.s32 1, %s4
  %s7 = scalar_select 0, %s6, %s4
  $region1: #{tpu_custom_call.1} parent=0
    #allocation2 [shape = 'u8[4096]{0}', space=vmem, size = 0x1000, scoped, tag = 'output window, operand 0, single buffered']
    #allocation3 [shape = 's32[1]{0}', space=sflag, size = 0x4, scoped, tag = 'scoped memory for tpu_custom_call.1']
    %8 = vsyncpa [#allocation3], 0
    // Predicated region
    $region2: #{tpu_custom_call.1} parent=1 // pred_check
      _
    $region3: #{tpu_custom_call.1} parent=1 // pred_check_branch
      %10 = sbr.rel (0) target = $region5
    $region4: #{tpu_custom_call.1} parent=1 // pred_region
      _
    $region5: #{tpu_custom_call.1} parent=1 // pred_fallthru
      _
    // Predicated region
    $region6: #{tpu_custom_call.1} parent=1 // pred_check
      _
    $region7: #{tpu_custom_call.1} parent=1 // pred_check_branch
      %12 = sbr.rel (0) target = $region9
    $region8: #{tpu_custom_call.1} parent=1 // pred_region
      _
    $region9: #{tpu_custom_call.1} parent=1 // pred_fallthru
      _
    // Predicated region
    $region10: #{tpu_custom_call.1} parent=1 // pred_check
      _
    $region11: #{tpu_custom_call.1} parent=1 // pred_check_branch
      %14 = sbr.rel (0) target = $region13
    $region12: #{tpu_custom_call.1} parent=1 // pred_region
      _
    $region13: #{tpu_custom_call.1} parent=1 // pred_fallthru
      _
    %v15 = vld [vmem:[%s0] sm:$0xf]
    %v16 = vld [vmem:[%s0 + $0x4] sm:$0xf]
    %v17 = vld [vmem:[%s1] sm:$0xf]
    %v18 = vld [vmem:[%s1 + $0x4] sm:$0xf]
    %v19 = vld [vmem:[%s2] sm:$0xf]
    %v20 = vld [vmem:[%s2 + $0x4] sm:$0xf]
    %v23 = vunpack.c.l.b16 %v15
    %v24 = vunpack.c.l.b16 %v16
    %v25 = vpack.c.b16 %v24, %v23
    %v28 = vunpack.c.l.b16 %v17
    %v29 = vunpack.c.l.b16 %v18
    %v30 = vpack.c.b16 %v29, %v28
    %31 = vrot.lane.b32.xlu0 %v30, 3
    %v32 = vpop.permute.xlu0 %31
    %v35 = vunpack.c.l.b16 %v19
    %v36 = vunpack.c.l.b16 %v20
    %v37 = vpack.c.b16 %v36, %v35
    %38 = vrot.lane.b32.xlu0 %v37, 11
    %v39 = vpop.permute.xlu0 %38
    %vm40 = vcmask 23552
    %v43 = vsel %vm40, %v25, %v32
    %vm44 = vcmask 89088
    %v46 = vsel %vm44, %v43, %v39
    %v48 = vunpack.c.l.b16 %v46
    %v49 = vunpack.c.h.b16 %v46
    %v50 = vpack.c.b16 %v48, %v48
    %v51 = vpack.c.b16 %v49, %v49
    %vm54 = vcmask 216064
    %55 = vst.msk [vmem:[#allocation2] sm:$0xf] %vm54, %v50
    %56 = vst.msk [vmem:[#allocation2 + $0x4] sm:$0xf] %vm54, %v51
    // Predicated region
    $region14: #{tpu_custom_call.1} parent=1 // pred_check
      _
    $region15: #{tpu_custom_call.1} parent=1 // pred_check_branch
      %58 = sbr.rel (0) target = $region17
    $region16: #{tpu_custom_call.1} parent=1 // pred_region
      %60 = vsyncadd [#allocation3], 0
      %s61 = sshll.u32 [#allocation2], 4
      %s62 = int_to_ptr.vmem [resolvable:$true] %s61
      %s63 = sshll.u32 %s3, 4
      %s64 = int_to_ptr.hbm [resolvable:$true] %s63
      %69 = dma.vmem_to_hbm [thread:$0]  %s62, 128, %s64, [#allocation3], 64, 64, 4
    $region17: #{tpu_custom_call.1} parent=1 // pred_fallthru
      _
    // Predicated region
    $region18: #{tpu_custom_call.1} parent=1 // pred_check
      _
    $region19: #{tpu_custom_call.1} parent=1 // pred_check_branch
      %71 = sbr.rel (0) target = $region21
    $region20: #{tpu_custom_call.1} parent=1 // pred_region
      %73 = dma.done [#allocation3], 128
    $region21: #{tpu_custom_call.1} parent=1 // pred_fallthru
      _
    %74 = vsyncpa [#allocation3], 1

// kernel: tpu_custom_call.1
$region0: #{tpu_custom_call.1}
  #allocation0 [shape = 'u32[]', space=smem, size = 0x4, offset = 0x4, fixed_abs, tag = 'smem constant byte address 0x4 - core index']
  #allocation1 [shape = 'u32[72,128]{1,0:T(1,128)}', space=vmem, size = 0x9000, scoped, tag = 'internal scratch']
  %s0 = inlined_call_operand.hbm [shape: bf16[1,8,8,8], index: 0, kind: input, shape index: {}]
  %s1 = inlined_call_operand.hbm [shape: bf16[1,8,64], index: 1, kind: output, shape index: {}]
  %s2 = sld [smem:[#allocation0]]
  $region18: #{tpu_custom_call.1} parent=0
    _
  %s4 = ssub.s32 1, %s2
  %s5 = scalar_select 0, %s4, %s2
  $region1: #{tpu_custom_call.1} parent=0
    #allocation2 [shape = 'u8[16384]{0}', space=vmem, size = 0x4000, scoped, tag = 'input window, operand 0, single buffered']
    #allocation3 [shape = 's32[1]{0}', space=sflag, size = 0x4, scoped, tag = 'scoped memory for tpu_custom_call.1']
    #allocation4 [shape = 's32[1]{0}', space=sflag, size = 0x4, scoped, tag = 'scoped memory for tpu_custom_call.1']
    #allocation5 [shape = 'u8[2048]{0}', space=vmem, size = 0x800, scoped, tag = 'output window, operand 0, single buffered']
    %6 = vsyncpa [#allocation3], 0
    %7 = vsyncpa [#allocation4], 0
    // Predicated region
    $region2: #{tpu_custom_call.1} parent=1 // pred_check
      _
    $region3: #{tpu_custom_call.1} parent=1 // pred_check_branch
      %9 = sbr.rel (0) target = $region5
    $region4: #{tpu_custom_call.1} parent=1 // pred_region
      %11 = vsyncadd [#allocation3], 0
      %s12 = sshll.u32 %s0, 4
      %s13 = int_to_ptr.hbm [resolvable:$true] %s12
      %s14 = sshll.u32 [#allocation2], 4
      %s15 = int_to_ptr.vmem [resolvable:$true] %s14
      %20 = dma.hbm_to_vmem [thread:$0]  %s13, 512, %s15, [#allocation3], 64, 64, 4
    $region5: #{tpu_custom_call.1} parent=1 // pred_fallthru
      _
    // Predicated region
    $region6: #{tpu_custom_call.1} parent=1 // pred_check
      _
    $region7: #{tpu_custom_call.1} parent=1 // pred_check_branch
      %22 = sbr.rel (0) target = $region9
    $region8: #{tpu_custom_call.1} parent=1 // pred_region
      %24 = dma.done [#allocation3], 512
    $region9: #{tpu_custom_call.1} parent=1 // pred_fallthru
      _
    %v25 = vld [vmem:[#allocation2] sm:$0xf]
    %v26 = vld [vmem:[#allocation2 + $0x4] sm:$0xf]
    %v27 = vld [vmem:[#allocation2 + $0x8] sm:$0xf]
    %v28 = vld [vmem:[#allocation2 + $0xc] sm:$0xf]
    %v29 = vld [vmem:[#allocation2 + $0x10] sm:$0xf]
    %v30 = vld [vmem:[#allocation2 + $0x14] sm:$0xf]
    %v31 = vld [vmem:[#allocation2 + $0x18] sm:$0xf]
    %v32 = vld [vmem:[#allocation2 + $0x1c] sm:$0xf]
    %v33 = vunpack.c.l.bf16 %v25
    %v34 = vunpack.c.l.bf16 %v26
    %v35 = vunpack.c.l.bf16 %v27
    %v36 = vunpack.c.l.bf16 %v28
    %v37 = vunpack.c.l.bf16 %v29
    %v38 = vunpack.c.l.bf16 %v30
    %v39 = vunpack.c.l.bf16 %v31
    %v40 = vunpack.c.l.bf16 %v32
    %v41 = vrot.slane %v35, 4
    %vm42 = vcmask 1047556
    %v43 = vsel %vm42, %v41, %v33
    %v44 = vrot.slane %v33, 4
    %v45 = vsel %vm42, %v35, %v44
    %v47 = vunpack.c.l.s4 1983009808
    %v48 = vunpack.c.0.s8 %v47
    %v49 = vperm.slane %v43, %v48
    %v51 = vunpack.c.l.s4 1983009808
    %v52 = vunpack.c.0.s8 %v51
    %v53 = vperm.slane %v45, %v52
    %v54 = vrot.slane %v36, 4
    %v55 = vsel %vm42, %v54, %v34
    %v56 = vrot.slane %v34, 4
    %v57 = vsel %vm42, %v36, %v56
    %v59 = vunpack.c.l.s4 1983009808
    %v60 = vunpack.c.0.s8 %v59
    %v61 = vperm.slane %v55, %v60
    %v63 = vunpack.c.l.s4 1983009808
    %v64 = vunpack.c.0.s8 %v63
    %v65 = vperm.slane %v57, %v64
    %v66 = vrot.slane %v39, 4
    %v67 = vsel %vm42, %v66, %v37
    %v68 = vrot.slane %v37, 4
    %v69 = vsel %vm42, %v39, %v68
    %v71 = vunpack.c.l.s4 1983009808
    %v72 = vunpack.c.0.s8 %v71
    %v73 = vperm.slane %v67, %v72
    %v75 = vunpack.c.l.s4 1983009808
    %v76 = vunpack.c.0.s8 %v75
    %v77 = vperm.slane %v69, %v76
    %v78 = vrot.slane %v40, 4
    %v79 = vsel %vm42, %v78, %v38
    %v80 = vrot.slane %v38, 4
    %v81 = vsel %vm42, %v40, %v80
    %v83 = vunpack.c.l.s4 1983009808
    %v84 = vunpack.c.0.s8 %v83
    %v85 = vperm.slane %v79, %v84
    %v87 = vunpack.c.l.s4 1983009808
    %v88 = vunpack.c.0.s8 %v87
    %v89 = vperm.slane %v81, %v88
    %v90 = vrot.slane %v61, 4
    %v91 = vsel %vm42, %v90, %v49
    %v92 = vrot.slane %v49, 4
    %v93 = vsel %vm42, %v61, %v92
    %v95 = vunpack.c.l.s4 1934713408
    %v96 = vunpack.c.0.s8 %v95
    %v97 = vperm.slane %v91, %v96
    %v99 = vunpack.c.l.s4 1934713408
    %v100 = vunpack.c.0.s8 %v99
    %v101 = vperm.slane %v93, %v100
    %v102 = vrot.slane %v65, 4
    %v103 = vsel %vm42, %v102, %v53
    %v104 = vrot.slane %v53, 4
    %v105 = vsel %vm42, %v65, %v104
    %v107 = vunpack.c.l.s4 1934713408
    %v108 = vunpack.c.0.s8 %v107
    %v109 = vperm.slane %v103, %v108
    %v111 = vunpack.c.l.s4 1934713408
    %v112 = vunpack.c.0.s8 %v111
    %v113 = vperm.slane %v105, %v112
    %v114 = vrot.slane %v85, 4
    %v115 = vsel %vm42, %v114, %v73
    %v116 = vrot.slane %v73, 4
    %v117 = vsel %vm42, %v85, %v116
    %v119 = vunpack.c.l.s4 1934713408
    %v120 = vunpack.c.0.s8 %v119
    %v121 = vperm.slane %v115, %v120
    %v123 = vunpack.c.l.s4 1934713408
    %v124 = vunpack.c.0.s8 %v123
    %v125 = vperm.slane %v117, %v124
    %v126 = vrot.slane %v89, 4
    %v127 = vsel %vm42, %v126, %v77
    %v128 = vrot.slane %v77, 4
    %v129 = vsel %vm42, %v89, %v128
    %v131 = vunpack.c.l.s4 1934713408
    %v132 = vunpack.c.0.s8 %v131
    %v133 = vperm.slane %v127, %v132
    %v135 = vunpack.c.l.s4 1934713408
    %v136 = vunpack.c.0.s8 %v135
    %v137 = vperm.slane %v129, %v136
    %v138 = vrot.slane %v121, 4
    %v139 = vsel %vm42, %v138, %v97
    %v140 = vrot.slane %v97, 4
    %v141 = vsel %vm42, %v121, %v140
    %v142 = vrot.slane %v125, 4
    %v143 = vsel %vm42, %v142, %v101
    %v144 = vrot.slane %v101, 4
    %v145 = vsel %vm42, %v125, %v144
    %v146 = vrot.slane %v133, 4
    %v147 = vsel %vm42, %v146, %v109
    %v148 = vrot.slane %v109, 4
    %v149 = vsel %vm42, %v133, %v148
    %v150 = vrot.slane %v137, 4
    %v151 = vsel %vm42, %v150, %v113
    %v152 = vrot.slane %v113, 4
    %v153 = vsel %vm42, %v137, %v152
    %155 = vrot.lane.b32.xlu0 %v141, 8
    %v156 = vpop.permute.xlu0 %155
    %159 = vrot.lane.b32.xlu0 %v143, 16
    %v160 = vpop.permute.xlu0 %159
    %163 = vrot.lane.b32.xlu0 %v145, 24
    %v164 = vpop.permute.xlu0 %163
    %167 = vrot.lane.b32.xlu0 %v147, 32
    %v168 = vpop.permute.xlu0 %167
    %171 = vrot.lane.b32.xlu0 %v149, 40
    %v172 = vpop.permute.xlu0 %171
    %175 = vrot.lane.b32.xlu0 %v151, 48
    %v176 = vpop.permute.xlu0 %175
    %179 = vrot.lane.b32.xlu0 %v153, 56
    %v180 = vpop.permute.xlu0 %179
    %vm182 = vcmask 64512
    %v183 = vsel %vm182, %v139, %v156
    %vm184 = vcmask 130048
    %v185 = vsel %vm184, %v183, %v160
    %vm186 = vcmask 195584
    %v187 = vsel %vm186, %v185, %v164
    %vm188 = vcmask 261120
    %v189 = vsel %vm188, %v187, %v168
    %vm190 = vcmask 326656
    %v191 = vsel %vm190, %v189, %v172
    %vm192 = vcmask 392192
    %v193 = vsel %vm192, %v191, %v176
    %vm194 = vcmask 457728
    %v195 = vsel %vm194, %v193, %v180
    %v196 = vpack.c.bf16 %v195, %v195
    %vm197 = vcmask 519168
    %198 = vst.msk [vmem:[#allocation5] sm:$0xf] %vm197, %v196
    // Predicated region
    $region10: #{tpu_custom_call.1} parent=1 // pred_check
      _
    $region11: #{tpu_custom_call.1} parent=1 // pred_check_branch
      %200 = sbr.rel (0) target = $region13
    $region12: #{tpu_custom_call.1} parent=1 // pred_region
      %202 = vsyncadd [#allocation4], 0
      %s204 = sshll.u32 [#allocation5], 4
      %s205 = int_to_ptr.vmem [resolvable:$true] %s204
      %s206 = sshll.u32 %s1, 4
      %s207 = int_to_ptr.hbm [resolvable:$true] %s206
      %209 = dma.vmem_to_hbm [thread:$0]  %s205, 64, %s207, [#allocation4]
    $region13: #{tpu_custom_call.1} parent=1 // pred_fallthru
      _
    // Predicated region
    $region14: #{tpu_custom_call.1} parent=1 // pred_check
      _
    $region15: #{tpu_custom_call.1} parent=1 // pred_check_branch
      %211 = sbr.rel (0) target = $region17
    $region16: #{tpu_custom_call.1} parent=1 // pred_region
      %213 = dma.done [#allocation4], 64
    $region17: #{tpu_custom_call.1} parent=1 // pred_fallthru
      _
    %214 = vsyncpa [#allocation3], 1
    %215 = vsyncpa [#allocation4], 1

// kernel: tpu_custom_call.1
$region0: #{tpu_custom_call.1}
  #allocation0 [shape = 'u32[]', space=smem, size = 0x4, offset = 0x4, fixed_abs, tag = 'smem constant byte address 0x4 - core index']
  #allocation1 [shape = 'u32[72,128]{1,0:T(1,128)}', space=vmem, size = 0x9000, scoped, tag = 'internal scratch']
  %s0 = inlined_call_operand.vmem [shape: bf16[2,18,18,3], index: 0, kind: input, shape index: {}]
  %s1 = inlined_call_operand.vmem [shape: bf16[27,16], index: 1, kind: input, shape index: {}]
  %s2 = inlined_call_operand.vmem [shape: f32[1,16], index: 2, kind: input, shape index: {}]
  %s3 = inlined_call_operand.hbm [shape: bf16[2,16,16,16], index: 3, kind: output, shape index: {}]
  %s4 = sld [smem:[#allocation0]]
  $region45: #{tpu_custom_call.1} parent=0
    _
  %s6 = ssub.s32 1, %s4
  %s7 = scalar_select 0, %s6, %s4
  $region1: #{tpu_custom_call.1} parent=0
    #allocation2 [shape = 'u8[131072]{0}', space=vmem, size = 0x20000, scoped, tag = 'output window, operand 0']
    #allocation3 [shape = 's32[2]{0}', space=sflag, size = 0x8, scoped, tag = 'scoped memory for tpu_custom_call.1']
    %8 = vsyncpa [#allocation3], 0
    %s9 = scalar_lea.sflag [#allocation3], 1
    %10 = vsyncpa %s9, 0
    loop: start=0, step=1, limit=4
    $region2: #{tpu_custom_call.1} parent=1 // loop_pre_header
      _
    $region3: #{tpu_custom_call.1} parent=1 // loop_header
      %s12 = sphi 0, %s16
      %p13 = scmp.ge.s32.totalorder %s12, 4
      %s22 = sphi 0, %s24
      %s25 = sphi 0, %s22
      %s26 = sphi 0, %s25
      %s42 = sphi 0, %s26
      %s46 = sphi 0, %s46
      %s48 = sphi 0, %s46
      %s49 = sphi 0, %s48
      %s63 = sphi 0, %s49
      %s67 = sphi 0, %s67
      %s69 = sphi 0, %s67
      %s70 = sphi 0, %s69
      %s84 = sphi 0, %s70
      %s90 = sphi 0, %s92
      %s93 = sphi 0, %s90
      %s94 = sphi 0, %s93
      %s110 = sphi 0, %s94
    $region4: #{tpu_custom_call.1} parent=1 // loop_header_branch
      %15 = sbr.rel (%p13) target = $region8
    $region5: #{tpu_custom_call.1} parent=1 // loop_body
      %s17 = ssub.s32 %s12, 1
      %s18 = ssub.s32 %s12, 2
      %s19 = sadd.s32 %s12, 1
      %s20 = ssub.s32 %s12, %s19
      %p21 = scmp.eq.s32.totalorder %s20, 0
      %s23 = sadd.s32 %s22, 1
      %s24 = scalar_select %p21, %s22, %s23
      %p27 = pneg %p21
      %p28 = scmp.eq.s32.totalorder %s12, 1
      %p29 = por %p27, %p28
      %p30 = scmp.ne.s32.totalorder %s22, %s25
      %p31 = scmp.eq.s32.totalorder %s12, 0
      %p32 = por %p30, %p31
      %p33 = scmp.ne.s32.totalorder %s22, %s25
      %p34 = scmp.eq.s32.totalorder %s17, 1
      %p35 = por %p33, %p34
      %p36 = scmp.ne.s32.totalorder %s25, %s26
      %p37 = scmp.eq.s32.totalorder %s17, 0
      %p38 = por %p36, %p37
      %p39 = scmp.ne.s32.totalorder %s25, %s26
      %p40 = scmp.eq.s32.totalorder %s18, 1
      %p41 = por %p39, %p40
      %p43 = scmp.ne.s32.totalorder %s26, %s42
      %p44 = scmp.eq.s32.totalorder %s18, 0
      %p45 = por %p43, %p44
      %s47 = sadd.s32 %s46, 1
      %p50 = scmp.eq.s32.totalorder %s12, 1
      %p51 = scmp.ne.s32.totalorder %s46, %s48
      %p52 = scmp.eq.s32.totalorder %s12, 0
      %p53 = por %p51, %p52
      %p54 = scmp.ne.s32.totalorder %s46, %s48
      %p55 = scmp.eq.s32.totalorder %s17, 1
      %p56 = por %p54, %p55
      %p57 = scmp.ne.s32.totalorder %s48, %s49
      %p58 = scmp.eq.s32.totalorder %s17, 0
      %p59 = por %p57, %p58
      %p60 = scmp.ne.s32.totalorder %s48, %s49
      %p61 = scmp.eq.s32.totalorder %s18, 1
      %p62 = por %p60, %p61
      %p64 = scmp.ne.s32.totalorder %s49, %s63
      %p65 = scmp.eq.s32.totalorder %s18, 0
      %p66 = por %p64, %p65
      %s68 = sadd.s32 %s67, 1
      %p71 = scmp.eq.s32.totalorder %s12, 1
      %p72 = scmp.ne.s32.totalorder %s67, %s69
      %p73 = scmp.eq.s32.totalorder %s12, 0
      %p74 = por %p72, %p73
      %p75 = scmp.ne.s32.totalorder %s67, %s69
      %p76 = scmp.eq.s32.totalorder %s17, 1
      %p77 = por %p75, %p76
      %p78 = scmp.ne.s32.totalorder %s69, %s70
      %p79 = scmp.eq.s32.totalorder %s17, 0
      %p80 = por %p78, %p79
      %p81 = scmp.ne.s32.totalorder %s69, %s70
      %p82 = scmp.eq.s32.totalorder %s18, 1
      %p83 = por %p81, %p82
      %p85 = scmp.ne.s32.totalorder %s70, %s84
      %p86 = scmp.eq.s32.totalorder %s18, 0
      %p87 = por %p85, %p86
      %s88 = ssub.s32 %s12, %s19
      %p89 = scmp.eq.s32.totalorder %s88, 0
      %s91 = sadd.s32 %s90, 1
      %s92 = scalar_select %p89, %s90, %s91
      %p95 = pneg %p89
      %p96 = scmp.eq.s32.totalorder %s12, 1
      %p97 = por %p95, %p96
      %p98 = scmp.ne.s32.totalorder %s90, %s93
      %p99 = scmp.eq.s32.totalorder %s12, 0
      %p100 = por %p98, %p99
      %p101 = scmp.ne.s32.totalorder %s90, %s93
      %p102 = scmp.eq.s32.totalorder %s17, 1
      %p103 = por %p101, %p102
      %p104 = scmp.ne.s32.totalorder %s93, %s94
      %p105 = scmp.eq.s32.totalorder %s17, 0
      %p106 = por %p104, %p105
      %p107 = scmp.ne.s32.totalorder %s93, %s94
      %p108 = scmp.eq.s32.totalorder %s18, 1
      %p109 = por %p107, %p108
      %p111 = scmp.ne.s32.totalorder %s94, %s110
      %p112 = scmp.eq.s32.totalorder %s18, 0
      %p113 = por %p111, %p112
      %p114 = scmp.le.s32.totalorder 1, %s12
      %p115 = scmp.lt.s32.totalorder %s12, 3
      %p116 = pnand %p114, %p115
      %p117 = pneg %p116
      // Predicated region
      $region9: #{tpu_custom_call.1} parent=5 // pred_check
        _
      $region10: #{tpu_custom_call.1} parent=5 // pred_check_branch
        %119 = sbr.rel (%p116) target = $region12
      $region11: #{tpu_custom_call.1} parent=5 // pred_region
        %s120 = ssub.s32 %s12, 1
        // Predicated region
        $region13: #{tpu_custom_call.1} parent=11 // pred_check
          %p121 = pneg %p59
        $region14: #{tpu_custom_call.1} parent=11 // pred_check_branch
          %123 = sbr.rel (%p121) target = $region16
        $region15: #{tpu_custom_call.1} parent=11 // pred_region
          _
        $region16: #{tpu_custom_call.1} parent=11 // pred_fallthru
          _
        // Predicated region
        $region17: #{tpu_custom_call.1} parent=11 // pred_check
          %p124 = pneg %p80
        $region18: #{tpu_custom_call.1} parent=11 // pred_check_branch
          %126 = sbr.rel (%p124) target = $region20
        $region19: #{tpu_custom_call.1} parent=11 // pred_region
          _
        $region20: #{tpu_custom_call.1} parent=11 // pred_fallthru
          _
      $region12: #{tpu_custom_call.1} parent=5 // pred_fallthru
        _
      %p127 = scmp.lt.s32.totalorder %s12, 2
      // Predicated region
      $region21: #{tpu_custom_call.1} parent=5 // pred_check
        %p128 = pneg %p127
      $region22: #{tpu_custom_call.1} parent=5 // pred_check_branch
        %130 = sbr.rel (%p128) target = $region24
      $region23: #{tpu_custom_call.1} parent=5 // pred_region
        // Predicated region
        $region25: #{tpu_custom_call.1} parent=23 // pred_check
          %p131 = pneg %p32
        $region26: #{tpu_custom_call.1} parent=23 // pred_check_branch
          %133 = sbr.rel (%p131) target = $region28
        $region27: #{tpu_custom_call.1} parent=23 // pred_region
          %p134 = scmp.lt.s32.totalorder %s12, 1
          %s135 = scalar_select %p134, %s12, 1
          %s136 = smul.addr %s135, 54
          %s137 = smul.addr %s136, 4
          %s138 = scalar_lea.vmem %s0, %s137
        $region28: #{tpu_custom_call.1} parent=23 // pred_fallthru
          _
      $region24: #{tpu_custom_call.1} parent=5 // pred_fallthru
        _
      %p139 = scmp.le.s32.totalorder 1, %s12
      %p140 = scmp.lt.s32.totalorder %s12, 3
      %p141 = pnand %p139, %p140
      %p142 = pneg %p141
      // Predicated region
      $region29: #{tpu_custom_call.1} parent=5 // pred_check
        _
      $region30: #{tpu_custom_call.1} parent=5 // pred_check_branch
        %144 = sbr.rel (%p141) target = $region32
      $region31: #{tpu_custom_call.1} parent=5 // pred_region
        %s145 = ssub.s32 %s12, 1
        %p146 = scmp.lt.s32.totalorder %s17, 1
        %s147 = scalar_select %p146, %s17, 1
        %s148 = smul.addr %s147, 54
        %s149 = smul.addr %s148, 4
        %s150 = scalar_lea.vmem %s0, %s149
        %p151 = pneg %p38
        %p152 = pneg %p35
        %p153 = pneg %p59
        %p154 = pneg %p56
        %p155 = pneg %p80
        %p156 = pneg %p77
        %p157 = pneg %p106
        %p158 = pneg %p103
        %s159 = sand.u32 %s93, 1
        %s160 = scalar_lea.sflag [#allocation3], %s159
        %s161 = sand.u32 %s93, 1
        %s162 = smul.addr %s161, 128
        %s163 = scalar_lea.vmem [#allocation2], %s162
        %p164 = scmp.lt.s32.totalorder %s17, 1
        %s165 = scalar_select %p164, %s17, 1
        %s166 = smul.addr %s165, 54
        %s167 = smul.addr %s166, 4
        %s168 = scalar_lea.vmem %s0, %s167
        %v170 = vld [vmem:[%s168] sm:$0xf]
        %v171 = vld [vmem:[%s168 + $0x4] sm:$0xf]
        %v172 = vld [vmem:[%s168 + $0xc] sm:$0xf]
        %v173 = vld [vmem:[%s168 + $0x10] sm:$0xf]
        %v174 = vld [vmem:[%s168 + $0x18] sm:$0xf]
        %v175 = vld [vmem:[%s168 + $0x1c] sm:$0xf]
        %v176 = vld [vmem:[%s168 + $0x24] sm:$0xf]
        %v177 = vld [vmem:[%s168 + $0x28] sm:$0xf]
        %v178 = vld [vmem:[%s168 + $0x30] sm:$0xf]
        %v179 = vld [vmem:[%s168 + $0x34] sm:$0xf]
        %v180 = vld [vmem:[%s168 + $0x3c] sm:$0xf]
        %v181 = vld [vmem:[%s168 + $0x40] sm:$0xf]
        %v182 = vld [vmem:[%s168 + $0x48] sm:$0xf]
        %v183 = vld [vmem:[%s168 + $0x4c] sm:$0xf]
        %v184 = vld [vmem:[%s168 + $0x54] sm:$0xf]
        %v185 = vld [vmem:[%s168 + $0x58] sm:$0xf]
        %v186 = vld [vmem:[%s168 + $0x60] sm:$0xf]
        %v187 = vld [vmem:[%s168 + $0x64] sm:$0xf]
        %v188 = vld [vmem:[%s168 + $0x6c] sm:$0xf]
        %v189 = vld [vmem:[%s168 + $0x70] sm:$0xf]
        %v190 = vld [vmem:[%s168 + $0x78] sm:$0xf]
        %v191 = vld [vmem:[%s168 + $0x7c] sm:$0xf]
        %v192 = vld [vmem:[%s168 + $0x84] sm:$0xf]
        %v193 = vld [vmem:[%s168 + $0x88] sm:$0xf]
        %v194 = vld [vmem:[%s168 + $0x90] sm:$0xf]
        %v195 = vld [vmem:[%s168 + $0x94] sm:$0xf]
        %v196 = vld [vmem:[%s168 + $0x9c] sm:$0xf]
        %v197 = vld [vmem:[%s168 + $0xa0] sm:$0xf]
        %v198 = vld [vmem:[%s168 + $0xa8] sm:$0xf]
        %v199 = vld [vmem:[%s168 + $0xac] sm:$0xf]
        %v200 = vld [vmem:[%s168 + $0xb4] sm:$0xf]
        %v201 = vld [vmem:[%s168 + $0xb8] sm:$0xf]
        %v202 = vld [vmem:[%s1] sm:$0x3]
        %v203 = vld [vmem:[%s168 + $0x8] sm:$0x1]
        %v204 = vld [vmem:[%s168 + $0x14] sm:$0x1]
        %v205 = vld [vmem:[%s168 + $0x20] sm:$0x1]
        %v206 = vld [vmem:[%s168 + $0x2c] sm:$0x1]
        %v207 = vld [vmem:[%s168 + $0x38] sm:$0x1]
        %v208 = vld [vmem:[%s168 + $0x44] sm:$0x1]
        %v209 = vld [vmem:[%s168 + $0x50] sm:$0x1]
        %v210 = vld [vmem:[%s168 + $0x5c] sm:$0x1]
        %v211 = vld [vmem:[%s168 + $0x68] sm:$0x1]
        %v212 = vld [vmem:[%s168 + $0x74] sm:$0x1]
        %v213 = vld [vmem:[%s168 + $0x80] sm:$0x1]
        %v214 = vld [vmem:[%s168 + $0x8c] sm:$0x1]
        %v215 = vld [vmem:[%s168 + $0x98] sm:$0x1]
        %v216 = vld [vmem:[%s168 + $0xa4] sm:$0x1]
        %v217 = vld [vmem:[%s168 + $0xb0] sm:$0x1]
        %v218 = vld [vmem:[%s168 + $0xbc] sm:$0x1]
        %vm219 = vsmask.f32 3328
        %vm220 = vsmask.f32 7440
        %vm221 = vmor %vm219, %vm220
        %v223 = vshrl.u32 %v170, 16
        %v225 = vrot.slane %v223, 4
        %v226 = vshll.u32 %v170, 16
        %v228 = vrot.slane %v226, 5
        %v229 = vor.u32 %v225, %v228
        %v230 = vrot.slane %v229, 4
        %v232 = vshll.u32 %v171, 16
        %v234 = vrot.slane %v232, 5
        %v235 = vsel %vm221, %v230, %v234
        %v236 = vshrl.u32 %v171, 16
        %v238 = vrot.slane %v236, 4
        %v239 = vor.u32 %v238, %v234
        %v240 = vrot.slane %v239, 4
        %v242 = vshll.u32 %v203, 16
        %v244 = vrot.slane %v242, 5
        %v245 = vsel %vm221, %v240, %v244
        %v247 = vshrl.u32 %v172, 16
        %v249 = vrot.slane %v247, 4
        %v250 = vshll.u32 %v172, 16
        %v252 = vrot.slane %v250, 5
        %v253 = vor.u32 %v249, %v252
        %v254 = vrot.slane %v253, 4
        %v256 = vshll.u32 %v173, 16
        %v258 = vrot.slane %v256, 5
        %v259 = vsel %vm221, %v254, %v258
        %v260 = vshrl.u32 %v173, 16
        %v262 = vrot.slane %v260, 4
        %v263 = vor.u32 %v262, %v258
        %v264 = vrot.slane %v263, 4
        %v266 = vshll.u32 %v204, 16
        %v268 = vrot.slane %v266, 5
        %v269 = vsel %vm221, %v264, %v268
        %v271 = vshrl.u32 %v174, 16
        %v273 = vrot.slane %v271, 4
        %v274 = vshll.u32 %v174, 16
        %v276 = vrot.slane %v274, 5
        %v277 = vor.u32 %v273, %v276
        %v278 = vrot.slane %v277, 4
        %v280 = vshll.u32 %v175, 16
        %v282 = vrot.slane %v280, 5
        %v283 = vsel %vm221, %v278, %v282
        %v284 = vshrl.u32 %v175, 16
        %v286 = vrot.slane %v284, 4
        %v287 = vor.u32 %v286, %v282
        %v288 = vrot.slane %v287, 4
        %v290 = vshll.u32 %v205, 16
        %v292 = vrot.slane %v290, 5
        %v293 = vsel %vm221, %v288, %v292
        %v295 = vshrl.u32 %v176, 16
        %v297 = vrot.slane %v295, 4
        %v298 = vshll.u32 %v176, 16
        %v300 = vrot.slane %v298, 5
        %v301 = vor.u32 %v297, %v300
        %v302 = vrot.slane %v301, 4
        %v304 = vshll.u32 %v177, 16
        %v306 = vrot.slane %v304, 5
        %v307 = vsel %vm221, %v302, %v306
        %v308 = vshrl.u32 %v177, 16
        %v310 = vrot.slane %v308, 4
        %v311 = vor.u32 %v310, %v306
        %v312 = vrot.slane %v311, 4
        %v314 = vshll.u32 %v206, 16
        %v316 = vrot.slane %v314, 5
        %v317 = vsel %vm221, %v312, %v316
        %v319 = vshrl.u32 %v178, 16
        %v321 = vrot.slane %v319, 4
        %v322 = vshll.u32 %v178, 16
        %v324 = vrot.slane %v322, 5
        %v325 = vor.u32 %v321, %v324
        %v326 = vrot.slane %v325, 4
        %v328 = vshll.u32 %v179, 16
        %v330 = vrot.slane %v328, 5
        %v331 = vsel %vm221, %v326, %v330
        %v332 = vshrl.u32 %v179, 16
        %v334 = vrot.slane %v332, 4
        %v335 = vor.u32 %v334, %v330
        %v336 = vrot.slane %v335, 4
        %v338 = vshll.u32 %v207, 16
        %v340 = vrot.slane %v338, 5
        %v341 = vsel %vm221, %v336, %v340
        %v343 = vshrl.u32 %v180, 16
        %v345 = vrot.slane %v343, 4
        %v346 = vshll.u32 %v180, 16
        %v348 = vrot.slane %v346, 5
        %v349 = vor.u32 %v345, %v348
        %v350 = vrot.slane %v349, 4
        %v352 = vshll.u32 %v181, 16
        %v354 = vrot.slane %v352, 5
        %v355 = vsel %vm221, %v350, %v354
        %v356 = vshrl.u32 %v181, 16
        %v358 = vrot.slane %v356, 4
        %v359 = vor.u32 %v358, %v354
        %v360 = vrot.slane %v359, 4
        %v362 = vshll.u32 %v208, 16
        %v364 = vrot.slane %v362, 5
        %v365 = vsel %vm221, %v360, %v364
        %v367 = vshrl.u32 %v182, 16
        %v369 = vrot.slane %v367, 4
        %v370 = vshll.u32 %v182, 16
        %v372 = vrot.slane %v370, 5
        %v373 = vor.u32 %v369, %v372
        %v374 = vrot.slane %v373, 4
        %v376 = vshll.u32 %v183, 16
        %v378 = vrot.slane %v376, 5
        %v379 = vsel %vm221, %v374, %v378
        %v380 = vshrl.u32 %v183, 16
        %v382 = vrot.slane %v380, 4
        %v383 = vor.u32 %v382, %v378
        %v384 = vrot.slane %v383, 4
        %v386 = vshll.u32 %v209, 16
        %v388 = vrot.slane %v386, 5
        %v389 = vsel %vm221, %v384, %v388
        %v391 = vshrl.u32 %v184, 16
        %v393 = vrot.slane %v391, 4
        %v394 = vshll.u32 %v184, 16
        %v396 = vrot.slane %v394, 5
        %v397 = vor.u32 %v393, %v396
        %v398 = vrot.slane %v397, 4
        %v400 = vshll.u32 %v185, 16
        %v402 = vrot.slane %v400, 5
        %v403 = vsel %vm221, %v398, %v402
        %v404 = vshrl.u32 %v185, 16
        %v406 = vrot.slane %v404, 4
        %v407 = vor.u32 %v406, %v402
        %v408 = vrot.slane %v407, 4
        %v410 = vshll.u32 %v210, 16
        %v412 = vrot.slane %v410, 5
        %v413 = vsel %vm221, %v408, %v412
        %v415 = vshrl.u32 %v186, 16
        %v417 = vrot.slane %v415, 4
        %v418 = vshll.u32 %v186, 16
        %v420 = vrot.slane %v418, 5
        %v421 = vor.u32 %v417, %v420
        %v422 = vrot.slane %v421, 4
        %v424 = vshll.u32 %v187, 16
        %v426 = vrot.slane %v424, 5
        %v427 = vsel %vm221, %v422, %v426
        %v428 = vshrl.u32 %v187, 16
        %v430 = vrot.slane %v428, 4
        %v431 = vor.u32 %v430, %v426
        %v432 = vrot.slane %v431, 4
        %v434 = vshll.u32 %v211, 16
        %v436 = vrot.slane %v434, 5
        %v437 = vsel %vm221, %v432, %v436
        %v439 = vshrl.u32 %v188, 16
        %v441 = vrot.slane %v439, 4
        %v442 = vshll.u32 %v188, 16
        %v444 = vrot.slane %v442, 5
        %v445 = vor.u32 %v441, %v444
        %v446 = vrot.slane %v445, 4
        %v448 = vshll.u32 %v189, 16
        %v450 = vrot.slane %v448, 5
        %v451 = vsel %vm221, %v446, %v450
        %v452 = vshrl.u32 %v189, 16
        %v454 = vrot.slane %v452, 4
        %v455 = vor.u32 %v454, %v450
        %v456 = vrot.slane %v455, 4
        %v458 = vshll.u32 %v212, 16
        %v460 = vrot.slane %v458, 5
        %v461 = vsel %vm221, %v456, %v460
        %v463 = vshrl.u32 %v190, 16
        %v465 = vrot.slane %v463, 4
        %v466 = vshll.u32 %v190, 16
        %v468 = vrot.slane %v466, 5
        %v469 = vor.u32 %v465, %v468
        %v470 = vrot.slane %v469, 4
        %v472 = vshll.u32 %v191, 16
        %v474 = vrot.slane %v472, 5
        %v475 = vsel %vm221, %v470, %v474
        %v476 = vshrl.u32 %v191, 16
        %v478 = vrot.slane %v476, 4
        %v479 = vor.u32 %v478, %v474
        %v480 = vrot.slane %v479, 4
        %v482 = vshll.u32 %v213, 16
        %v484 = vrot.slane %v482, 5
        %v485 = vsel %vm221, %v480, %v484
        %v487 = vshrl.u32 %v192, 16
        %v489 = vrot.slane %v487, 4
        %v490 = vshll.u32 %v192, 16
        %v492 = vrot.slane %v490, 5
        %v493 = vor.u32 %v489, %v492
        %v494 = vrot.slane %v493, 4
        %v496 = vshll.u32 %v193, 16
        %v498 = vrot.slane %v496, 5
        %v499 = vsel %vm221, %v494, %v498
        %v500 = vshrl.u32 %v193, 16
        %v502 = vrot.slane %v500, 4
        %v503 = vor.u32 %v502, %v498
        %v504 = vrot.slane %v503, 4
        %v506 = vshll.u32 %v214, 16
        %v508 = vrot.slane %v506, 5
        %v509 = vsel %vm221, %v504, %v508
        %v511 = vshrl.u32 %v194, 16
        %v513 = vrot.slane %v511, 4
        %v514 = vshll.u32 %v194, 16
        %v516 = vrot.slane %v514, 5
        %v517 = vor.u32 %v513, %v516
        %v518 = vrot.slane %v517, 4
        %v520 = vshll.u32 %v195, 16
        %v522 = vrot.slane %v520, 5
        %v523 = vsel %vm221, %v518, %v522
        %v524 = vshrl.u32 %v195, 16
        %v526 = vrot.slane %v524, 4
        %v527 = vor.u32 %v526, %v522
        %v528 = vrot.slane %v527, 4
        %v530 = vshll.u32 %v215, 16
        %v532 = vrot.slane %v530, 5
        %v533 = vsel %vm221, %v528, %v532
        %v535 = vshrl.u32 %v196, 16
        %v537 = vrot.slane %v535, 4
        %v538 = vshll.u32 %v196, 16
        %v540 = vrot.slane %v538, 5
        %v541 = vor.u32 %v537, %v540
        %v542 = vrot.slane %v541, 4
        %v544 = vshll.u32 %v197, 16
        %v546 = vrot.slane %v544, 5
        %v547 = vsel %vm221, %v542, %v546
        %v548 = vshrl.u32 %v197, 16
        %v550 = vrot.slane %v548, 4
        %v551 = vor.u32 %v550, %v546
        %v552 = vrot.slane %v551, 4
        %v554 = vshll.u32 %v216, 16
        %v556 = vrot.slane %v554, 5
        %v557 = vsel %vm221, %v552, %v556
        %v559 = vshrl.u32 %v198, 16
        %v561 = vrot.slane %v559, 4
        %v562 = vshll.u32 %v198, 16
        %v564 = vrot.slane %v562, 5
        %v565 = vor.u32 %v561, %v564
        %v566 = vrot.slane %v565, 4
        %v568 = vshll.u32 %v199, 16
        %v570 = vrot.slane %v568, 5
        %v571 = vsel %vm221, %v566, %v570
        %v572 = vshrl.u32 %v199, 16
        %v574 = vrot.slane %v572, 4
        %v575 = vor.u32 %v574, %v570
        %v576 = vrot.slane %v575, 4
        %v578 = vshll.u32 %v217, 16
        %v580 = vrot.slane %v578, 5
        %v581 = vsel %vm221, %v576, %v580
        %v583 = vshrl.u32 %v200, 16
        %v585 = vrot.slane %v583, 4
        %v586 = vshll.u32 %v200, 16
        %v588 = vrot.slane %v586, 5
        %v589 = vor.u32 %v585, %v588
        %v590 = vrot.slane %v589, 4
        %v592 = vshll.u32 %v201, 16
        %v594 = vrot.slane %v592, 5
        %v595 = vsel %vm221, %v590, %v594
        %v596 = vshrl.u32 %v201, 16
        %v598 = vrot.slane %v596, 4
        %v599 = vor.u32 %v598, %v594
        %v600 = vrot.slane %v599, 4
        %v602 = vshll.u32 %v218, 16
        %v604 = vrot.slane %v602, 5
        %v605 = vsel %vm221, %v600, %v604
        %v606 = vld [vmem:[%s1] sm:$0x6]
        %v607 = vunpack.c.l.b16 %v235
        %v608 = vunpack.c.l.b16 %v245
        %v609 = vunpack.c.l.b16 %v259
        %v610 = vunpack.c.l.b16 %v269
        %v611 = vunpack.c.l.b16 %v283
        %v612 = vunpack.c.l.b16 %v293
        %v613 = vunpack.c.l.b16 %v307
        %v614 = vunpack.c.l.b16 %v317
        %v615 = vunpack.c.l.b16 %v331
        %v616 = vunpack.c.l.b16 %v341
        %v617 = vunpack.c.l.b16 %v355
        %v618 = vunpack.c.l.b16 %v365
        %v619 = vunpack.c.l.b16 %v379
        %v620 = vunpack.c.l.b16 %v389
        %v621 = vunpack.c.l.b16 %v403
        %v622 = vunpack.c.l.b16 %v413
        %v623 = vunpack.c.l.b16 %v427
        %v624 = vunpack.c.l.b16 %v437
        %v625 = vunpack.c.l.b16 %v451
        %v626 = vunpack.c.l.b16 %v461
        %v627 = vunpack.c.l.b16 %v475
        %v628 = vunpack.c.l.b16 %v485
        %v629 = vunpack.c.l.b16 %v499
        %v630 = vunpack.c.l.b16 %v509
        %v631 = vunpack.c.l.b16 %v523
        %v632 = vunpack.c.l.b16 %v533
        %v633 = vunpack.c.l.b16 %v547
        %v634 = vunpack.c.l.b16 %v557
        %v635 = vunpack.c.l.b16 %v571
        %v636 = vunpack.c.l.b16 %v581
        %v637 = vunpack.c.l.b16 %v595
        %v638 = vunpack.c.l.b16 %v605
        %v639 = vpack.c.b16 %v608, %v607
        %v640 = vpack.c.b16 %v610, %v609
        %v641 = vpack.c.b16 %v612, %v611
        %v642 = vpack.c.b16 %v614, %v613
        %v643 = vpack.c.b16 %v616, %v615
        %v644 = vpack.c.b16 %v618, %v617
        %v645 = vpack.c.b16 %v620, %v619
        %v646 = vpack.c.b16 %v622, %v621
        %v647 = vpack.c.b16 %v624, %v623
        %v648 = vpack.c.b16 %v626, %v625
        %v649 = vpack.c.b16 %v628, %v627
        %v650 = vpack.c.b16 %v630, %v629
        %v651 = vpack.c.b16 %v632, %v631
        %v652 = vpack.c.b16 %v634, %v633
        %v653 = vpack.c.b16 %v636, %v635
        %v654 = vpack.c.b16 %v638, %v637
        %v656 = vunpack.c.l.b16 %v606
        %v657 = vpack.c.b16 %v656, %v656
        %v659 = vshrl.u32 %v657, 16
        %v661 = vrot.slane %v659, 1
        %v662 = vshll.u32 %v657, 16
        %v664 = vrot.slane %v662, 2
        %v665 = vor.u32 %v661, %v664
        %vm666 = vcmask 23552
        %v668 = vsel %vm666, %v639, 0
        %v671 = vsel %vm666, %v640, 0
        %v674 = vsel %vm666, %v641, 0
        %v677 = vsel %vm666, %v642, 0
        %v680 = vsel %vm666, %v643, 0
        %v683 = vsel %vm666, %v644, 0
        %v686 = vsel %vm666, %v645, 0
        %v689 = vsel %vm666, %v646, 0
        %v692 = vsel %vm666, %v647, 0
        %v695 = vsel %vm666, %v648, 0
        %v698 = vsel %vm666, %v649, 0
        %v701 = vsel %vm666, %v650, 0
        %v704 = vsel %vm666, %v651, 0
        %v707 = vsel %vm666, %v652, 0
        %v710 = vsel %vm666, %v653, 0
        %v713 = vsel %vm666, %v654, 0
        %vm715 = vcmask 1040384
        %vm716 = vcmask 1041408
        %v717 = vsel %vm715, 4294967295, 65535
        %v718 = vsel %vm716, %v717, 0
        %v720 = vand.u32 %v665, %v718
        %722 = vmatpush.bf16.msra.mxu0 0
        %723 = vmatpush.bf16.msra.mxu0 0
        %724 = vmatpush.bf16.msra.mxu0 0
        %725 = vmatpush.bf16.msra.mxu0 0
        %726 = vmatpush.bf16.msra.mxu0 0
        %727 = vmatpush.bf16.msra.mxu0 0
        %728 = vmatpush.bf16.msra.mxu0 0
        %729 = vmatpush.bf16.msra.mxu0 %v720
        %730 = vmatmul.bf16.gmra.mxu0 %v668
        %v731 = vpop.f32.mrf.mxu0
        %v732 = vadd.f32 0.0, %v731
        %v733 = vpop.f32.mrf.mxu0
        %v734 = vadd.f32 0.0, %v733
        %735 = vmatmul.bf16.gmra.mxu0 %v671
        %v736 = vpop.f32.mrf.mxu0
        %v737 = vadd.f32 0.0, %v736
        %v738 = vpop.f32.mrf.mxu0
        %v739 = vadd.f32 0.0, %v738
        %740 = vmatmul.bf16.gmra.mxu0 %v674
        %v741 = vpop.f32.mrf.mxu0
        %v742 = vadd.f32 0.0, %v741
        %v743 = vpop.f32.mrf.mxu0
        %v744 = vadd.f32 0.0, %v743
        %745 = vmatmul.bf16.gmra.mxu0 %v677
        %v746 = vpop.f32.mrf.mxu0
        %v747 = vadd.f32 0.0, %v746
        %v748 = vpop.f32.mrf.mxu0
        %v749 = vadd.f32 0.0, %v748
        %750 = vmatmul.bf16.gmra.mxu0 %v680
        %v751 = vpop.f32.mrf.mxu0
        %v752 = vadd.f32 0.0, %v751
        %v753 = vpop.f32.mrf.mxu0
        %v754 = vadd.f32 0.0, %v753
        %755 = vmatmul.bf16.gmra.mxu0 %v683
        %v756 = vpop.f32.mrf.mxu0
        %v757 = vadd.f32 0.0, %v756
        %v758 = vpop.f32.mrf.mxu0
        %v759 = vadd.f32 0.0, %v758
        %760 = vmatmul.bf16.gmra.mxu0 %v686
        %v761 = vpop.f32.mrf.mxu0
        %v762 = vadd.f32 0.0, %v761
        %v763 = vpop.f32.mrf.mxu0
        %v764 = vadd.f32 0.0, %v763
        %765 = vmatmul.bf16.gmra.mxu0 %v689
        %v766 = vpop.f32.mrf.mxu0
        %v767 = vadd.f32 0.0, %v766
        %v768 = vpop.f32.mrf.mxu0
        %v769 = vadd.f32 0.0, %v768
        %770 = vmatmul.bf16.gmra.mxu0 %v692
        %v771 = vpop.f32.mrf.mxu0
        %v772 = vadd.f32 0.0, %v771
        %v773 = vpop.f32.mrf.mxu0
        %v774 = vadd.f32 0.0, %v773
        %775 = vmatmul.bf16.gmra.mxu0 %v695
        %v776 = vpop.f32.mrf.mxu0
        %v777 = vadd.f32 0.0, %v776
        %v778 = vpop.f32.mrf.mxu0
        %v779 = vadd.f32 0.0, %v778
        %780 = vmatmul.bf16.gmra.mxu0 %v698
        %v781 = vpop.f32.mrf.mxu0
        %v782 = vadd.f32 0.0, %v781
        %v783 = vpop.f32.mrf.mxu0
        %v784 = vadd.f32 0.0, %v783
        %785 = vmatmul.bf16.gmra.mxu0 %v701
        %v786 = vpop.f32.mrf.mxu0
        %v787 = vadd.f32 0.0, %v786
        %v788 = vpop.f32.mrf.mxu0
        %v789 = vadd.f32 0.0, %v788
        %790 = vmatmul.bf16.gmra.mxu0 %v704
        %v791 = vpop.f32.mrf.mxu0
        %v792 = vadd.f32 0.0, %v791
        %v793 = vpop.f32.mrf.mxu0
        %v794 = vadd.f32 0.0, %v793
        %795 = vmatmul.bf16.gmra.mxu0 %v707
        %v796 = vpop.f32.mrf.mxu0
        %v797 = vadd.f32 0.0, %v796
        %v798 = vpop.f32.mrf.mxu0
        %v799 = vadd.f32 0.0, %v798
        %800 = vmatmul.bf16.gmra.mxu0 %v710
        %v801 = vpop.f32.mrf.mxu0
        %v802 = vadd.f32 0.0, %v801
        %v803 = vpop.f32.mrf.mxu0
        %v804 = vadd.f32 0.0, %v803
        %805 = vmatmul.bf16.gmra.mxu0 %v713
        %v806 = vpop.f32.mrf.mxu0
        %v807 = vadd.f32 0.0, %v806
        %v808 = vpop.f32.mrf.mxu0
        %v809 = vadd.f32 0.0, %v808
        %810 = vdwg.mxu0
        %v843 = vunpack.c.l.b16 %v170
        %v844 = vunpack.c.l.b16 %v171
        %v845 = vunpack.c.l.b16 %v172
        %v846 = vunpack.c.l.b16 %v173
        %v847 = vunpack.c.l.b16 %v174
        %v848 = vunpack.c.l.b16 %v175
        %v849 = vunpack.c.l.b16 %v176
        %v850 = vunpack.c.l.b16 %v177
        %v851 = vunpack.c.l.b16 %v178
        %v852 = vunpack.c.l.b16 %v179
        %v853 = vunpack.c.l.b16 %v180
        %v854 = vunpack.c.l.b16 %v181
        %v855 = vunpack.c.l.b16 %v182
        %v856 = vunpack.c.l.b16 %v183
        %v857 = vunpack.c.l.b16 %v184
        %v858 = vunpack.c.l.b16 %v185
        %v859 = vunpack.c.l.b16 %v186
        %v860 = vunpack.c.l.b16 %v187
        %v861 = vunpack.c.l.b16 %v188
        %v862 = vunpack.c.l.b16 %v189
        %v863 = vunpack.c.l.b16 %v190
        %v864 = vunpack.c.l.b16 %v191
        %v865 = vunpack.c.l.b16 %v192
        %v866 = vunpack.c.l.b16 %v193
        %v867 = vunpack.c.l.b16 %v194
        %v868 = vunpack.c.l.b16 %v195
        %v869 = vunpack.c.l.b16 %v196
        %v870 = vunpack.c.l.b16 %v197
        %v871 = vunpack.c.l.b16 %v198
        %v872 = vunpack.c.l.b16 %v199
        %v873 = vunpack.c.l.b16 %v200
        %v874 = vunpack.c.l.b16 %v201
        %v875 = vpack.c.b16 %v844, %v843
        %v876 = vpack.c.b16 %v846, %v845
        %v877 = vpack.c.b16 %v848, %v847
        %v878 = vpack.c.b16 %v850, %v849
        %v879 = vpack.c.b16 %v852, %v851
        %v880 = vpack.c.b16 %v854, %v853
        %v881 = vpack.c.b16 %v856, %v855
        %v882 = vpack.c.b16 %v858, %v857
        %v883 = vpack.c.b16 %v860, %v859
        %v884 = vpack.c.b16 %v862, %v861
        %v885 = vpack.c.b16 %v864, %v863
        %v886 = vpack.c.b16 %v866, %v865
        %v887 = vpack.c.b16 %v868, %v867
        %v888 = vpack.c.b16 %v870, %v869
        %v889 = vpack.c.b16 %v872, %v871
        %v890 = vpack.c.b16 %v874, %v873
        %v892 = vsel %vm666, %v875, 0
        %v895 = vsel %vm666, %v876, 0
        %v898 = vsel %vm666, %v877, 0
        %v901 = vsel %vm666, %v878, 0
        %v904 = vsel %vm666, %v879, 0
        %v907 = vsel %vm666, %v880, 0
        %v910 = vsel %vm666, %v881, 0
        %v913 = vsel %vm666, %v882, 0
        %v916 = vsel %vm666, %v883, 0
        %v919 = vsel %vm666, %v884, 0
        %v922 = vsel %vm666, %v885, 0
        %v925 = vsel %vm666, %v886, 0
        %v928 = vsel %vm666, %v887, 0
        %v931 = vsel %vm666, %v888, 0
        %v934 = vsel %vm666, %v889, 0
        %v937 = vsel %vm666, %v890, 0
        %v940 = vand.u32 %v202, %v718
        %942 = vmatpush.bf16.msra.mxu0 0
        %943 = vmatpush.bf16.msra.mxu0 0
        %944 = vmatpush.bf16.msra.mxu0 0
        %945 = vmatpush.bf16.msra.mxu0 0
        %946 = vmatpush.bf16.msra.mxu0 0
        %947 = vmatpush.bf16.msra.mxu0 0
        %948 = vmatpush.bf16.msra.mxu0 0
        %949 = vmatpush.bf16.msra.mxu0 %v940
        %950 = vmatmul.bf16.gmra.mxu0 %v892
        %v951 = vpop.f32.mrf.mxu0
        %v952 = vadd.f32 %v732, %v951
        %v953 = vpop.f32.mrf.mxu0
        %v954 = vadd.f32 %v734, %v953
        %955 = vmatmul.bf16.gmra.mxu0 %v895
        %v956 = vpop.f32.mrf.mxu0
        %v957 = vadd.f32 %v737, %v956
        %v958 = vpop.f32.mrf.mxu0
        %v959 = vadd.f32 %v739, %v958
        %960 = vmatmul.bf16.gmra.mxu0 %v898
        %v961 = vpop.f32.mrf.mxu0
        %v962 = vadd.f32 %v742, %v961
        %v963 = vpop.f32.mrf.mxu0
        %v964 = vadd.f32 %v744, %v963
        %965 = vmatmul.bf16.gmra.mxu0 %v901
        %v966 = vpop.f32.mrf.mxu0
        %v967 = vadd.f32 %v747, %v966
        %v968 = vpop.f32.mrf.mxu0
        %v969 = vadd.f32 %v749, %v968
        %970 = vmatmul.bf16.gmra.mxu0 %v904
        %v971 = vpop.f32.mrf.mxu0
        %v972 = vadd.f32 %v752, %v971
        %v973 = vpop.f32.mrf.mxu0
        %v974 = vadd.f32 %v754, %v973
        %975 = vmatmul.bf16.gmra.mxu0 %v907
        %v976 = vpop.f32.mrf.mxu0
        %v977 = vadd.f32 %v757, %v976
        %v978 = vpop.f32.mrf.mxu0
        %v979 = vadd.f32 %v759, %v978
        %980 = vmatmul.bf16.gmra.mxu0 %v910
        %v981 = vpop.f32.mrf.mxu0
        %v982 = vadd.f32 %v762, %v981
        %v983 = vpop.f32.mrf.mxu0
        %v984 = vadd.f32 %v764, %v983
        %985 = vmatmul.bf16.gmra.mxu0 %v913
        %v986 = vpop.f32.mrf.mxu0
        %v987 = vadd.f32 %v767, %v986
        %v988 = vpop.f32.mrf.mxu0
        %v989 = vadd.f32 %v769, %v988
        %990 = vmatmul.bf16.gmra.mxu0 %v916
        %v991 = vpop.f32.mrf.mxu0
        %v992 = vadd.f32 %v772, %v991
        %v993 = vpop.f32.mrf.mxu0
        %v994 = vadd.f32 %v774, %v993
        %995 = vmatmul.bf16.gmra.mxu0 %v919
        %v996 = vpop.f32.mrf.mxu0
        %v997 = vadd.f32 %v777, %v996
        %v998 = vpop.f32.mrf.mxu0
        %v999 = vadd.f32 %v779, %v998
        %1000 = vmatmul.bf16.gmra.mxu0 %v922
        %v1001 = vpop.f32.mrf.mxu0
        %v1002 = vadd.f32 %v782, %v1001
        %v1003 = vpop.f32.mrf.mxu0
        %v1004 = vadd.f32 %v784, %v1003
        %1005 = vmatmul.bf16.gmra.mxu0 %v925
        %v1006 = vpop.f32.mrf.mxu0
        %v1007 = vadd.f32 %v787, %v1006
        %v1008 = vpop.f32.mrf.mxu0
        %v1009 = vadd.f32 %v789, %v1008
        %1010 = vmatmul.bf16.gmra.mxu0 %v928
        %v1011 = vpop.f32.mrf.mxu0
        %v1012 = vadd.f32 %v792, %v1011
        %v1013 = vpop.f32.mrf.mxu0
        %v1014 = vadd.f32 %v794, %v1013
        %1015 = vmatmul.bf16.gmra.mxu0 %v931
        %v1016 = vpop.f32.mrf.mxu0
        %v1017 = vadd.f32 %v797, %v1016
        %v1018 = vpop.f32.mrf.mxu0
        %v1019 = vadd.f32 %v799, %v1018
        %1020 = vmatmul.bf16.gmra.mxu0 %v934
        %v1021 = vpop.f32.mrf.mxu0
        %v1022 = vadd.f32 %v802, %v1021
        %v1023 = vpop.f32.mrf.mxu0
        %v1024 = vadd.f32 %v804, %v1023
        %1025 = vmatmul.bf16.gmra.mxu0 %v937
        %v1026 = vpop.f32.mrf.mxu0
        %v1027 = vadd.f32 %v807, %v1026
        %v1028 = vpop.f32.mrf.mxu0
        %v1029 = vadd.f32 %v809, %v1028
        %1030 = vdwg.mxu0
        %v1031 = vld [vmem:[%s168] sm:$0xe]
        %v1032 = vld [vmem:[%s168 + $0xc] sm:$0xe]
        %v1033 = vld [vmem:[%s168 + $0x18] sm:$0xe]
        %v1034 = vld [vmem:[%s168 + $0x24] sm:$0xe]
        %v1035 = vld [vmem:[%s168 + $0x30] sm:$0xe]
        %v1036 = vld [vmem:[%s168 + $0x3c] sm:$0xe]
        %v1037 = vld [vmem:[%s168 + $0x48] sm:$0xe]
        %v1038 = vld [vmem:[%s168 + $0x54] sm:$0xe]
        %v1039 = vld [vmem:[%s168 + $0x60] sm:$0xe]
        %v1040 = vld [vmem:[%s168 + $0x6c] sm:$0xe]
        %v1041 = vld [vmem:[%s168 + $0x78] sm:$0xe]
        %v1042 = vld [vmem:[%s168 + $0x84] sm:$0xe]
        %v1043 = vld [vmem:[%s168 + $0x90] sm:$0xe]
        %v1044 = vld [vmem:[%s168 + $0x9c] sm:$0xe]
        %v1045 = vld [vmem:[%s168 + $0xa8] sm:$0xe]
        %v1046 = vld [vmem:[%s168 + $0xb4] sm:$0xe]
        %vm1079 = vcmask 1042432
        %vm1080 = vcmask 1046532
        %vm1081 = vmor %vm1079, %vm1080
        %v1082 = vrot.slane %v1031, 5
        %v1083 = vrot.slane %v1082, 4
        %v1084 = vrot.slane %v171, 5
        %v1085 = vsel %vm1081, %v1083, %v1084
        %v1086 = vrot.slane %v1084, 4
        %v1087 = vrot.slane %v203, 5
        %v1088 = vsel %vm1081, %v1086, %v1087
        %v1089 = vrot.slane %v1032, 5
        %v1090 = vrot.slane %v1089, 4
        %v1091 = vrot.slane %v173, 5
        %v1092 = vsel %vm1081, %v1090, %v1091
        %v1093 = vrot.slane %v1091, 4
        %v1094 = vrot.slane %v204, 5
        %v1095 = vsel %vm1081, %v1093, %v1094
        %v1096 = vrot.slane %v1033, 5
        %v1097 = vrot.slane %v1096, 4
        %v1098 = vrot.slane %v175, 5
        %v1099 = vsel %vm1081, %v1097, %v1098
        %v1100 = vrot.slane %v1098, 4
        %v1101 = vrot.slane %v205, 5
        %v1102 = vsel %vm1081, %v1100, %v1101
        %v1103 = vrot.slane %v1034, 5
        %v1104 = vrot.slane %v1103, 4
        %v1105 = vrot.slane %v177, 5
        %v1106 = vsel %vm1081, %v1104, %v1105
        %v1107 = vrot.slane %v1105, 4
        %v1108 = vrot.slane %v206, 5
        %v1109 = vsel %vm1081, %v1107, %v1108
        %v1110 = vrot.slane %v1035, 5
        %v1111 = vrot.slane %v1110, 4
        %v1112 = vrot.slane %v179, 5
        %v1113 = vsel %vm1081, %v1111, %v1112
        %v1114 = vrot.slane %v1112, 4
        %v1115 = vrot.slane %v207, 5
        %v1116 = vsel %vm1081, %v1114, %v1115
        %v1117 = vrot.slane %v1036, 5
        %v1118 = vrot.slane %v1117, 4
        %v1119 = vrot.slane %v181, 5
        %v1120 = vsel %vm1081, %v1118, %v1119
        %v1121 = vrot.slane %v1119, 4
        %v1122 = vrot.slane %v208, 5
        %v1123 = vsel %vm1081, %v1121, %v1122
        %v1124 = vrot.slane %v1037, 5
        %v1125 = vrot.slane %v1124, 4
        %v1126 = vrot.slane %v183, 5
        %v1127 = vsel %vm1081, %v1125, %v1126
        %v1128 = vrot.slane %v1126, 4
        %v1129 = vrot.slane %v209, 5
        %v1130 = vsel %vm1081, %v1128, %v1129
        %v1131 = vrot.slane %v1038, 5
        %v1132 = vrot.slane %v1131, 4
        %v1133 = vrot.slane %v185, 5
        %v1134 = vsel %vm1081, %v1132, %v1133
        %v1135 = vrot.slane %v1133, 4
        %v1136 = vrot.slane %v210, 5
        %v1137 = vsel %vm1081, %v1135, %v1136
        %v1138 = vrot.slane %v1039, 5
        %v1139 = vrot.slane %v1138, 4
        %v1140 = vrot.slane %v187, 5
        %v1141 = vsel %vm1081, %v1139, %v1140
        %v1142 = vrot.slane %v1140, 4
        %v1143 = vrot.slane %v211, 5
        %v1144 = vsel %vm1081, %v1142, %v1143
        %v1145 = vrot.slane %v1040, 5
        %v1146 = vrot.slane %v1145, 4
        %v1147 = vrot.slane %v189, 5
        %v1148 = vsel %vm1081, %v1146, %v1147
        %v1149 = vrot.slane %v1147, 4
        %v1150 = vrot.slane %v212, 5
        %v1151 = vsel %vm1081, %v1149, %v1150
        %v1152 = vrot.slane %v1041, 5
        %v1153 = vrot.slane %v1152, 4
        %v1154 = vrot.slane %v191, 5
        %v1155 = vsel %vm1081, %v1153, %v1154
        %v1156 = vrot.slane %v1154, 4
        %v1157 = vrot.slane %v213, 5
        %v1158 = vsel %vm1081, %v1156, %v1157
        %v1159 = vrot.slane %v1042, 5
        %v1160 = vrot.slane %v1159, 4
        %v1161 = vrot.slane %v193, 5
        %v1162 = vsel %vm1081, %v1160, %v1161
        %v1163 = vrot.slane %v1161, 4
        %v1164 = vrot.slane %v214, 5
        %v1165 = vsel %vm1081, %v1163, %v1164
        %v1166 = vrot.slane %v1043, 5
        %v1167 = vrot.slane %v1166, 4
        %v1168 = vrot.slane %v195, 5
        %v1169 = vsel %vm1081, %v1167, %v1168
        %v1170 = vrot.slane %v1168, 4
        %v1171 = vrot.slane %v215, 5
        %v1172 = vsel %vm1081, %v1170, %v1171
        %v1173 = vrot.slane %v1044, 5
        %v1174 = vrot.slane %v1173, 4
        %v1175 = vrot.slane %v197, 5
        %v1176 = vsel %vm1081, %v1174, %v1175
        %v1177 = vrot.slane %v1175, 4
        %v1178 = vrot.slane %v216, 5
        %v1179 = vsel %vm1081, %v1177, %v1178
        %v1180 = vrot.slane %v1045, 5
        %v1181 = vrot.slane %v1180, 4
        %v1182 = vrot.slane %v199, 5
        %v1183 = vsel %vm1081, %v1181, %v1182
        %v1184 = vrot.slane %v1182, 4
        %v1185 = vrot.slane %v217, 5
        %v1186 = vsel %vm1081, %v1184, %v1185
        %v1187 = vrot.slane %v1046, 5
        %v1188 = vrot.slane %v1187, 4
        %v1189 = vrot.slane %v201, 5
        %v1190 = vsel %vm1081, %v1188, %v1189
        %v1191 = vrot.slane %v1189, 4
        %v1192 = vrot.slane %v218, 5
        %v1193 = vsel %vm1081, %v1191, %v1192
        %v1194 = vld [vmem:[%s1] sm:$0x8]
        %v1195 = vld [vmem:[%s1 + $0x4] sm:$0x1]
        %v1196 = vunpack.c.l.b16 %v1085
        %v1197 = vunpack.c.l.b16 %v1088
        %v1198 = vunpack.c.l.b16 %v1092
        %v1199 = vunpack.c.l.b16 %v1095
        %v1200 = vunpack.c.l.b16 %v1099
        %v1201 = vunpack.c.l.b16 %v1102
        %v1202 = vunpack.c.l.b16 %v1106
        %v1203 = vunpack.c.l.b16 %v1109
        %v1204 = vunpack.c.l.b16 %v1113
        %v1205 = vunpack.c.l.b16 %v1116
        %v1206 = vunpack.c.l.b16 %v1120
        %v1207 = vunpack.c.l.b16 %v1123
        %v1208 = vunpack.c.l.b16 %v1127
        %v1209 = vunpack.c.l.b16 %v1130
        %v1210 = vunpack.c.l.b16 %v1134
        %v1211 = vunpack.c.l.b16 %v1137
        %v1212 = vunpack.c.l.b16 %v1141
        %v1213 = vunpack.c.l.b16 %v1144
        %v1214 = vunpack.c.l.b16 %v1148
        %v1215 = vunpack.c.l.b16 %v1151
        %v1216 = vunpack.c.l.b16 %v1155
        %v1217 = vunpack.c.l.b16 %v1158
        %v1218 = vunpack.c.l.b16 %v1162
        %v1219 = vunpack.c.l.b16 %v1165
        %v1220 = vunpack.c.l.b16 %v1169
        %v1221 = vunpack.c.l.b16 %v1172
        %v1222 = vunpack.c.l.b16 %v1176
        %v1223 = vunpack.c.l.b16 %v1179
        %v1224 = vunpack.c.l.b16 %v1183
        %v1225 = vunpack.c.l.b16 %v1186
        %v1226 = vunpack.c.l.b16 %v1190
        %v1227 = vunpack.c.l.b16 %v1193
        %v1228 = vpack.c.b16 %v1197, %v1196
        %v1229 = vpack.c.b16 %v1199, %v1198
        %v1230 = vpack.c.b16 %v1201, %v1200
        %v1231 = vpack.c.b16 %v1203, %v1202
        %v1232 = vpack.c.b16 %v1205, %v1204
        %v1233 = vpack.c.b16 %v1207, %v1206
        %v1234 = vpack.c.b16 %v1209, %v1208
        %v1235 = vpack.c.b16 %v1211, %v1210
        %v1236 = vpack.c.b16 %v1213, %v1212
        %v1237 = vpack.c.b16 %v1215, %v1214
        %v1238 = vpack.c.b16 %v1217, %v1216
        %v1239 = vpack.c.b16 %v1219, %v1218
        %v1240 = vpack.c.b16 %v1221, %v1220
        %v1241 = vpack.c.b16 %v1223, %v1222
        %v1242 = vpack.c.b16 %v1225, %v1224
        %v1243 = vpack.c.b16 %v1227, %v1226
        %v1246 = vunpack.c.l.b16 %v1194
        %v1247 = vunpack.c.l.b16 %v1195
        %v1248 = vpack.c.b16 %v1247, %v1246
        %v1249 = vrot.slane %v1248, 3
        %v1251 = vsel %vm666, %v1228, 0
        %v1254 = vsel %vm666, %v1229, 0
        %v1257 = vsel %vm666, %v1230, 0
        %v1260 = vsel %vm666, %v1231, 0
        %v1263 = vsel %vm666, %v1232, 0
        %v1266 = vsel %vm666, %v1233, 0
        %v1269 = vsel %vm666, %v1234, 0
        %v1272 = vsel %vm666, %v1235, 0
        %v1275 = vsel %vm666, %v1236, 0
        %v1278 = vsel %vm666, %v1237, 0
        %v1281 = vsel %vm666, %v1238, 0
        %v1284 = vsel %vm666, %v1239, 0
        %v1287 = vsel %vm666, %v1240, 0
        %v1290 = vsel %vm666, %v1241, 0
        %v1293 = vsel %vm666, %v1242, 0
        %v1296 = vsel %vm666, %v1243, 0
        %v1299 = vand.u32 %v1249, %v718
        %1301 = vmatpush.bf16.msra.mxu0 0
        %1302 = vmatpush.bf16.msra.mxu0 0
        %1303 = vmatpush.bf16.msra.mxu0 0
        %1304 = vmatpush.bf16.msra.mxu0 0
        %1305 = vmatpush.bf16.msra.mxu0 0
        %1306 = vmatpush.bf16.msra.mxu0 0
        %1307 = vmatpush.bf16.msra.mxu0 0
        %1308 = vmatpush.bf16.msra.mxu0 %v1299
        %1309 = vmatmul.bf16.gmra.mxu0 %v1251
        %v1310 = vpop.f32.mrf.mxu0
        %v1311 = vadd.f32 0.0, %v1310
        %v1312 = vpop.f32.mrf.mxu0
        %v1313 = vadd.f32 0.0, %v1312
        %1314 = vmatmul.bf16.gmra.mxu0 %v1254
        %v1315 = vpop.f32.mrf.mxu0
        %v1316 = vadd.f32 0.0, %v1315
        %v1317 = vpop.f32.mrf.mxu0
        %v1318 = vadd.f32 0.0, %v1317
        %1319 = vmatmul.bf16.gmra.mxu0 %v1257
        %v1320 = vpop.f32.mrf.mxu0
        %v1321 = vadd.f32 0.0, %v1320
        %v1322 = vpop.f32.mrf.mxu0
        %v1323 = vadd.f32 0.0, %v1322
        %1324 = vmatmul.bf16.gmra.mxu0 %v1260
        %v1325 = vpop.f32.mrf.mxu0
        %v1326 = vadd.f32 0.0, %v1325
        %v1327 = vpop.f32.mrf.mxu0
        %v1328 = vadd.f32 0.0, %v1327
        %1329 = vmatmul.bf16.gmra.mxu0 %v1263
        %v1330 = vpop.f32.mrf.mxu0
        %v1331 = vadd.f32 0.0, %v1330
        %v1332 = vpop.f32.mrf.mxu0
        %v1333 = vadd.f32 0.0, %v1332
        %1334 = vmatmul.bf16.gmra.mxu0 %v1266
        %v1335 = vpop.f32.mrf.mxu0
        %v1336 = vadd.f32 0.0, %v1335
        %v1337 = vpop.f32.mrf.mxu0
        %v1338 = vadd.f32 0.0, %v1337
        %1339 = vmatmul.bf16.gmra.mxu0 %v1269
        %v1340 = vpop.f32.mrf.mxu0
        %v1341 = vadd.f32 0.0, %v1340
        %v1342 = vpop.f32.mrf.mxu0
        %v1343 = vadd.f32 0.0, %v1342
        %1344 = vmatmul.bf16.gmra.mxu0 %v1272
        %v1345 = vpop.f32.mrf.mxu0
        %v1346 = vadd.f32 0.0, %v1345
        %v1347 = vpop.f32.mrf.mxu0
        %v1348 = vadd.f32 0.0, %v1347
        %1349 = vmatmul.bf16.gmra.mxu0 %v1275
        %v1350 = vpop.f32.mrf.mxu0
        %v1351 = vadd.f32 0.0, %v1350
        %v1352 = vpop.f32.mrf.mxu0
        %v1353 = vadd.f32 0.0, %v1352
        %1354 = vmatmul.bf16.gmra.mxu0 %v1278
        %v1355 = vpop.f32.mrf.mxu0
        %v1356 = vadd.f32 0.0, %v1355
        %v1357 = vpop.f32.mrf.mxu0
        %v1358 = vadd.f32 0.0, %v1357
        %1359 = vmatmul.bf16.gmra.mxu0 %v1281
        %v1360 = vpop.f32.mrf.mxu0
        %v1361 = vadd.f32 0.0, %v1360
        %v1362 = vpop.f32.mrf.mxu0
        %v1363 = vadd.f32 0.0, %v1362
        %1364 = vmatmul.bf16.gmra.mxu0 %v1284
        %v1365 = vpop.f32.mrf.mxu0
        %v1366 = vadd.f32 0.0, %v1365
        %v1367 = vpop.f32.mrf.mxu0
        %v1368 = vadd.f32 0.0, %v1367
        %1369 = vmatmul.bf16.gmra.mxu0 %v1287
        %v1370 = vpop.f32.mrf.mxu0
        %v1371 = vadd.f32 0.0, %v1370
        %v1372 = vpop.f32.mrf.mxu0
        %v1373 = vadd.f32 0.0, %v1372
        %1374 = vmatmul.bf16.gmra.mxu0 %v1290
        %v1375 = vpop.f32.mrf.mxu0
        %v1376 = vadd.f32 0.0, %v1375
        %v1377 = vpop.f32.mrf.mxu0
        %v1378 = vadd.f32 0.0, %v1377
        %1379 = vmatmul.bf16.gmra.mxu0 %v1293
        %v1380 = vpop.f32.mrf.mxu0
        %v1381 = vadd.f32 0.0, %v1380
        %v1382 = vpop.f32.mrf.mxu0
        %v1383 = vadd.f32 0.0, %v1382
        %1384 = vmatmul.bf16.gmra.mxu0 %v1296
        %v1385 = vpop.f32.mrf.mxu0
        %v1386 = vadd.f32 0.0, %v1385
        %v1387 = vpop.f32.mrf.mxu0
        %v1388 = vadd.f32 0.0, %v1387
        %1389 = vdwg.mxu0
        %v1390 = vadd.f32 %v952, %v1311
        %v1391 = vadd.f32 %v954, %v1313
        %v1392 = vadd.f32 %v957, %v1316
        %v1393 = vadd.f32 %v959, %v1318
        %v1394 = vadd.f32 %v962, %v1321
        %v1395 = vadd.f32 %v964, %v1323
        %v1396 = vadd.f32 %v967, %v1326
        %v1397 = vadd.f32 %v969, %v1328
        %v1398 = vadd.f32 %v972, %v1331
        %v1399 = vadd.f32 %v974, %v1333
        %v1400 = vadd.f32 %v977, %v1336
        %v1401 = vadd.f32 %v979, %v1338
        %v1402 = vadd.f32 %v982, %v1341
        %v1403 = vadd.f32 %v984, %v1343
        %v1404 = vadd.f32 %v987, %v1346
        %v1405 = vadd.f32 %v989, %v1348
        %v1406 = vadd.f32 %v992, %v1351
        %v1407 = vadd.f32 %v994, %v1353
        %v1408 = vadd.f32 %v997, %v1356
        %v1409 = vadd.f32 %v999, %v1358
        %v1410 = vadd.f32 %v1002, %v1361
        %v1411 = vadd.f32 %v1004, %v1363
        %v1412 = vadd.f32 %v1007, %v1366
        %v1413 = vadd.f32 %v1009, %v1368
        %v1414 = vadd.f32 %v1012, %v1371
        %v1415 = vadd.f32 %v1014, %v1373
        %v1416 = vadd.f32 %v1017, %v1376
        %v1417 = vadd.f32 %v1019, %v1378
        %v1418 = vadd.f32 %v1022, %v1381
        %v1419 = vadd.f32 %v1024, %v1383
        %v1420 = vadd.f32 %v1027, %v1386
        %v1421 = vadd.f32 %v1029, %v1388
        %s1422 = scalar_lea.vmem %s168, 12
        %v1423 = vld [vmem:[%s1422] sm:$0xf]
        %v1424 = vld [vmem:[%s1422 + $0x4] sm:$0xf]
        %v1425 = vld [vmem:[%s1422 + $0xc] sm:$0xf]
        %v1426 = vld [vmem:[%s1422 + $0x10] sm:$0xf]
        %v1427 = vld [vmem:[%s1422 + $0x18] sm:$0xf]
        %v1428 = vld [vmem:[%s1422 + $0x1c] sm:$0xf]
        %v1429 = vld [vmem:[%s1422 + $0x24] sm:$0xf]
        %v1430 = vld [vmem:[%s1422 + $0x28] sm:$0xf]
        %v1431 = vld [vmem:[%s1422 + $0x30] sm:$0xf]
        %v1432 = vld [vmem:[%s1422 + $0x34] sm:$0xf]
        %v1433 = vld [vmem:[%s1422 + $0x3c] sm:$0xf]
        %v1434 = vld [vmem:[%s1422 + $0x40] sm:$0xf]
        %v1435 = vld [vmem:[%s1422 + $0x48] sm:$0xf]
        %v1436 = vld [vmem:[%s1422 + $0x4c] sm:$0xf]
        %v1437 = vld [vmem:[%s1422 + $0x54] sm:$0xf]
        %v1438 = vld [vmem:[%s1422 + $0x58] sm:$0xf]
        %v1439 = vld [vmem:[%s1422 + $0x60] sm:$0xf]
        %v1440 = vld [vmem:[%s1422 + $0x64] sm:$0xf]
        %v1441 = vld [vmem:[%s1422 + $0x6c] sm:$0xf]
        %v1442 = vld [vmem:[%s1422 + $0x70] sm:$0xf]
        %v1443 = vld [vmem:[%s1422 + $0x78] sm:$0xf]
        %v1444 = vld [vmem:[%s1422 + $0x7c] sm:$0xf]
        %v1445 = vld [vmem:[%s1422 + $0x84] sm:$0xf]
        %v1446 = vld [vmem:[%s1422 + $0x88] sm:$0xf]
        %v1447 = vld [vmem:[%s1422 + $0x90] sm:$0xf]
        %v1448 = vld [vmem:[%s1422 + $0x94] sm:$0xf]
        %v1449 = vld [vmem:[%s1422 + $0x9c] sm:$0xf]
        %v1450 = vld [vmem:[%s1422 + $0xa0] sm:$0xf]
        %v1451 = vld [vmem:[%s1422 + $0xa8] sm:$0xf]
        %v1452 = vld [vmem:[%s1422 + $0xac] sm:$0xf]
        %v1453 = vld [vmem:[%s1422 + $0xb4] sm:$0xf]
        %v1454 = vld [vmem:[%s1422 + $0xb8] sm:$0xf]
        %v1455 = vld [vmem:[%s1 + $0x4] sm:$0x3]
        %v1488 = vunpack.c.l.b16 %v1423
        %v1489 = vunpack.c.l.b16 %v1424
        %v1490 = vunpack.c.l.b16 %v1425
        %v1491 = vunpack.c.l.b16 %v1426
        %v1492 = vunpack.c.l.b16 %v1427
        %v1493 = vunpack.c.l.b16 %v1428
        %v1494 = vunpack.c.l.b16 %v1429
        %v1495 = vunpack.c.l.b16 %v1430
        %v1496 = vunpack.c.l.b16 %v1431
        %v1497 = vunpack.c.l.b16 %v1432
        %v1498 = vunpack.c.l.b16 %v1433
        %v1499 = vunpack.c.l.b16 %v1434
        %v1500 = vunpack.c.l.b16 %v1435
        %v1501 = vunpack.c.l.b16 %v1436
        %v1502 = vunpack.c.l.b16 %v1437
        %v1503 = vunpack.c.l.b16 %v1438
        %v1504 = vunpack.c.l.b16 %v1439
        %v1505 = vunpack.c.l.b16 %v1440
        %v1506 = vunpack.c.l.b16 %v1441
        %v1507 = vunpack.c.l.b16 %v1442
        %v1508 = vunpack.c.l.b16 %v1443
        %v1509 = vunpack.c.l.b16 %v1444
        %v1510 = vunpack.c.l.b16 %v1445
        %v1511 = vunpack.c.l.b16 %v1446
        %v1512 = vunpack.c.l.b16 %v1447
        %v1513 = vunpack.c.l.b16 %v1448
        %v1514 = vunpack.c.l.b16 %v1449
        %v1515 = vunpack.c.l.b16 %v1450
        %v1516 = vunpack.c.l.b16 %v1451
        %v1517 = vunpack.c.l.b16 %v1452
        %v1518 = vunpack.c.l.b16 %v1453
        %v1519 = vunpack.c.l.b16 %v1454
        %v1520 = vpack.c.b16 %v1489, %v1488
        %v1521 = vpack.c.b16 %v1491, %v1490
        %v1522 = vpack.c.b16 %v1493, %v1492
        %v1523 = vpack.c.b16 %v1495, %v1494
        %v1524 = vpack.c.b16 %v1497, %v1496
        %v1525 = vpack.c.b16 %v1499, %v1498
        %v1526 = vpack.c.b16 %v1501, %v1500
        %v1527 = vpack.c.b16 %v1503, %v1502
        %v1528 = vpack.c.b16 %v1505, %v1504
        %v1529 = vpack.c.b16 %v1507, %v1506
        %v1530 = vpack.c.b16 %v1509, %v1508
        %v1531 = vpack.c.b16 %v1511, %v1510
        %v1532 = vpack.c.b16 %v1513, %v1512
        %v1533 = vpack.c.b16 %v1515, %v1514
        %v1534 = vpack.c.b16 %v1517, %v1516
        %v1535 = vpack.c.b16 %v1519, %v1518
        %v1537 = vunpack.c.l.b16 %v1455
        %v1538 = vpack.c.b16 %v1537, %v1537
        %v1540 = vshrl.u32 %v1538, 16
        %v1542 = vshll.u32 %v1538, 16
        %v1544 = vrot.slane %v1542, 1
        %v1545 = vor.u32 %v1540, %v1544
        %v1547 = vsel %vm666, %v1520, 0
        %v1550 = vsel %vm666, %v1521, 0
        %v1553 = vsel %vm666, %v1522, 0
        %v1556 = vsel %vm666, %v1523, 0
        %v1559 = vsel %vm666, %v1524, 0
        %v1562 = vsel %vm666, %v1525, 0
        %v1565 = vsel %vm666, %v1526, 0
        %v1568 = vsel %vm666, %v1527, 0
        %v1571 = vsel %vm666, %v1528, 0
        %v1574 = vsel %vm666, %v1529, 0
        %v1577 = vsel %vm666, %v1530, 0
        %v1580 = vsel %vm666, %v1531, 0
        %v1583 = vsel %vm666, %v1532, 0
        %v1586 = vsel %vm666, %v1533, 0
        %v1589 = vsel %vm666, %v1534, 0
        %v1592 = vsel %vm666, %v1535, 0
        %v1595 = vand.u32 %v1545, %v718
        %1597 = vmatpush.bf16.msra.mxu0 0
        %1598 = vmatpush.bf16.msra.mxu0 0
        %1599 = vmatpush.bf16.msra.mxu0 0
        %1600 = vmatpush.bf16.msra.mxu0 0
        %1601 = vmatpush.bf16.msra.mxu0 0
        %1602 = vmatpush.bf16.msra.mxu0 0
        %1603 = vmatpush.bf16.msra.mxu0 0
        %1604 = vmatpush.bf16.msra.mxu0 %v1595
        %1605 = vmatmul.bf16.gmra.mxu0 %v1547
        %v1606 = vpop.f32.mrf.mxu0
        %v1607 = vadd.f32 0.0, %v1606
        %v1608 = vpop.f32.mrf.mxu0
        %v1609 = vadd.f32 0.0, %v1608
        %1610 = vmatmul.bf16.gmra.mxu0 %v1550
        %v1611 = vpop.f32.mrf.mxu0
        %v1612 = vadd.f32 0.0, %v1611
        %v1613 = vpop.f32.mrf.mxu0
        %v1614 = vadd.f32 0.0, %v1613
        %1615 = vmatmul.bf16.gmra.mxu0 %v1553
        %v1616 = vpop.f32.mrf.mxu0
        %v1617 = vadd.f32 0.0, %v1616
        %v1618 = vpop.f32.mrf.mxu0
        %v1619 = vadd.f32 0.0, %v1618
        %1620 = vmatmul.bf16.gmra.mxu0 %v1556
        %v1621 = vpop.f32.mrf.mxu0
        %v1622 = vadd.f32 0.0, %v1621
        %v1623 = vpop.f32.mrf.mxu0
        %v1624 = vadd.f32 0.0, %v1623
        %1625 = vmatmul.bf16.gmra.mxu0 %v1559
        %v1626 = vpop.f32.mrf.mxu0
        %v1627 = vadd.f32 0.0, %v1626
        %v1628 = vpop.f32.mrf.mxu0
        %v1629 = vadd.f32 0.0, %v1628
        %1630 = vmatmul.bf16.gmra.mxu0 %v1562
        %v1631 = vpop.f32.mrf.mxu0
        %v1632 = vadd.f32 0.0, %v1631
        %v1633 = vpop.f32.mrf.mxu0
        %v1634 = vadd.f32 0.0, %v1633
        %1635 = vmatmul.bf16.gmra.mxu0 %v1565
        %v1636 = vpop.f32.mrf.mxu0
        %v1637 = vadd.f32 0.0, %v1636
        %v1638 = vpop.f32.mrf.mxu0
        %v1639 = vadd.f32 0.0, %v1638
        %1640 = vmatmul.bf16.gmra.mxu0 %v1568
        %v1641 = vpop.f32.mrf.mxu0
        %v1642 = vadd.f32 0.0, %v1641
        %v1643 = vpop.f32.mrf.mxu0
        %v1644 = vadd.f32 0.0, %v1643
        %1645 = vmatmul.bf16.gmra.mxu0 %v1571
        %v1646 = vpop.f32.mrf.mxu0
        %v1647 = vadd.f32 0.0, %v1646
        %v1648 = vpop.f32.mrf.mxu0
        %v1649 = vadd.f32 0.0, %v1648
        %1650 = vmatmul.bf16.gmra.mxu0 %v1574
        %v1651 = vpop.f32.mrf.mxu0
        %v1652 = vadd.f32 0.0, %v1651
        %v1653 = vpop.f32.mrf.mxu0
        %v1654 = vadd.f32 0.0, %v1653
        %1655 = vmatmul.bf16.gmra.mxu0 %v1577
        %v1656 = vpop.f32.mrf.mxu0
        %v1657 = vadd.f32 0.0, %v1656
        %v1658 = vpop.f32.mrf.mxu0
        %v1659 = vadd.f32 0.0, %v1658
        %1660 = vmatmul.bf16.gmra.mxu0 %v1580
        %v1661 = vpop.f32.mrf.mxu0
        %v1662 = vadd.f32 0.0, %v1661
        %v1663 = vpop.f32.mrf.mxu0
        %v1664 = vadd.f32 0.0, %v1663
        %1665 = vmatmul.bf16.gmra.mxu0 %v1583
        %v1666 = vpop.f32.mrf.mxu0
        %v1667 = vadd.f32 0.0, %v1666
        %v1668 = vpop.f32.mrf.mxu0
        %v1669 = vadd.f32 0.0, %v1668
        %1670 = vmatmul.bf16.gmra.mxu0 %v1586
        %v1671 = vpop.f32.mrf.mxu0
        %v1672 = vadd.f32 0.0, %v1671
        %v1673 = vpop.f32.mrf.mxu0
        %v1674 = vadd.f32 0.0, %v1673
        %1675 = vmatmul.bf16.gmra.mxu0 %v1589
        %v1676 = vpop.f32.mrf.mxu0
        %v1677 = vadd.f32 0.0, %v1676
        %v1678 = vpop.f32.mrf.mxu0
        %v1679 = vadd.f32 0.0, %v1678
        %1680 = vmatmul.bf16.gmra.mxu0 %v1592
        %v1681 = vpop.f32.mrf.mxu0
        %v1682 = vadd.f32 0.0, %v1681
        %v1683 = vpop.f32.mrf.mxu0
        %v1684 = vadd.f32 0.0, %v1683
        %1685 = vdwg.mxu0
        %v1686 = vadd.f32 %v1390, %v1607
        %v1687 = vadd.f32 %v1391, %v1609
        %v1688 = vadd.f32 %v1392, %v1612
        %v1689 = vadd.f32 %v1393, %v1614
        %v1690 = vadd.f32 %v1394, %v1617
        %v1691 = vadd.f32 %v1395, %v1619
        %v1692 = vadd.f32 %v1396, %v1622
        %v1693 = vadd.f32 %v1397, %v1624
        %v1694 = vadd.f32 %v1398, %v1627
        %v1695 = vadd.f32 %v1399, %v1629
        %v1696 = vadd.f32 %v1400, %v1632
        %v1697 = vadd.f32 %v1401, %v1634
        %v1698 = vadd.f32 %v1402, %v1637
        %v1699 = vadd.f32 %v1403, %v1639
        %v1700 = vadd.f32 %v1404, %v1642
        %v1701 = vadd.f32 %v1405, %v1644
        %v1702 = vadd.f32 %v1406, %v1647
        %v1703 = vadd.f32 %v1407, %v1649
        %v1704 = vadd.f32 %v1408, %v1652
        %v1705 = vadd.f32 %v1409, %v1654
        %v1706 = vadd.f32 %v1410, %v1657
        %v1707 = vadd.f32 %v1411, %v1659
        %v1708 = vadd.f32 %v1412, %v1662
        %v1709 = vadd.f32 %v1413, %v1664
        %v1710 = vadd.f32 %v1414, %v1667
        %v1711 = vadd.f32 %v1415, %v1669
        %v1712 = vadd.f32 %v1416, %v1672
        %v1713 = vadd.f32 %v1417, %v1674
        %v1714 = vadd.f32 %v1418, %v1677
        %v1715 = vadd.f32 %v1419, %v1679
        %v1716 = vadd.f32 %v1420, %v1682
        %v1717 = vadd.f32 %v1421, %v1684
        %v1718 = vld [vmem:[%s1422] sm:$0xf]
        %v1719 = vld [vmem:[%s1422 + $0x4] sm:$0xf]
        %v1720 = vld [vmem:[%s1422 + $0x8] sm:$0x1]
        %v1721 = vld [vmem:[%s1422 + $0xc] sm:$0xf]
        %v1722 = vld [vmem:[%s1422 + $0x10] sm:$0xf]
        %v1723 = vld [vmem:[%s1422 + $0x14] sm:$0x1]
        %v1724 = vld [vmem:[%s1422 + $0x18] sm:$0xf]
        %v1725 = vld [vmem:[%s1422 + $0x1c] sm:$0xf]
        %v1726 = vld [vmem:[%s1422 + $0x20] sm:$0x1]
        %v1727 = vld [vmem:[%s1422 + $0x24] sm:$0xf]
        %v1728 = vld [vmem:[%s1422 + $0x28] sm:$0xf]
        %v1729 = vld [vmem:[%s1422 + $0x2c] sm:$0x1]
        %v1730 = vld [vmem:[%s1422 + $0x30] sm:$0xf]
        %v1731 = vld [vmem:[%s1422 + $0x34] sm:$0xf]
        %v1732 = vld [vmem:[%s1422 + $0x38] sm:$0x1]
        %v1733 = vld [vmem:[%s1422 + $0x3c] sm:$0xf]
        %v1734 = vld [vmem:[%s1422 + $0x40] sm:$0xf]
        %v1735 = vld [vmem:[%s1422 + $0x44] sm:$0x1]
        %v1736 = vld [vmem:[%s1422 + $0x48] sm:$0xf]
        %v1737 = vld [vmem:[%s1422 + $0x4c] sm:$0xf]
        %v1738 = vld [vmem:[%s1422 + $0x50] sm:$0x1]
        %v1739 = vld [vmem:[%s1422 + $0x54] sm:$0xf]
        %v1740 = vld [vmem:[%s1422 + $0x58] sm:$0xf]
        %v1741 = vld [vmem:[%s1422 + $0x5c] sm:$0x1]
        %v1742 = vld [vmem:[%s1422 + $0x60] sm:$0xf]
        %v1743 = vld [vmem:[%s1422 + $0x64] sm:$0xf]
        %v1744 = vld [vmem:[%s1422 + $0x68] sm:$0x1]
        %v1745 = vld [vmem:[%s1422 + $0x6c] sm:$0xf]
        %v1746 = vld [vmem:[%s1422 + $0x70] sm:$0xf]
        %v1747 = vld [vmem:[%s1422 + $0x74] sm:$0x1]
        %v1748 = vld [vmem:[%s1422 + $0x78] sm:$0xf]
        %v1749 = vld [vmem:[%s1422 + $0x7c] sm:$0xf]
        %v1750 = vld [vmem:[%s1422 + $0x80] sm:$0x1]
        %v1751 = vld [vmem:[%s1422 + $0x84] sm:$0xf]
        %v1752 = vld [vmem:[%s1422 + $0x88] sm:$0xf]
        %v1753 = vld [vmem:[%s1422 + $0x8c] sm:$0x1]
        %v1754 = vld [vmem:[%s1422 + $0x90] sm:$0xf]
        %v1755 = vld [vmem:[%s1422 + $0x94] sm:$0xf]
        %v1756 = vld [vmem:[%s1422 + $0x98] sm:$0x1]
        %v1757 = vld [vmem:[%s1422 + $0x9c] sm:$0xf]
        %v1758 = vld [vmem:[%s1422 + $0xa0] sm:$0xf]
        %v1759 = vld [vmem:[%s1422 + $0xa4] sm:$0x1]
        %v1760 = vld [vmem:[%s1422 + $0xa8] sm:$0xf]
        %v1761 = vld [vmem:[%s1422 + $0xac] sm:$0xf]
        %v1762 = vld [vmem:[%s1422 + $0xb0] sm:$0x1]
        %v1763 = vld [vmem:[%s1422 + $0xb4] sm:$0xf]
        %v1764 = vld [vmem:[%s1422 + $0xb8] sm:$0xf]
        %v1765 = vld [vmem:[%s1422 + $0xbc] sm:$0x1]
        %v1767 = vshrl.u32 %v1718, 16
        %v1769 = vrot.slane %v1767, 4
        %v1770 = vshll.u32 %v1718, 16
        %v1772 = vrot.slane %v1770, 5
        %v1773 = vor.u32 %v1769, %v1772
        %v1774 = vrot.slane %v1773, 4
        %v1776 = vshll.u32 %v1719, 16
        %v1778 = vrot.slane %v1776, 5
        %v1779 = vsel %vm221, %v1774, %v1778
        %v1780 = vshrl.u32 %v1719, 16
        %v1782 = vrot.slane %v1780, 4
        %v1783 = vor.u32 %v1782, %v1778
        %v1784 = vrot.slane %v1783, 4
        %v1786 = vshll.u32 %v1720, 16
        %v1788 = vrot.slane %v1786, 5
        %v1789 = vsel %vm221, %v1784, %v1788
        %v1791 = vshrl.u32 %v1721, 16
        %v1793 = vrot.slane %v1791, 4
        %v1794 = vshll.u32 %v1721, 16
        %v1796 = vrot.slane %v1794, 5
        %v1797 = vor.u32 %v1793, %v1796
        %v1798 = vrot.slane %v1797, 4
        %v1800 = vshll.u32 %v1722, 16
        %v1802 = vrot.slane %v1800, 5
        %v1803 = vsel %vm221, %v1798, %v1802
        %v1804 = vshrl.u32 %v1722, 16
        %v1806 = vrot.slane %v1804, 4
        %v1807 = vor.u32 %v1806, %v1802
        %v1808 = vrot.slane %v1807, 4
        %v1810 = vshll.u32 %v1723, 16
        %v1812 = vrot.slane %v1810, 5
        %v1813 = vsel %vm221, %v1808, %v1812
        %v1815 = vshrl.u32 %v1724, 16
        %v1817 = vrot.slane %v1815, 4
        %v1818 = vshll.u32 %v1724, 16
        %v1820 = vrot.slane %v1818, 5
        %v1821 = vor.u32 %v1817, %v1820
        %v1822 = vrot.slane %v1821, 4
        %v1824 = vshll.u32 %v1725, 16
        %v1826 = vrot.slane %v1824, 5
        %v1827 = vsel %vm221, %v1822, %v1826
        %v1828 = vshrl.u32 %v1725, 16
        %v1830 = vrot.slane %v1828, 4
        %v1831 = vor.u32 %v1830, %v1826
        %v1832 = vrot.slane %v1831, 4
        %v1834 = vshll.u32 %v1726, 16
        %v1836 = vrot.slane %v1834, 5
        %v1837 = vsel %vm221, %v1832, %v1836
        %v1839 = vshrl.u32 %v1727, 16
        %v1841 = vrot.slane %v1839, 4
        %v1842 = vshll.u32 %v1727, 16
        %v1844 = vrot.slane %v1842, 5
        %v1845 = vor.u32 %v1841, %v1844
        %v1846 = vrot.slane %v1845, 4
        %v1848 = vshll.u32 %v1728, 16
        %v1850 = vrot.slane %v1848, 5
        %v1851 = vsel %vm221, %v1846, %v1850
        %v1852 = vshrl.u32 %v1728, 16
        %v1854 = vrot.slane %v1852, 4
        %v1855 = vor.u32 %v1854, %v1850
        %v1856 = vrot.slane %v1855, 4
        %v1858 = vshll.u32 %v1729, 16
        %v1860 = vrot.slane %v1858, 5
        %v1861 = vsel %vm221, %v1856, %v1860
        %v1863 = vshrl.u32 %v1730, 16
        %v1865 = vrot.slane %v1863, 4
        %v1866 = vshll.u32 %v1730, 16
        %v1868 = vrot.slane %v1866, 5
        %v1869 = vor.u32 %v1865, %v1868
        %v1870 = vrot.slane %v1869, 4
        %v1872 = vshll.u32 %v1731, 16
        %v1874 = vrot.slane %v1872, 5
        %v1875 = vsel %vm221, %v1870, %v1874
        %v1876 = vshrl.u32 %v1731, 16
        %v1878 = vrot.slane %v1876, 4
        %v1879 = vor.u32 %v1878, %v1874
        %v1880 = vrot.slane %v1879, 4
        %v1882 = vshll.u32 %v1732, 16
        %v1884 = vrot.slane %v1882, 5
        %v1885 = vsel %vm221, %v1880, %v1884
        %v1887 = vshrl.u32 %v1733, 16
        %v1889 = vrot.slane %v1887, 4
        %v1890 = vshll.u32 %v1733, 16
        %v1892 = vrot.slane %v1890, 5
        %v1893 = vor.u32 %v1889, %v1892
        %v1894 = vrot.slane %v1893, 4
        %v1896 = vshll.u32 %v1734, 16
        %v1898 = vrot.slane %v1896, 5
        %v1899 = vsel %vm221, %v1894, %v1898
        %v1900 = vshrl.u32 %v1734, 16
        %v1902 = vrot.slane %v1900, 4
        %v1903 = vor.u32 %v1902, %v1898
        %v1904 = vrot.slane %v1903, 4
        %v1906 = vshll.u32 %v1735, 16
        %v1908 = vrot.slane %v1906, 5
        %v1909 = vsel %vm221, %v1904, %v1908
        %v1911 = vshrl.u32 %v1736, 16
        %v1913 = vrot.slane %v1911, 4
        %v1914 = vshll.u32 %v1736, 16
        %v1916 = vrot.slane %v1914, 5
        %v1917 = vor.u32 %v1913, %v1916
        %v1918 = vrot.slane %v1917, 4
        %v1920 = vshll.u32 %v1737, 16
        %v1922 = vrot.slane %v1920, 5
        %v1923 = vsel %vm221, %v1918, %v1922
        %v1924 = vshrl.u32 %v1737, 16
        %v1926 = vrot.slane %v1924, 4
        %v1927 = vor.u32 %v1926, %v1922
        %v1928 = vrot.slane %v1927, 4
        %v1930 = vshll.u32 %v1738, 16
        %v1932 = vrot.slane %v1930, 5
        %v1933 = vsel %vm221, %v1928, %v1932
        %v1935 = vshrl.u32 %v1739, 16
        %v1937 = vrot.slane %v1935, 4
        %v1938 = vshll.u32 %v1739, 16
        %v1940 = vrot.slane %v1938, 5
        %v1941 = vor.u32 %v1937, %v1940
        %v1942 = vrot.slane %v1941, 4
        %v1944 = vshll.u32 %v1740, 16
        %v1946 = vrot.slane %v1944, 5
        %v1947 = vsel %vm221, %v1942, %v1946
        %v1948 = vshrl.u32 %v1740, 16
        %v1950 = vrot.slane %v1948, 4
        %v1951 = vor.u32 %v1950, %v1946
        %v1952 = vrot.slane %v1951, 4
        %v1954 = vshll.u32 %v1741, 16
        %v1956 = vrot.slane %v1954, 5
        %v1957 = vsel %vm221, %v1952, %v1956
        %v1959 = vshrl.u32 %v1742, 16
        %v1961 = vrot.slane %v1959, 4
        %v1962 = vshll.u32 %v1742, 16
        %v1964 = vrot.slane %v1962, 5
        %v1965 = vor.u32 %v1961, %v1964
        %v1966 = vrot.slane %v1965, 4
        %v1968 = vshll.u32 %v1743, 16
        %v1970 = vrot.slane %v1968, 5
        %v1971 = vsel %vm221, %v1966, %v1970
        %v1972 = vshrl.u32 %v1743, 16
        %v1974 = vrot.slane %v1972, 4
        %v1975 = vor.u32 %v1974, %v1970
        %v1976 = vrot.slane %v1975, 4
        %v1978 = vshll.u32 %v1744, 16
        %v1980 = vrot.slane %v1978, 5
        %v1981 = vsel %vm221, %v1976, %v1980
        %v1983 = vshrl.u32 %v1745, 16
        %v1985 = vrot.slane %v1983, 4
        %v1986 = vshll.u32 %v1745, 16
        %v1988 = vrot.slane %v1986, 5
        %v1989 = vor.u32 %v1985, %v1988
        %v1990 = vrot.slane %v1989, 4
        %v1992 = vshll.u32 %v1746, 16
        %v1994 = vrot.slane %v1992, 5
        %v1995 = vsel %vm221, %v1990, %v1994
        %v1996 = vshrl.u32 %v1746, 16
        %v1998 = vrot.slane %v1996, 4
        %v1999 = vor.u32 %v1998, %v1994
        %v2000 = vrot.slane %v1999, 4
        %v2002 = vshll.u32 %v1747, 16
        %v2004 = vrot.slane %v2002, 5
        %v2005 = vsel %vm221, %v2000, %v2004
        %v2007 = vshrl.u32 %v1748, 16
        %v2009 = vrot.slane %v2007, 4
        %v2010 = vshll.u32 %v1748, 16
        %v2012 = vrot.slane %v2010, 5
        %v2013 = vor.u32 %v2009, %v2012
        %v2014 = vrot.slane %v2013, 4
        %v2016 = vshll.u32 %v1749, 16
        %v2018 = vrot.slane %v2016, 5
        %v2019 = vsel %vm221, %v2014, %v2018
        %v2020 = vshrl.u32 %v1749, 16
        %v2022 = vrot.slane %v2020, 4
        %v2023 = vor.u32 %v2022, %v2018
        %v2024 = vrot.slane %v2023, 4
        %v2026 = vshll.u32 %v1750, 16
        %v2028 = vrot.slane %v2026, 5
        %v2029 = vsel %vm221, %v2024, %v2028
        %v2031 = vshrl.u32 %v1751, 16
        %v2033 = vrot.slane %v2031, 4
        %v2034 = vshll.u32 %v1751, 16
        %v2036 = vrot.slane %v2034, 5
        %v2037 = vor.u32 %v2033, %v2036
        %v2038 = vrot.slane %v2037, 4
        %v2040 = vshll.u32 %v1752, 16
        %v2042 = vrot.slane %v2040, 5
        %v2043 = vsel %vm221, %v2038, %v2042
        %v2044 = vshrl.u32 %v1752, 16
        %v2046 = vrot.slane %v2044, 4
        %v2047 = vor.u32 %v2046, %v2042
        %v2048 = vrot.slane %v2047, 4
        %v2050 = vshll.u32 %v1753, 16
        %v2052 = vrot.slane %v2050, 5
        %v2053 = vsel %vm221, %v2048, %v2052
        %v2055 = vshrl.u32 %v1754, 16
        %v2057 = vrot.slane %v2055, 4
        %v2058 = vshll.u32 %v1754, 16
        %v2060 = vrot.slane %v2058, 5
        %v2061 = vor.u32 %v2057, %v2060
        %v2062 = vrot.slane %v2061, 4
        %v2064 = vshll.u32 %v1755, 16
        %v2066 = vrot.slane %v2064, 5
        %v2067 = vsel %vm221, %v2062, %v2066
        %v2068 = vshrl.u32 %v1755, 16
        %v2070 = vrot.slane %v2068, 4
        %v2071 = vor.u32 %v2070, %v2066
        %v2072 = vrot.slane %v2071, 4
        %v2074 = vshll.u32 %v1756, 16
        %v2076 = vrot.slane %v2074, 5
        %v2077 = vsel %vm221, %v2072, %v2076
        %v2079 = vshrl.u32 %v1757, 16
        %v2081 = vrot.slane %v2079, 4
        %v2082 = vshll.u32 %v1757, 16
        %v2084 = vrot.slane %v2082, 5
        %v2085 = vor.u32 %v2081, %v2084
        %v2086 = vrot.slane %v2085, 4
        %v2088 = vshll.u32 %v1758, 16
        %v2090 = vrot.slane %v2088, 5
        %v2091 = vsel %vm221, %v2086, %v2090
        %v2092 = vshrl.u32 %v1758, 16
        %v2094 = vrot.slane %v2092, 4
        %v2095 = vor.u32 %v2094, %v2090
        %v2096 = vrot.slane %v2095, 4
        %v2098 = vshll.u32 %v1759, 16
        %v2100 = vrot.slane %v2098, 5
        %v2101 = vsel %vm221, %v2096, %v2100
        %v2103 = vshrl.u32 %v1760, 16
        %v2105 = vrot.slane %v2103, 4
        %v2106 = vshll.u32 %v1760, 16
        %v2108 = vrot.slane %v2106, 5
        %v2109 = vor.u32 %v2105, %v2108
        %v2110 = vrot.slane %v2109, 4
        %v2112 = vshll.u32 %v1761, 16
        %v2114 = vrot.slane %v2112, 5
        %v2115 = vsel %vm221, %v2110, %v2114
        %v2116 = vshrl.u32 %v1761, 16
        %v2118 = vrot.slane %v2116, 4
        %v2119 = vor.u32 %v2118, %v2114
        %v2120 = vrot.slane %v2119, 4
        %v2122 = vshll.u32 %v1762, 16
        %v2124 = vrot.slane %v2122, 5
        %v2125 = vsel %vm221, %v2120, %v2124
        %v2127 = vshrl.u32 %v1763, 16
        %v2129 = vrot.slane %v2127, 4
        %v2130 = vshll.u32 %v1763, 16
        %v2132 = vrot.slane %v2130, 5
        %v2133 = vor.u32 %v2129, %v2132
        %v2134 = vrot.slane %v2133, 4
        %v2136 = vshll.u32 %v1764, 16
        %v2138 = vrot.slane %v2136, 5
        %v2139 = vsel %vm221, %v2134, %v2138
        %v2140 = vshrl.u32 %v1764, 16
        %v2142 = vrot.slane %v2140, 4
        %v2143 = vor.u32 %v2142, %v2138
        %v2144 = vrot.slane %v2143, 4
        %v2146 = vshll.u32 %v1765, 16
        %v2148 = vrot.slane %v2146, 5
        %v2149 = vsel %vm221, %v2144, %v2148
        %v2150 = vld [vmem:[%s1 + $0x4] sm:$0xc]
        %v2151 = vunpack.c.l.b16 %v1779
        %v2152 = vunpack.c.l.b16 %v1789
        %v2153 = vunpack.c.l.b16 %v1803
        %v2154 = vunpack.c.l.b16 %v1813
        %v2155 = vunpack.c.l.b16 %v1827
        %v2156 = vunpack.c.l.b16 %v1837
        %v2157 = vunpack.c.l.b16 %v1851
        %v2158 = vunpack.c.l.b16 %v1861
        %v2159 = vunpack.c.l.b16 %v1875
        %v2160 = vunpack.c.l.b16 %v1885
        %v2161 = vunpack.c.l.b16 %v1899
        %v2162 = vunpack.c.l.b16 %v1909
        %v2163 = vunpack.c.l.b16 %v1923
        %v2164 = vunpack.c.l.b16 %v1933
        %v2165 = vunpack.c.l.b16 %v1947
        %v2166 = vunpack.c.l.b16 %v1957
        %v2167 = vunpack.c.l.b16 %v1971
        %v2168 = vunpack.c.l.b16 %v1981
        %v2169 = vunpack.c.l.b16 %v1995
        %v2170 = vunpack.c.l.b16 %v2005
        %v2171 = vunpack.c.l.b16 %v2019
        %v2172 = vunpack.c.l.b16 %v2029
        %v2173 = vunpack.c.l.b16 %v2043
        %v2174 = vunpack.c.l.b16 %v2053
        %v2175 = vunpack.c.l.b16 %v2067
        %v2176 = vunpack.c.l.b16 %v2077
        %v2177 = vunpack.c.l.b16 %v2091
        %v2178 = vunpack.c.l.b16 %v2101
        %v2179 = vunpack.c.l.b16 %v2115
        %v2180 = vunpack.c.l.b16 %v2125
        %v2181 = vunpack.c.l.b16 %v2139
        %v2182 = vunpack.c.l.b16 %v2149
        %v2183 = vpack.c.b16 %v2152, %v2151
        %v2184 = vpack.c.b16 %v2154, %v2153
        %v2185 = vpack.c.b16 %v2156, %v2155
        %v2186 = vpack.c.b16 %v2158, %v2157
        %v2187 = vpack.c.b16 %v2160, %v2159
        %v2188 = vpack.c.b16 %v2162, %v2161
        %v2189 = vpack.c.b16 %v2164, %v2163
        %v2190 = vpack.c.b16 %v2166, %v2165
        %v2191 = vpack.c.b16 %v2168, %v2167
        %v2192 = vpack.c.b16 %v2170, %v2169
        %v2193 = vpack.c.b16 %v2172, %v2171
        %v2194 = vpack.c.b16 %v2174, %v2173
        %v2195 = vpack.c.b16 %v2176, %v2175
        %v2196 = vpack.c.b16 %v2178, %v2177
        %v2197 = vpack.c.b16 %v2180, %v2179
        %v2198 = vpack.c.b16 %v2182, %v2181
        %v2200 = vunpack.c.l.b16 %v2150
        %v2201 = vpack.c.b16 %v2200, %v2200
        %v2202 = vrot.slane %v2201, 2
        %v2204 = vsel %vm666, %v2183, 0
        %v2207 = vsel %vm666, %v2184, 0
        %v2210 = vsel %vm666, %v2185, 0
        %v2213 = vsel %vm666, %v2186, 0
        %v2216 = vsel %vm666, %v2187, 0
        %v2219 = vsel %vm666, %v2188, 0
        %v2222 = vsel %vm666, %v2189, 0
        %v2225 = vsel %vm666, %v2190, 0
        %v2228 = vsel %vm666, %v2191, 0
        %v2231 = vsel %vm666, %v2192, 0
        %v2234 = vsel %vm666, %v2193, 0
        %v2237 = vsel %vm666, %v2194, 0
        %v2240 = vsel %vm666, %v2195, 0
        %v2243 = vsel %vm666, %v2196, 0
        %v2246 = vsel %vm666, %v2197, 0
        %v2249 = vsel %vm666, %v2198, 0
        %v2252 = vand.u32 %v2202, %v718
        %2254 = vmatpush.bf16.msra.mxu0 0
        %2255 = vmatpush.bf16.msra.mxu0 0
        %2256 = vmatpush.bf16.msra.mxu0 0
        %2257 = vmatpush.bf16.msra.mxu0 0
        %2258 = vmatpush.bf16.msra.mxu0 0
        %2259 = vmatpush.bf16.msra.mxu0 0
        %2260 = vmatpush.bf16.msra.mxu0 0
        %2261 = vmatpush.bf16.msra.mxu0 %v2252
        %2262 = vmatmul.bf16.gmra.mxu0 %v2204
        %v2263 = vpop.f32.mrf.mxu0
        %v2264 = vadd.f32 0.0, %v2263
        %v2265 = vpop.f32.mrf.mxu0
        %v2266 = vadd.f32 0.0, %v2265
        %2267 = vmatmul.bf16.gmra.mxu0 %v2207
        %v2268 = vpop.f32.mrf.mxu0
        %v2269 = vadd.f32 0.0, %v2268
        %v2270 = vpop.f32.mrf.mxu0
        %v2271 = vadd.f32 0.0, %v2270
        %2272 = vmatmul.bf16.gmra.mxu0 %v2210
        %v2273 = vpop.f32.mrf.mxu0
        %v2274 = vadd.f32 0.0, %v2273
        %v2275 = vpop.f32.mrf.mxu0
        %v2276 = vadd.f32 0.0, %v2275
        %2277 = vmatmul.bf16.gmra.mxu0 %v2213
        %v2278 = vpop.f32.mrf.mxu0
        %v2279 = vadd.f32 0.0, %v2278
        %v2280 = vpop.f32.mrf.mxu0
        %v2281 = vadd.f32 0.0, %v2280
        %2282 = vmatmul.bf16.gmra.mxu0 %v2216
        %v2283 = vpop.f32.mrf.mxu0
        %v2284 = vadd.f32 0.0, %v2283
        %v2285 = vpop.f32.mrf.mxu0
        %v2286 = vadd.f32 0.0, %v2285
        %2287 = vmatmul.bf16.gmra.mxu0 %v2219
        %v2288 = vpop.f32.mrf.mxu0
        %v2289 = vadd.f32 0.0, %v2288
        %v2290 = vpop.f32.mrf.mxu0
        %v2291 = vadd.f32 0.0, %v2290
        %2292 = vmatmul.bf16.gmra.mxu0 %v2222
        %v2293 = vpop.f32.mrf.mxu0
        %v2294 = vadd.f32 0.0, %v2293
        %v2295 = vpop.f32.mrf.mxu0
        %v2296 = vadd.f32 0.0, %v2295
        %2297 = vmatmul.bf16.gmra.mxu0 %v2225
        %v2298 = vpop.f32.mrf.mxu0
        %v2299 = vadd.f32 0.0, %v2298
        %v2300 = vpop.f32.mrf.mxu0
        %v2301 = vadd.f32 0.0, %v2300
        %2302 = vmatmul.bf16.gmra.mxu0 %v2228
        %v2303 = vpop.f32.mrf.mxu0
        %v2304 = vadd.f32 0.0, %v2303
        %v2305 = vpop.f32.mrf.mxu0
        %v2306 = vadd.f32 0.0, %v2305
        %2307 = vmatmul.bf16.gmra.mxu0 %v2231
        %v2308 = vpop.f32.mrf.mxu0
        %v2309 = vadd.f32 0.0, %v2308
        %v2310 = vpop.f32.mrf.mxu0
        %v2311 = vadd.f32 0.0, %v2310
        %2312 = vmatmul.bf16.gmra.mxu0 %v2234
        %v2313 = vpop.f32.mrf.mxu0
        %v2314 = vadd.f32 0.0, %v2313
        %v2315 = vpop.f32.mrf.mxu0
        %v2316 = vadd.f32 0.0, %v2315
        %2317 = vmatmul.bf16.gmra.mxu0 %v2237
        %v2318 = vpop.f32.mrf.mxu0
        %v2319 = vadd.f32 0.0, %v2318
        %v2320 = vpop.f32.mrf.mxu0
        %v2321 = vadd.f32 0.0, %v2320
        %2322 = vmatmul.bf16.gmra.mxu0 %v2240
        %v2323 = vpop.f32.mrf.mxu0
        %v2324 = vadd.f32 0.0, %v2323
        %v2325 = vpop.f32.mrf.mxu0
        %v2326 = vadd.f32 0.0, %v2325
        %2327 = vmatmul.bf16.gmra.mxu0 %v2243
        %v2328 = vpop.f32.mrf.mxu0
        %v2329 = vadd.f32 0.0, %v2328
        %v2330 = vpop.f32.mrf.mxu0
        %v2331 = vadd.f32 0.0, %v2330
        %2332 = vmatmul.bf16.gmra.mxu0 %v2246
        %v2333 = vpop.f32.mrf.mxu0
        %v2334 = vadd.f32 0.0, %v2333
        %v2335 = vpop.f32.mrf.mxu0
        %v2336 = vadd.f32 0.0, %v2335
        %2337 = vmatmul.bf16.gmra.mxu0 %v2249
        %v2338 = vpop.f32.mrf.mxu0
        %v2339 = vadd.f32 0.0, %v2338
        %v2340 = vpop.f32.mrf.mxu0
        %v2341 = vadd.f32 0.0, %v2340
        %2342 = vdwg.mxu0
        %v2343 = vadd.f32 %v1686, %v2264
        %v2344 = vadd.f32 %v1687, %v2266
        %v2345 = vadd.f32 %v1688, %v2269
        %v2346 = vadd.f32 %v1689, %v2271
        %v2347 = vadd.f32 %v1690, %v2274
        %v2348 = vadd.f32 %v1691, %v2276
        %v2349 = vadd.f32 %v1692, %v2279
        %v2350 = vadd.f32 %v1693, %v2281
        %v2351 = vadd.f32 %v1694, %v2284
        %v2352 = vadd.f32 %v1695, %v2286
        %v2353 = vadd.f32 %v1696, %v2289
        %v2354 = vadd.f32 %v1697, %v2291
        %v2355 = vadd.f32 %v1698, %v2294
        %v2356 = vadd.f32 %v1699, %v2296
        %v2357 = vadd.f32 %v1700, %v2299
        %v2358 = vadd.f32 %v1701, %v2301
        %v2359 = vadd.f32 %v1702, %v2304
        %v2360 = vadd.f32 %v1703, %v2306
        %v2361 = vadd.f32 %v1704, %v2309
        %v2362 = vadd.f32 %v1705, %v2311
        %v2363 = vadd.f32 %v1706, %v2314
        %v2364 = vadd.f32 %v1707, %v2316
        %v2365 = vadd.f32 %v1708, %v2319
        %v2366 = vadd.f32 %v1709, %v2321
        %v2367 = vadd.f32 %v1710, %v2324
        %v2368 = vadd.f32 %v1711, %v2326
        %v2369 = vadd.f32 %v1712, %v2329
        %v2370 = vadd.f32 %v1713, %v2331
        %v2371 = vadd.f32 %v1714, %v2334
        %v2372 = vadd.f32 %v1715, %v2336
        %v2373 = vadd.f32 %v1716, %v2339
        %v2374 = vadd.f32 %v1717, %v2341
        %v2375 = vld [vmem:[%s1422] sm:$0xe]
        %v2376 = vld [vmem:[%s1422 + $0xc] sm:$0xe]
        %v2377 = vld [vmem:[%s1422 + $0x18] sm:$0xe]
        %v2378 = vld [vmem:[%s1422 + $0x24] sm:$0xe]
        %v2379 = vld [vmem:[%s1422 + $0x30] sm:$0xe]
        %v2380 = vld [vmem:[%s1422 + $0x3c] sm:$0xe]
        %v2381 = vld [vmem:[%s1422 + $0x48] sm:$0xe]
        %v2382 = vld [vmem:[%s1422 + $0x54] sm:$0xe]
        %v2383 = vld [vmem:[%s1422 + $0x60] sm:$0xe]
        %v2384 = vld [vmem:[%s1422 + $0x6c] sm:$0xe]
        %v2385 = vld [vmem:[%s1422 + $0x78] sm:$0xe]
        %v2386 = vld [vmem:[%s1422 + $0x84] sm:$0xe]
        %v2387 = vld [vmem:[%s1422 + $0x90] sm:$0xe]
        %v2388 = vld [vmem:[%s1422 + $0x9c] sm:$0xe]
        %v2389 = vld [vmem:[%s1422 + $0xa8] sm:$0xe]
        %v2390 = vld [vmem:[%s1422 + $0xb4] sm:$0xe]
        %v2439 = vrot.slane %v2375, 5
        %v2440 = vrot.slane %v2439, 4
        %v2441 = vrot.slane %v1719, 5
        %v2442 = vsel %vm1081, %v2440, %v2441
        %v2443 = vrot.slane %v2441, 4
        %v2444 = vrot.slane %v1720, 5
        %v2445 = vsel %vm1081, %v2443, %v2444
        %v2446 = vrot.slane %v2376, 5
        %v2447 = vrot.slane %v2446, 4
        %v2448 = vrot.slane %v1722, 5
        %v2449 = vsel %vm1081, %v2447, %v2448
        %v2450 = vrot.slane %v2448, 4
        %v2451 = vrot.slane %v1723, 5
        %v2452 = vsel %vm1081, %v2450, %v2451
        %v2453 = vrot.slane %v2377, 5
        %v2454 = vrot.slane %v2453, 4
        %v2455 = vrot.slane %v1725, 5
        %v2456 = vsel %vm1081, %v2454, %v2455
        %v2457 = vrot.slane %v2455, 4
        %v2458 = vrot.slane %v1726, 5
        %v2459 = vsel %vm1081, %v2457, %v2458
        %v2460 = vrot.slane %v2378, 5
        %v2461 = vrot.slane %v2460, 4
        %v2462 = vrot.slane %v1728, 5
        %v2463 = vsel %vm1081, %v2461, %v2462
        %v2464 = vrot.slane %v2462, 4
        %v2465 = vrot.slane %v1729, 5
        %v2466 = vsel %vm1081, %v2464, %v2465
        %v2467 = vrot.slane %v2379, 5
        %v2468 = vrot.slane %v2467, 4
        %v2469 = vrot.slane %v1731, 5
        %v2470 = vsel %vm1081, %v2468, %v2469
        %v2471 = vrot.slane %v2469, 4
        %v2472 = vrot.slane %v1732, 5
        %v2473 = vsel %vm1081, %v2471, %v2472
        %v2474 = vrot.slane %v2380, 5
        %v2475 = vrot.slane %v2474, 4
        %v2476 = vrot.slane %v1734, 5
        %v2477 = vsel %vm1081, %v2475, %v2476
        %v2478 = vrot.slane %v2476, 4
        %v2479 = vrot.slane %v1735, 5
        %v2480 = vsel %vm1081, %v2478, %v2479
        %v2481 = vrot.slane %v2381, 5
        %v2482 = vrot.slane %v2481, 4
        %v2483 = vrot.slane %v1737, 5
        %v2484 = vsel %vm1081, %v2482, %v2483
        %v2485 = vrot.slane %v2483, 4
        %v2486 = vrot.slane %v1738, 5
        %v2487 = vsel %vm1081, %v2485, %v2486
        %v2488 = vrot.slane %v2382, 5
        %v2489 = vrot.slane %v2488, 4
        %v2490 = vrot.slane %v1740, 5
        %v2491 = vsel %vm1081, %v2489, %v2490
        %v2492 = vrot.slane %v2490, 4
        %v2493 = vrot.slane %v1741, 5
        %v2494 = vsel %vm1081, %v2492, %v2493
        %v2495 = vrot.slane %v2383, 5
        %v2496 = vrot.slane %v2495, 4
        %v2497 = vrot.slane %v1743, 5
        %v2498 = vsel %vm1081, %v2496, %v2497
        %v2499 = vrot.slane %v2497, 4
        %v2500 = vrot.slane %v1744, 5
        %v2501 = vsel %vm1081, %v2499, %v2500
        %v2502 = vrot.slane %v2384, 5
        %v2503 = vrot.slane %v2502, 4
        %v2504 = vrot.slane %v1746, 5
        %v2505 = vsel %vm1081, %v2503, %v2504
        %v2506 = vrot.slane %v2504, 4
        %v2507 = vrot.slane %v1747, 5
        %v2508 = vsel %vm1081, %v2506, %v2507
        %v2509 = vrot.slane %v2385, 5
        %v2510 = vrot.slane %v2509, 4
        %v2511 = vrot.slane %v1749, 5
        %v2512 = vsel %vm1081, %v2510, %v2511
        %v2513 = vrot.slane %v2511, 4
        %v2514 = vrot.slane %v1750, 5
        %v2515 = vsel %vm1081, %v2513, %v2514
        %v2516 = vrot.slane %v2386, 5
        %v2517 = vrot.slane %v2516, 4
        %v2518 = vrot.slane %v1752, 5
        %v2519 = vsel %vm1081, %v2517, %v2518
        %v2520 = vrot.slane %v2518, 4
        %v2521 = vrot.slane %v1753, 5
        %v2522 = vsel %vm1081, %v2520, %v2521
        %v2523 = vrot.slane %v2387, 5
        %v2524 = vrot.slane %v2523, 4
        %v2525 = vrot.slane %v1755, 5
        %v2526 = vsel %vm1081, %v2524, %v2525
        %v2527 = vrot.slane %v2525, 4
        %v2528 = vrot.slane %v1756, 5
        %v2529 = vsel %vm1081, %v2527, %v2528
        %v2530 = vrot.slane %v2388, 5
        %v2531 = vrot.slane %v2530, 4
        %v2532 = vrot.slane %v1758, 5
        %v2533 = vsel %vm1081, %v2531, %v2532
        %v2534 = vrot.slane %v2532, 4
        %v2535 = vrot.slane %v1759, 5
        %v2536 = vsel %vm1081, %v2534, %v2535
        %v2537 = vrot.slane %v2389, 5
        %v2538 = vrot.slane %v2537, 4
        %v2539 = vrot.slane %v1761, 5
        %v2540 = vsel %vm1081, %v2538, %v2539
        %v2541 = vrot.slane %v2539, 4
        %v2542 = vrot.slane %v1762, 5
        %v2543 = vsel %vm1081, %v2541, %v2542
        %v2544 = vrot.slane %v2390, 5
        %v2545 = vrot.slane %v2544, 4
        %v2546 = vrot.slane %v1764, 5
        %v2547 = vsel %vm1081, %v2545, %v2546
        %v2548 = vrot.slane %v2546, 4
        %v2549 = vrot.slane %v1765, 5
        %v2550 = vsel %vm1081, %v2548, %v2549
        %v2551 = vld [vmem:[%s1 + $0x4] sm:$0x8]
        %v2552 = vld [vmem:[%s1 + $0x8] sm:$0x1]
        %v2553 = vunpack.c.l.b16 %v2442
        %v2554 = vunpack.c.l.b16 %v2445
        %v2555 = vunpack.c.l.b16 %v2449
        %v2556 = vunpack.c.l.b16 %v2452
        %v2557 = vunpack.c.l.b16 %v2456
        %v2558 = vunpack.c.l.b16 %v2459
        %v2559 = vunpack.c.l.b16 %v2463
        %v2560 = vunpack.c.l.b16 %v2466
        %v2561 = vunpack.c.l.b16 %v2470
        %v2562 = vunpack.c.l.b16 %v2473
        %v2563 = vunpack.c.l.b16 %v2477
        %v2564 = vunpack.c.l.b16 %v2480
        %v2565 = vunpack.c.l.b16 %v2484
        %v2566 = vunpack.c.l.b16 %v2487
        %v2567 = vunpack.c.l.b16 %v2491
        %v2568 = vunpack.c.l.b16 %v2494
        %v2569 = vunpack.c.l.b16 %v2498
        %v2570 = vunpack.c.l.b16 %v2501
        %v2571 = vunpack.c.l.b16 %v2505
        %v2572 = vunpack.c.l.b16 %v2508
        %v2573 = vunpack.c.l.b16 %v2512
        %v2574 = vunpack.c.l.b16 %v2515
        %v2575 = vunpack.c.l.b16 %v2519
        %v2576 = vunpack.c.l.b16 %v2522
        %v2577 = vunpack.c.l.b16 %v2526
        %v2578 = vunpack.c.l.b16 %v2529
        %v2579 = vunpack.c.l.b16 %v2533
        %v2580 = vunpack.c.l.b16 %v2536
        %v2581 = vunpack.c.l.b16 %v2540
        %v2582 = vunpack.c.l.b16 %v2543
        %v2583 = vunpack.c.l.b16 %v2547
        %v2584 = vunpack.c.l.b16 %v2550
        %v2585 = vpack.c.b16 %v2554, %v2553
        %v2586 = vpack.c.b16 %v2556, %v2555
        %v2587 = vpack.c.b16 %v2558, %v2557
        %v2588 = vpack.c.b16 %v2560, %v2559
        %v2589 = vpack.c.b16 %v2562, %v2561
        %v2590 = vpack.c.b16 %v2564, %v2563
        %v2591 = vpack.c.b16 %v2566, %v2565
        %v2592 = vpack.c.b16 %v2568, %v2567
        %v2593 = vpack.c.b16 %v2570, %v2569
        %v2594 = vpack.c.b16 %v2572, %v2571
        %v2595 = vpack.c.b16 %v2574, %v2573
        %v2596 = vpack.c.b16 %v2576, %v2575
        %v2597 = vpack.c.b16 %v2578, %v2577
        %v2598 = vpack.c.b16 %v2580, %v2579
        %v2599 = vpack.c.b16 %v2582, %v2581
        %v2600 = vpack.c.b16 %v2584, %v2583
        %v2603 = vunpack.c.l.b16 %v2551
        %v2604 = vunpack.c.l.b16 %v2552
        %v2605 = vpack.c.b16 %v2604, %v2603
        %v2607 = vshrl.u32 %v2605, 16
        %v2609 = vrot.slane %v2607, 3
        %v2610 = vshll.u32 %v2605, 16
        %v2612 = vrot.slane %v2610, 4
        %v2613 = vor.u32 %v2609, %v2612
        %v2615 = vsel %vm666, %v2585, 0
        %v2618 = vsel %vm666, %v2586, 0
        %v2621 = vsel %vm666, %v2587, 0
        %v2624 = vsel %vm666, %v2588, 0
        %v2627 = vsel %vm666, %v2589, 0
        %v2630 = vsel %vm666, %v2590, 0
        %v2633 = vsel %vm666, %v2591, 0
        %v2636 = vsel %vm666, %v2592, 0
        %v2639 = vsel %vm666, %v2593, 0
        %v2642 = vsel %vm666, %v2594, 0
        %v2645 = vsel %vm666, %v2595, 0
        %v2648 = vsel %vm666, %v2596, 0
        %v2651 = vsel %vm666, %v2597, 0
        %v2654 = vsel %vm666, %v2598, 0
        %v2657 = vsel %vm666, %v2599, 0
        %v2660 = vsel %vm666, %v2600, 0
        %v2663 = vand.u32 %v2613, %v718
        %2665 = vmatpush.bf16.msra.mxu0 0
        %2666 = vmatpush.bf16.msra.mxu0 0
        %2667 = vmatpush.bf16.msra.mxu0 0
        %2668 = vmatpush.bf16.msra.mxu0 0
        %2669 = vmatpush.bf16.msra.mxu0 0
        %2670 = vmatpush.bf16.msra.mxu0 0
        %2671 = vmatpush.bf16.msra.mxu0 0
        %2672 = vmatpush.bf16.msra.mxu0 %v2663
        %2673 = vmatmul.bf16.gmra.mxu0 %v2615
        %v2674 = vpop.f32.mrf.mxu0
        %v2675 = vadd.f32 0.0, %v2674
        %v2676 = vpop.f32.mrf.mxu0
        %v2677 = vadd.f32 0.0, %v2676
        %2678 = vmatmul.bf16.gmra.mxu0 %v2618
        %v2679 = vpop.f32.mrf.mxu0
        %v2680 = vadd.f32 0.0, %v2679
        %v2681 = vpop.f32.mrf.mxu0
        %v2682 = vadd.f32 0.0, %v2681
        %2683 = vmatmul.bf16.gmra.mxu0 %v2621
        %v2684 = vpop.f32.mrf.mxu0
        %v2685 = vadd.f32 0.0, %v2684
        %v2686 = vpop.f32.mrf.mxu0
        %v2687 = vadd.f32 0.0, %v2686
        %2688 = vmatmul.bf16.gmra.mxu0 %v2624
        %v2689 = vpop.f32.mrf.mxu0
        %v2690 = vadd.f32 0.0, %v2689
        %v2691 = vpop.f32.mrf.mxu0
        %v2692 = vadd.f32 0.0, %v2691
        %2693 = vmatmul.bf16.gmra.mxu0 %v2627
        %v2694 = vpop.f32.mrf.mxu0
        %v2695 = vadd.f32 0.0, %v2694
        %v2696 = vpop.f32.mrf.mxu0
        %v2697 = vadd.f32 0.0, %v2696
        %2698 = vmatmul.bf16.gmra.mxu0 %v2630
        %v2699 = vpop.f32.mrf.mxu0
        %v2700 = vadd.f32 0.0, %v2699
        %v2701 = vpop.f32.mrf.mxu0
        %v2702 = vadd.f32 0.0, %v2701
        %2703 = vmatmul.bf16.gmra.mxu0 %v2633
        %v2704 = vpop.f32.mrf.mxu0
        %v2705 = vadd.f32 0.0, %v2704
        %v2706 = vpop.f32.mrf.mxu0
        %v2707 = vadd.f32 0.0, %v2706
        %2708 = vmatmul.bf16.gmra.mxu0 %v2636
        %v2709 = vpop.f32.mrf.mxu0
        %v2710 = vadd.f32 0.0, %v2709
        %v2711 = vpop.f32.mrf.mxu0
        %v2712 = vadd.f32 0.0, %v2711
        %2713 = vmatmul.bf16.gmra.mxu0 %v2639
        %v2714 = vpop.f32.mrf.mxu0
        %v2715 = vadd.f32 0.0, %v2714
        %v2716 = vpop.f32.mrf.mxu0
        %v2717 = vadd.f32 0.0, %v2716
        %2718 = vmatmul.bf16.gmra.mxu0 %v2642
        %v2719 = vpop.f32.mrf.mxu0
        %v2720 = vadd.f32 0.0, %v2719
        %v2721 = vpop.f32.mrf.mxu0
        %v2722 = vadd.f32 0.0, %v2721
        %2723 = vmatmul.bf16.gmra.mxu0 %v2645
        %v2724 = vpop.f32.mrf.mxu0
        %v2725 = vadd.f32 0.0, %v2724
        %v2726 = vpop.f32.mrf.mxu0
        %v2727 = vadd.f32 0.0, %v2726
        %2728 = vmatmul.bf16.gmra.mxu0 %v2648
        %v2729 = vpop.f32.mrf.mxu0
        %v2730 = vadd.f32 0.0, %v2729
        %v2731 = vpop.f32.mrf.mxu0
        %v2732 = vadd.f32 0.0, %v2731
        %2733 = vmatmul.bf16.gmra.mxu0 %v2651
        %v2734 = vpop.f32.mrf.mxu0
        %v2735 = vadd.f32 0.0, %v2734
        %v2736 = vpop.f32.mrf.mxu0
        %v2737 = vadd.f32 0.0, %v2736
        %2738 = vmatmul.bf16.gmra.mxu0 %v2654
        %v2739 = vpop.f32.mrf.mxu0
        %v2740 = vadd.f32 0.0, %v2739
        %v2741 = vpop.f32.mrf.mxu0
        %v2742 = vadd.f32 0.0, %v2741
        %2743 = vmatmul.bf16.gmra.mxu0 %v2657
        %v2744 = vpop.f32.mrf.mxu0
        %v2745 = vadd.f32 0.0, %v2744
        %v2746 = vpop.f32.mrf.mxu0
        %v2747 = vadd.f32 0.0, %v2746
        %2748 = vmatmul.bf16.gmra.mxu0 %v2660
        %v2749 = vpop.f32.mrf.mxu0
        %v2750 = vadd.f32 0.0, %v2749
        %v2751 = vpop.f32.mrf.mxu0
        %v2752 = vadd.f32 0.0, %v2751
        %2753 = vdwg.mxu0
        %v2754 = vadd.f32 %v2343, %v2675
        %v2755 = vadd.f32 %v2344, %v2677
        %v2756 = vadd.f32 %v2345, %v2680
        %v2757 = vadd.f32 %v2346, %v2682
        %v2758 = vadd.f32 %v2347, %v2685
        %v2759 = vadd.f32 %v2348, %v2687
        %v2760 = vadd.f32 %v2349, %v2690
        %v2761 = vadd.f32 %v2350, %v2692
        %v2762 = vadd.f32 %v2351, %v2695
        %v2763 = vadd.f32 %v2352, %v2697
        %v2764 = vadd.f32 %v2353, %v2700
        %v2765 = vadd.f32 %v2354, %v2702
        %v2766 = vadd.f32 %v2355, %v2705
        %v2767 = vadd.f32 %v2356, %v2707
        %v2768 = vadd.f32 %v2357, %v2710
        %v2769 = vadd.f32 %v2358, %v2712
        %v2770 = vadd.f32 %v2359, %v2715
        %v2771 = vadd.f32 %v2360, %v2717
        %v2772 = vadd.f32 %v2361, %v2720
        %v2773 = vadd.f32 %v2362, %v2722
        %v2774 = vadd.f32 %v2363, %v2725
        %v2775 = vadd.f32 %v2364, %v2727
        %v2776 = vadd.f32 %v2365, %v2730
        %v2777 = vadd.f32 %v2366, %v2732
        %v2778 = vadd.f32 %v2367, %v2735
        %v2779 = vadd.f32 %v2368, %v2737
        %v2780 = vadd.f32 %v2369, %v2740
        %v2781 = vadd.f32 %v2370, %v2742
        %v2782 = vadd.f32 %v2371, %v2745
        %v2783 = vadd.f32 %v2372, %v2747
        %v2784 = vadd.f32 %v2373, %v2750
        %v2785 = vadd.f32 %v2374, %v2752
        %s2786 = scalar_lea.vmem %s168, 24
        %v2787 = vld [vmem:[%s2786] sm:$0xf]
        %v2788 = vld [vmem:[%s2786 + $0x4] sm:$0xf]
        %v2789 = vld [vmem:[%s2786 + $0xc] sm:$0xf]
        %v2790 = vld [vmem:[%s2786 + $0x10] sm:$0xf]
        %v2791 = vld [vmem:[%s2786 + $0x18] sm:$0xf]
        %v2792 = vld [vmem:[%s2786 + $0x1c] sm:$0xf]
        %v2793 = vld [vmem:[%s2786 + $0x24] sm:$0xf]
        %v2794 = vld [vmem:[%s2786 + $0x28] sm:$0xf]
        %v2795 = vld [vmem:[%s2786 + $0x30] sm:$0xf]
        %v2796 = vld [vmem:[%s2786 + $0x34] sm:$0xf]
        %v2797 = vld [vmem:[%s2786 + $0x3c] sm:$0xf]
        %v2798 = vld [vmem:[%s2786 + $0x40] sm:$0xf]
        %v2799 = vld [vmem:[%s2786 + $0x48] sm:$0xf]
        %v2800 = vld [vmem:[%s2786 + $0x4c] sm:$0xf]
        %v2801 = vld [vmem:[%s2786 + $0x54] sm:$0xf]
        %v2802 = vld [vmem:[%s2786 + $0x58] sm:$0xf]
        %v2803 = vld [vmem:[%s2786 + $0x60] sm:$0xf]
        %v2804 = vld [vmem:[%s2786 + $0x64] sm:$0xf]
        %v2805 = vld [vmem:[%s2786 + $0x6c] sm:$0xf]
        %v2806 = vld [vmem:[%s2786 + $0x70] sm:$0xf]
        %v2807 = vld [vmem:[%s2786 + $0x78] sm:$0xf]
        %v2808 = vld [vmem:[%s2786 + $0x7c] sm:$0xf]
        %v2809 = vld [vmem:[%s2786 + $0x84] sm:$0xf]
        %v2810 = vld [vmem:[%s2786 + $0x88] sm:$0xf]
        %v2811 = vld [vmem:[%s2786 + $0x90] sm:$0xf]
        %v2812 = vld [vmem:[%s2786 + $0x94] sm:$0xf]
        %v2813 = vld [vmem:[%s2786 + $0x9c] sm:$0xf]
        %v2814 = vld [vmem:[%s2786 + $0xa0] sm:$0xf]
        %v2815 = vld [vmem:[%s2786 + $0xa8] sm:$0xf]
        %v2816 = vld [vmem:[%s2786 + $0xac] sm:$0xf]
        %v2817 = vld [vmem:[%s2786 + $0xb4] sm:$0xf]
        %v2818 = vld [vmem:[%s2786 + $0xb8] sm:$0xf]
        %v2819 = vld [vmem:[%s1 + $0x8] sm:$0x6]
        %v2852 = vunpack.c.l.b16 %v2787
        %v2853 = vunpack.c.l.b16 %v2788
        %v2854 = vunpack.c.l.b16 %v2789
        %v2855 = vunpack.c.l.b16 %v2790
        %v2856 = vunpack.c.l.b16 %v2791
        %v2857 = vunpack.c.l.b16 %v2792
        %v2858 = vunpack.c.l.b16 %v2793
        %v2859 = vunpack.c.l.b16 %v2794
        %v2860 = vunpack.c.l.b16 %v2795
        %v2861 = vunpack.c.l.b16 %v2796
        %v2862 = vunpack.c.l.b16 %v2797
        %v2863 = vunpack.c.l.b16 %v2798
        %v2864 = vunpack.c.l.b16 %v2799
        %v2865 = vunpack.c.l.b16 %v2800
        %v2866 = vunpack.c.l.b16 %v2801
        %v2867 = vunpack.c.l.b16 %v2802
        %v2868 = vunpack.c.l.b16 %v2803
        %v2869 = vunpack.c.l.b16 %v2804
        %v2870 = vunpack.c.l.b16 %v2805
        %v2871 = vunpack.c.l.b16 %v2806
        %v2872 = vunpack.c.l.b16 %v2807
        %v2873 = vunpack.c.l.b16 %v2808
        %v2874 = vunpack.c.l.b16 %v2809
        %v2875 = vunpack.c.l.b16 %v2810
        %v2876 = vunpack.c.l.b16 %v2811
        %v2877 = vunpack.c.l.b16 %v2812
        %v2878 = vunpack.c.l.b16 %v2813
        %v2879 = vunpack.c.l.b16 %v2814
        %v2880 = vunpack.c.l.b16 %v2815
        %v2881 = vunpack.c.l.b16 %v2816
        %v2882 = vunpack.c.l.b16 %v2817
        %v2883 = vunpack.c.l.b16 %v2818
        %v2884 = vpack.c.b16 %v2853, %v2852
        %v2885 = vpack.c.b16 %v2855, %v2854
        %v2886 = vpack.c.b16 %v2857, %v2856
        %v2887 = vpack.c.b16 %v2859, %v2858
        %v2888 = vpack.c.b16 %v2861, %v2860
        %v2889 = vpack.c.b16 %v2863, %v2862
        %v2890 = vpack.c.b16 %v2865, %v2864
        %v2891 = vpack.c.b16 %v2867, %v2866
        %v2892 = vpack.c.b16 %v2869, %v2868
        %v2893 = vpack.c.b16 %v2871, %v2870
        %v2894 = vpack.c.b16 %v2873, %v2872
        %v2895 = vpack.c.b16 %v2875, %v2874
        %v2896 = vpack.c.b16 %v2877, %v2876
        %v2897 = vpack.c.b16 %v2879, %v2878
        %v2898 = vpack.c.b16 %v2881, %v2880
        %v2899 = vpack.c.b16 %v2883, %v2882
        %v2901 = vunpack.c.l.b16 %v2819
        %v2902 = vpack.c.b16 %v2901, %v2901
        %v2903 = vrot.slane %v2902, 1
        %v2905 = vsel %vm666, %v2884, 0
        %v2908 = vsel %vm666, %v2885, 0
        %v2911 = vsel %vm666, %v2886, 0
        %v2914 = vsel %vm666, %v2887, 0
        %v2917 = vsel %vm666, %v2888, 0
        %v2920 = vsel %vm666, %v2889, 0
        %v2923 = vsel %vm666, %v2890, 0
        %v2926 = vsel %vm666, %v2891, 0
        %v2929 = vsel %vm666, %v2892, 0
        %v2932 = vsel %vm666, %v2893, 0
        %v2935 = vsel %vm666, %v2894, 0
        %v2938 = vsel %vm666, %v2895, 0
        %v2941 = vsel %vm666, %v2896, 0
        %v2944 = vsel %vm666, %v2897, 0
        %v2947 = vsel %vm666, %v2898, 0
        %v2950 = vsel %vm666, %v2899, 0
        %v2953 = vand.u32 %v2903, %v718
        %2955 = vmatpush.bf16.msra.mxu0 0
        %2956 = vmatpush.bf16.msra.mxu0 0
        %2957 = vmatpush.bf16.msra.mxu0 0
        %2958 = vmatpush.bf16.msra.mxu0 0
        %2959 = vmatpush.bf16.msra.mxu0 0
        %2960 = vmatpush.bf16.msra.mxu0 0
        %2961 = vmatpush.bf16.msra.mxu0 0
        %2962 = vmatpush.bf16.msra.mxu0 %v2953
        %2963 = vmatmul.bf16.gmra.mxu0 %v2905
        %v2964 = vpop.f32.mrf.mxu0
        %v2965 = vadd.f32 0.0, %v2964
        %v2966 = vpop.f32.mrf.mxu0
        %v2967 = vadd.f32 0.0, %v2966
        %2968 = vmatmul.bf16.gmra.mxu0 %v2908
        %v2969 = vpop.f32.mrf.mxu0
        %v2970 = vadd.f32 0.0, %v2969
        %v2971 = vpop.f32.mrf.mxu0
        %v2972 = vadd.f32 0.0, %v2971
        %2973 = vmatmul.bf16.gmra.mxu0 %v2911
        %v2974 = vpop.f32.mrf.mxu0
        %v2975 = vadd.f32 0.0, %v2974
        %v2976 = vpop.f32.mrf.mxu0
        %v2977 = vadd.f32 0.0, %v2976
        %2978 = vmatmul.bf16.gmra.mxu0 %v2914
        %v2979 = vpop.f32.mrf.mxu0
        %v2980 = vadd.f32 0.0, %v2979
        %v2981 = vpop.f32.mrf.mxu0
        %v2982 = vadd.f32 0.0, %v2981
        %2983 = vmatmul.bf16.gmra.mxu0 %v2917
        %v2984 = vpop.f32.mrf.mxu0
        %v2985 = vadd.f32 0.0, %v2984
        %v2986 = vpop.f32.mrf.mxu0
        %v2987 = vadd.f32 0.0, %v2986
        %2988 = vmatmul.bf16.gmra.mxu0 %v2920
        %v2989 = vpop.f32.mrf.mxu0
        %v2990 = vadd.f32 0.0, %v2989
        %v2991 = vpop.f32.mrf.mxu0
        %v2992 = vadd.f32 0.0, %v2991
        %2993 = vmatmul.bf16.gmra.mxu0 %v2923
        %v2994 = vpop.f32.mrf.mxu0
        %v2995 = vadd.f32 0.0, %v2994
        %v2996 = vpop.f32.mrf.mxu0
        %v2997 = vadd.f32 0.0, %v2996
        %2998 = vmatmul.bf16.gmra.mxu0 %v2926
        %v2999 = vpop.f32.mrf.mxu0
        %v3000 = vadd.f32 0.0, %v2999
        %v3001 = vpop.f32.mrf.mxu0
        %v3002 = vadd.f32 0.0, %v3001
        %3003 = vmatmul.bf16.gmra.mxu0 %v2929
        %v3004 = vpop.f32.mrf.mxu0
        %v3005 = vadd.f32 0.0, %v3004
        %v3006 = vpop.f32.mrf.mxu0
        %v3007 = vadd.f32 0.0, %v3006
        %3008 = vmatmul.bf16.gmra.mxu0 %v2932
        %v3009 = vpop.f32.mrf.mxu0
        %v3010 = vadd.f32 0.0, %v3009
        %v3011 = vpop.f32.mrf.mxu0
        %v3012 = vadd.f32 0.0, %v3011
        %3013 = vmatmul.bf16.gmra.mxu0 %v2935
        %v3014 = vpop.f32.mrf.mxu0
        %v3015 = vadd.f32 0.0, %v3014
        %v3016 = vpop.f32.mrf.mxu0
        %v3017 = vadd.f32 0.0, %v3016
        %3018 = vmatmul.bf16.gmra.mxu0 %v2938
        %v3019 = vpop.f32.mrf.mxu0
        %v3020 = vadd.f32 0.0, %v3019
        %v3021 = vpop.f32.mrf.mxu0
        %v3022 = vadd.f32 0.0, %v3021
        %3023 = vmatmul.bf16.gmra.mxu0 %v2941
        %v3024 = vpop.f32.mrf.mxu0
        %v3025 = vadd.f32 0.0, %v3024
        %v3026 = vpop.f32.mrf.mxu0
        %v3027 = vadd.f32 0.0, %v3026
        %3028 = vmatmul.bf16.gmra.mxu0 %v2944
        %v3029 = vpop.f32.mrf.mxu0
        %v3030 = vadd.f32 0.0, %v3029
        %v3031 = vpop.f32.mrf.mxu0
        %v3032 = vadd.f32 0.0, %v3031
        %3033 = vmatmul.bf16.gmra.mxu0 %v2947
        %v3034 = vpop.f32.mrf.mxu0
        %v3035 = vadd.f32 0.0, %v3034
        %v3036 = vpop.f32.mrf.mxu0
        %v3037 = vadd.f32 0.0, %v3036
        %3038 = vmatmul.bf16.gmra.mxu0 %v2950
        %v3039 = vpop.f32.mrf.mxu0
        %v3040 = vadd.f32 0.0, %v3039
        %v3041 = vpop.f32.mrf.mxu0
        %v3042 = vadd.f32 0.0, %v3041
        %3043 = vdwg.mxu0
        %v3044 = vadd.f32 %v2754, %v2965
        %v3045 = vadd.f32 %v2755, %v2967
        %v3046 = vadd.f32 %v2756, %v2970
        %v3047 = vadd.f32 %v2757, %v2972
        %v3048 = vadd.f32 %v2758, %v2975
        %v3049 = vadd.f32 %v2759, %v2977
        %v3050 = vadd.f32 %v2760, %v2980
        %v3051 = vadd.f32 %v2761, %v2982
        %v3052 = vadd.f32 %v2762, %v2985
        %v3053 = vadd.f32 %v2763, %v2987
        %v3054 = vadd.f32 %v2764, %v2990
        %v3055 = vadd.f32 %v2765, %v2992
        %v3056 = vadd.f32 %v2766, %v2995
        %v3057 = vadd.f32 %v2767, %v2997
        %v3058 = vadd.f32 %v2768, %v3000
        %v3059 = vadd.f32 %v2769, %v3002
        %v3060 = vadd.f32 %v2770, %v3005
        %v3061 = vadd.f32 %v2771, %v3007
        %v3062 = vadd.f32 %v2772, %v3010
        %v3063 = vadd.f32 %v2773, %v3012
        %v3064 = vadd.f32 %v2774, %v3015
        %v3065 = vadd.f32 %v2775, %v3017
        %v3066 = vadd.f32 %v2776, %v3020
        %v3067 = vadd.f32 %v2777, %v3022
        %v3068 = vadd.f32 %v2778, %v3025
        %v3069 = vadd.f32 %v2779, %v3027
        %v3070 = vadd.f32 %v2780, %v3030
        %v3071 = vadd.f32 %v2781, %v3032
        %v3072 = vadd.f32 %v2782, %v3035
        %v3073 = vadd.f32 %v2783, %v3037
        %v3074 = vadd.f32 %v2784, %v3040
        %v3075 = vadd.f32 %v2785, %v3042
        %v3076 = vld [vmem:[%s2786] sm:$0xf]
        %v3077 = vld [vmem:[%s2786 + $0x4] sm:$0xf]
        %v3078 = vld [vmem:[%s2786 + $0x8] sm:$0x1]
        %v3079 = vld [vmem:[%s2786 + $0xc] sm:$0xf]
        %v3080 = vld [vmem:[%s2786 + $0x10] sm:$0xf]
        %v3081 = vld [vmem:[%s2786 + $0x14] sm:$0x1]
        %v3082 = vld [vmem:[%s2786 + $0x18] sm:$0xf]
        %v3083 = vld [vmem:[%s2786 + $0x1c] sm:$0xf]
        %v3084 = vld [vmem:[%s2786 + $0x20] sm:$0x1]
        %v3085 = vld [vmem:[%s2786 + $0x24] sm:$0xf]
        %v3086 = vld [vmem:[%s2786 + $0x28] sm:$0xf]
        %v3087 = vld [vmem:[%s2786 + $0x2c] sm:$0x1]
        %v3088 = vld [vmem:[%s2786 + $0x30] sm:$0xf]
        %v3089 = vld [vmem:[%s2786 + $0x34] sm:$0xf]
        %v3090 = vld [vmem:[%s2786 + $0x38] sm:$0x1]
        %v3091 = vld [vmem:[%s2786 + $0x3c] sm:$0xf]
        %v3092 = vld [vmem:[%s2786 + $0x40] sm:$0xf]
        %v3093 = vld [vmem:[%s2786 + $0x44] sm:$0x1]
        %v3094 = vld [vmem:[%s2786 + $0x48] sm:$0xf]
        %v3095 = vld [vmem:[%s2786 + $0x4c] sm:$0xf]
        %v3096 = vld [vmem:[%s2786 + $0x50] sm:$0x1]
        %v3097 = vld [vmem:[%s2786 + $0x54] sm:$0xf]
        %v3098 = vld [vmem:[%s2786 + $0x58] sm:$0xf]
        %v3099 = vld [vmem:[%s2786 + $0x5c] sm:$0x1]
        %v3100 = vld [vmem:[%s2786 + $0x60] sm:$0xf]
        %v3101 = vld [vmem:[%s2786 + $0x64] sm:$0xf]
        %v3102 = vld [vmem:[%s2786 + $0x68] sm:$0x1]
        %v3103 = vld [vmem:[%s2786 + $0x6c] sm:$0xf]
        %v3104 = vld [vmem:[%s2786 + $0x70] sm:$0xf]
        %v3105 = vld [vmem:[%s2786 + $0x74] sm:$0x1]
        %v3106 = vld [vmem:[%s2786 + $0x78] sm:$0xf]
        %v3107 = vld [vmem:[%s2786 + $0x7c] sm:$0xf]
        %v3108 = vld [vmem:[%s2786 + $0x80] sm:$0x1]
        %v3109 = vld [vmem:[%s2786 + $0x84] sm:$0xf]
        %v3110 = vld [vmem:[%s2786 + $0x88] sm:$0xf]
        %v3111 = vld [vmem:[%s2786 + $0x8c] sm:$0x1]
        %v3112 = vld [vmem:[%s2786 + $0x90] sm:$0xf]
        %v3113 = vld [vmem:[%s2786 + $0x94] sm:$0xf]
        %v3114 = vld [vmem:[%s2786 + $0x98] sm:$0x1]
        %v3115 = vld [vmem:[%s2786 + $0x9c] sm:$0xf]
        %v3116 = vld [vmem:[%s2786 + $0xa0] sm:$0xf]
        %v3117 = vld [vmem:[%s2786 + $0xa4] sm:$0x1]
        %v3118 = vld [vmem:[%s2786 + $0xa8] sm:$0xf]
        %v3119 = vld [vmem:[%s2786 + $0xac] sm:$0xf]
        %v3120 = vld [vmem:[%s2786 + $0xb0] sm:$0x1]
        %v3121 = vld [vmem:[%s2786 + $0xb4] sm:$0xf]
        %v3122 = vld [vmem:[%s2786 + $0xb8] sm:$0xf]
        %v3123 = vld [vmem:[%s2786 + $0xbc] sm:$0x1]
        %v3125 = vshrl.u32 %v3076, 16
        %v3127 = vrot.slane %v3125, 4
        %v3128 = vshll.u32 %v3076, 16
        %v3130 = vrot.slane %v3128, 5
        %v3131 = vor.u32 %v3127, %v3130
        %v3132 = vrot.slane %v3131, 4
        %v3134 = vshll.u32 %v3077, 16
        %v3136 = vrot.slane %v3134, 5
        %v3137 = vsel %vm221, %v3132, %v3136
        %v3138 = vshrl.u32 %v3077, 16
        %v3140 = vrot.slane %v3138, 4
        %v3141 = vor.u32 %v3140, %v3136
        %v3142 = vrot.slane %v3141, 4
        %v3144 = vshll.u32 %v3078, 16
        %v3146 = vrot.slane %v3144, 5
        %v3147 = vsel %vm221, %v3142, %v3146
        %v3149 = vshrl.u32 %v3079, 16
        %v3151 = vrot.slane %v3149, 4
        %v3152 = vshll.u32 %v3079, 16
        %v3154 = vrot.slane %v3152, 5
        %v3155 = vor.u32 %v3151, %v3154
        %v3156 = vrot.slane %v3155, 4
        %v3158 = vshll.u32 %v3080, 16
        %v3160 = vrot.slane %v3158, 5
        %v3161 = vsel %vm221, %v3156, %v3160
        %v3162 = vshrl.u32 %v3080, 16
        %v3164 = vrot.slane %v3162, 4
        %v3165 = vor.u32 %v3164, %v3160
        %v3166 = vrot.slane %v3165, 4
        %v3168 = vshll.u32 %v3081, 16
        %v3170 = vrot.slane %v3168, 5
        %v3171 = vsel %vm221, %v3166, %v3170
        %v3173 = vshrl.u32 %v3082, 16
        %v3175 = vrot.slane %v3173, 4
        %v3176 = vshll.u32 %v3082, 16
        %v3178 = vrot.slane %v3176, 5
        %v3179 = vor.u32 %v3175, %v3178
        %v3180 = vrot.slane %v3179, 4
        %v3182 = vshll.u32 %v3083, 16
        %v3184 = vrot.slane %v3182, 5
        %v3185 = vsel %vm221, %v3180, %v3184
        %v3186 = vshrl.u32 %v3083, 16
        %v3188 = vrot.slane %v3186, 4
        %v3189 = vor.u32 %v3188, %v3184
        %v3190 = vrot.slane %v3189, 4
        %v3192 = vshll.u32 %v3084, 16
        %v3194 = vrot.slane %v3192, 5
        %v3195 = vsel %vm221, %v3190, %v3194
        %v3197 = vshrl.u32 %v3085, 16
        %v3199 = vrot.slane %v3197, 4
        %v3200 = vshll.u32 %v3085, 16
        %v3202 = vrot.slane %v3200, 5
        %v3203 = vor.u32 %v3199, %v3202
        %v3204 = vrot.slane %v3203, 4
        %v3206 = vshll.u32 %v3086, 16
        %v3208 = vrot.slane %v3206, 5
        %v3209 = vsel %vm221, %v3204, %v3208
        %v3210 = vshrl.u32 %v3086, 16
        %v3212 = vrot.slane %v3210, 4
        %v3213 = vor.u32 %v3212, %v3208
        %v3214 = vrot.slane %v3213, 4
        %v3216 = vshll.u32 %v3087, 16
        %v3218 = vrot.slane %v3216, 5
        %v3219 = vsel %vm221, %v3214, %v3218
        %v3221 = vshrl.u32 %v3088, 16
        %v3223 = vrot.slane %v3221, 4
        %v3224 = vshll.u32 %v3088, 16
        %v3226 = vrot.slane %v3224, 5
        %v3227 = vor.u32 %v3223, %v3226
        %v3228 = vrot.slane %v3227, 4
        %v3230 = vshll.u32 %v3089, 16
        %v3232 = vrot.slane %v3230, 5
        %v3233 = vsel %vm221, %v3228, %v3232
        %v3234 = vshrl.u32 %v3089, 16
        %v3236 = vrot.slane %v3234, 4
        %v3237 = vor.u32 %v3236, %v3232
        %v3238 = vrot.slane %v3237, 4
        %v3240 = vshll.u32 %v3090, 16
        %v3242 = vrot.slane %v3240, 5
        %v3243 = vsel %vm221, %v3238, %v3242
        %v3245 = vshrl.u32 %v3091, 16
        %v3247 = vrot.slane %v3245, 4
        %v3248 = vshll.u32 %v3091, 16
        %v3250 = vrot.slane %v3248, 5
        %v3251 = vor.u32 %v3247, %v3250
        %v3252 = vrot.slane %v3251, 4
        %v3254 = vshll.u32 %v3092, 16
        %v3256 = vrot.slane %v3254, 5
        %v3257 = vsel %vm221, %v3252, %v3256
        %v3258 = vshrl.u32 %v3092, 16
        %v3260 = vrot.slane %v3258, 4
        %v3261 = vor.u32 %v3260, %v3256
        %v3262 = vrot.slane %v3261, 4
        %v3264 = vshll.u32 %v3093, 16
        %v3266 = vrot.slane %v3264, 5
        %v3267 = vsel %vm221, %v3262, %v3266
        %v3269 = vshrl.u32 %v3094, 16
        %v3271 = vrot.slane %v3269, 4
        %v3272 = vshll.u32 %v3094, 16
        %v3274 = vrot.slane %v3272, 5
        %v3275 = vor.u32 %v3271, %v3274
        %v3276 = vrot.slane %v3275, 4
        %v3278 = vshll.u32 %v3095, 16
        %v3280 = vrot.slane %v3278, 5
        %v3281 = vsel %vm221, %v3276, %v3280
        %v3282 = vshrl.u32 %v3095, 16
        %v3284 = vrot.slane %v3282, 4
        %v3285 = vor.u32 %v3284, %v3280
        %v3286 = vrot.slane %v3285, 4
        %v3288 = vshll.u32 %v3096, 16
        %v3290 = vrot.slane %v3288, 5
        %v3291 = vsel %vm221, %v3286, %v3290
        %v3293 = vshrl.u32 %v3097, 16
        %v3295 = vrot.slane %v3293, 4
        %v3296 = vshll.u32 %v3097, 16
        %v3298 = vrot.slane %v3296, 5
        %v3299 = vor.u32 %v3295, %v3298
        %v3300 = vrot.slane %v3299, 4
        %v3302 = vshll.u32 %v3098, 16
        %v3304 = vrot.slane %v3302, 5
        %v3305 = vsel %vm221, %v3300, %v3304
        %v3306 = vshrl.u32 %v3098, 16
        %v3308 = vrot.slane %v3306, 4
        %v3309 = vor.u32 %v3308, %v3304
        %v3310 = vrot.slane %v3309, 4
        %v3312 = vshll.u32 %v3099, 16
        %v3314 = vrot.slane %v3312, 5
        %v3315 = vsel %vm221, %v3310, %v3314
        %v3317 = vshrl.u32 %v3100, 16
        %v3319 = vrot.slane %v3317, 4
        %v3320 = vshll.u32 %v3100, 16
        %v3322 = vrot.slane %v3320, 5
        %v3323 = vor.u32 %v3319, %v3322
        %v3324 = vrot.slane %v3323, 4
        %v3326 = vshll.u32 %v3101, 16
        %v3328 = vrot.slane %v3326, 5
        %v3329 = vsel %vm221, %v3324, %v3328
        %v3330 = vshrl.u32 %v3101, 16
        %v3332 = vrot.slane %v3330, 4
        %v3333 = vor.u32 %v3332, %v3328
        %v3334 = vrot.slane %v3333, 4
        %v3336 = vshll.u32 %v3102, 16
        %v3338 = vrot.slane %v3336, 5
        %v3339 = vsel %vm221, %v3334, %v3338
        %v3341 = vshrl.u32 %v3103, 16
        %v3343 = vrot.slane %v3341, 4
        %v3344 = vshll.u32 %v3103, 16
        %v3346 = vrot.slane %v3344, 5
        %v3347 = vor.u32 %v3343, %v3346
        %v3348 = vrot.slane %v3347, 4
        %v3350 = vshll.u32 %v3104, 16
        %v3352 = vrot.slane %v3350, 5
        %v3353 = vsel %vm221, %v3348, %v3352
        %v3354 = vshrl.u32 %v3104, 16
        %v3356 = vrot.slane %v3354, 4
        %v3357 = vor.u32 %v3356, %v3352
        %v3358 = vrot.slane %v3357, 4
        %v3360 = vshll.u32 %v3105, 16
        %v3362 = vrot.slane %v3360, 5
        %v3363 = vsel %vm221, %v3358, %v3362
        %v3365 = vshrl.u32 %v3106, 16
        %v3367 = vrot.slane %v3365, 4
        %v3368 = vshll.u32 %v3106, 16
        %v3370 = vrot.slane %v3368, 5
        %v3371 = vor.u32 %v3367, %v3370
        %v3372 = vrot.slane %v3371, 4
        %v3374 = vshll.u32 %v3107, 16
        %v3376 = vrot.slane %v3374, 5
        %v3377 = vsel %vm221, %v3372, %v3376
        %v3378 = vshrl.u32 %v3107, 16
        %v3380 = vrot.slane %v3378, 4
        %v3381 = vor.u32 %v3380, %v3376
        %v3382 = vrot.slane %v3381, 4
        %v3384 = vshll.u32 %v3108, 16
        %v3386 = vrot.slane %v3384, 5
        %v3387 = vsel %vm221, %v3382, %v3386
        %v3389 = vshrl.u32 %v3109, 16
        %v3391 = vrot.slane %v3389, 4
        %v3392 = vshll.u32 %v3109, 16
        %v3394 = vrot.slane %v3392, 5
        %v3395 = vor.u32 %v3391, %v3394
        %v3396 = vrot.slane %v3395, 4
        %v3398 = vshll.u32 %v3110, 16
        %v3400 = vrot.slane %v3398, 5
        %v3401 = vsel %vm221, %v3396, %v3400
        %v3402 = vshrl.u32 %v3110, 16
        %v3404 = vrot.slane %v3402, 4
        %v3405 = vor.u32 %v3404, %v3400
        %v3406 = vrot.slane %v3405, 4
        %v3408 = vshll.u32 %v3111, 16
        %v3410 = vrot.slane %v3408, 5
        %v3411 = vsel %vm221, %v3406, %v3410
        %v3413 = vshrl.u32 %v3112, 16
        %v3415 = vrot.slane %v3413, 4
        %v3416 = vshll.u32 %v3112, 16
        %v3418 = vrot.slane %v3416, 5
        %v3419 = vor.u32 %v3415, %v3418
        %v3420 = vrot.slane %v3419, 4
        %v3422 = vshll.u32 %v3113, 16
        %v3424 = vrot.slane %v3422, 5
        %v3425 = vsel %vm221, %v3420, %v3424
        %v3426 = vshrl.u32 %v3113, 16
        %v3428 = vrot.slane %v3426, 4
        %v3429 = vor.u32 %v3428, %v3424
        %v3430 = vrot.slane %v3429, 4
        %v3432 = vshll.u32 %v3114, 16
        %v3434 = vrot.slane %v3432, 5
        %v3435 = vsel %vm221, %v3430, %v3434
        %v3437 = vshrl.u32 %v3115, 16
        %v3439 = vrot.slane %v3437, 4
        %v3440 = vshll.u32 %v3115, 16
        %v3442 = vrot.slane %v3440, 5
        %v3443 = vor.u32 %v3439, %v3442
        %v3444 = vrot.slane %v3443, 4
        %v3446 = vshll.u32 %v3116, 16
        %v3448 = vrot.slane %v3446, 5
        %v3449 = vsel %vm221, %v3444, %v3448
        %v3450 = vshrl.u32 %v3116, 16
        %v3452 = vrot.slane %v3450, 4
        %v3453 = vor.u32 %v3452, %v3448
        %v3454 = vrot.slane %v3453, 4
        %v3456 = vshll.u32 %v3117, 16
        %v3458 = vrot.slane %v3456, 5
        %v3459 = vsel %vm221, %v3454, %v3458
        %v3461 = vshrl.u32 %v3118, 16
        %v3463 = vrot.slane %v3461, 4
        %v3464 = vshll.u32 %v3118, 16
        %v3466 = vrot.slane %v3464, 5
        %v3467 = vor.u32 %v3463, %v3466
        %v3468 = vrot.slane %v3467, 4
        %v3470 = vshll.u32 %v3119, 16
        %v3472 = vrot.slane %v3470, 5
        %v3473 = vsel %vm221, %v3468, %v3472
        %v3474 = vshrl.u32 %v3119, 16
        %v3476 = vrot.slane %v3474, 4
        %v3477 = vor.u32 %v3476, %v3472
        %v3478 = vrot.slane %v3477, 4
        %v3480 = vshll.u32 %v3120, 16
        %v3482 = vrot.slane %v3480, 5
        %v3483 = vsel %vm221, %v3478, %v3482
        %v3485 = vshrl.u32 %v3121, 16
        %v3487 = vrot.slane %v3485, 4
        %v3488 = vshll.u32 %v3121, 16
        %v3490 = vrot.slane %v3488, 5
        %v3491 = vor.u32 %v3487, %v3490
        %v3492 = vrot.slane %v3491, 4
        %v3494 = vshll.u32 %v3122, 16
        %v3496 = vrot.slane %v3494, 5
        %v3497 = vsel %vm221, %v3492, %v3496
        %v3498 = vshrl.u32 %v3122, 16
        %v3500 = vrot.slane %v3498, 4
        %v3501 = vor.u32 %v3500, %v3496
        %v3502 = vrot.slane %v3501, 4
        %v3504 = vshll.u32 %v3123, 16
        %v3506 = vrot.slane %v3504, 5
        %v3507 = vsel %vm221, %v3502, %v3506
        %v3508 = vld [vmem:[%s1 + $0x8] sm:$0xc]
        %v3509 = vunpack.c.l.b16 %v3137
        %v3510 = vunpack.c.l.b16 %v3147
        %v3511 = vunpack.c.l.b16 %v3161
        %v3512 = vunpack.c.l.b16 %v3171
        %v3513 = vunpack.c.l.b16 %v3185
        %v3514 = vunpack.c.l.b16 %v3195
        %v3515 = vunpack.c.l.b16 %v3209
        %v3516 = vunpack.c.l.b16 %v3219
        %v3517 = vunpack.c.l.b16 %v3233
        %v3518 = vunpack.c.l.b16 %v3243
        %v3519 = vunpack.c.l.b16 %v3257
        %v3520 = vunpack.c.l.b16 %v3267
        %v3521 = vunpack.c.l.b16 %v3281
        %v3522 = vunpack.c.l.b16 %v3291
        %v3523 = vunpack.c.l.b16 %v3305
        %v3524 = vunpack.c.l.b16 %v3315
        %v3525 = vunpack.c.l.b16 %v3329
        %v3526 = vunpack.c.l.b16 %v3339
        %v3527 = vunpack.c.l.b16 %v3353
        %v3528 = vunpack.c.l.b16 %v3363
        %v3529 = vunpack.c.l.b16 %v3377
        %v3530 = vunpack.c.l.b16 %v3387
        %v3531 = vunpack.c.l.b16 %v3401
        %v3532 = vunpack.c.l.b16 %v3411
        %v3533 = vunpack.c.l.b16 %v3425
        %v3534 = vunpack.c.l.b16 %v3435
        %v3535 = vunpack.c.l.b16 %v3449
        %v3536 = vunpack.c.l.b16 %v3459
        %v3537 = vunpack.c.l.b16 %v3473
        %v3538 = vunpack.c.l.b16 %v3483
        %v3539 = vunpack.c.l.b16 %v3497
        %v3540 = vunpack.c.l.b16 %v3507
        %v3541 = vpack.c.b16 %v3510, %v3509
        %v3542 = vpack.c.b16 %v3512, %v3511
        %v3543 = vpack.c.b16 %v3514, %v3513
        %v3544 = vpack.c.b16 %v3516, %v3515
        %v3545 = vpack.c.b16 %v3518, %v3517
        %v3546 = vpack.c.b16 %v3520, %v3519
        %v3547 = vpack.c.b16 %v3522, %v3521
        %v3548 = vpack.c.b16 %v3524, %v3523
        %v3549 = vpack.c.b16 %v3526, %v3525
        %v3550 = vpack.c.b16 %v3528, %v3527
        %v3551 = vpack.c.b16 %v3530, %v3529
        %v3552 = vpack.c.b16 %v3532, %v3531
        %v3553 = vpack.c.b16 %v3534, %v3533
        %v3554 = vpack.c.b16 %v3536, %v3535
        %v3555 = vpack.c.b16 %v3538, %v3537
        %v3556 = vpack.c.b16 %v3540, %v3539
        %v3558 = vunpack.c.l.b16 %v3508
        %v3559 = vpack.c.b16 %v3558, %v3558
        %v3561 = vshrl.u32 %v3559, 16
        %v3563 = vrot.slane %v3561, 2
        %v3564 = vshll.u32 %v3559, 16
        %v3566 = vrot.slane %v3564, 3
        %v3567 = vor.u32 %v3563, %v3566
        %v3569 = vsel %vm666, %v3541, 0
        %v3572 = vsel %vm666, %v3542, 0
        %v3575 = vsel %vm666, %v3543, 0
        %v3578 = vsel %vm666, %v3544, 0
        %v3581 = vsel %vm666, %v3545, 0
        %v3584 = vsel %vm666, %v3546, 0
        %v3587 = vsel %vm666, %v3547, 0
        %v3590 = vsel %vm666, %v3548, 0
        %v3593 = vsel %vm666, %v3549, 0
        %v3596 = vsel %vm666, %v3550, 0
        %v3599 = vsel %vm666, %v3551, 0
        %v3602 = vsel %vm666, %v3552, 0
        %v3605 = vsel %vm666, %v3553, 0
        %v3608 = vsel %vm666, %v3554, 0
        %v3611 = vsel %vm666, %v3555, 0
        %v3614 = vsel %vm666, %v3556, 0
        %v3617 = vand.u32 %v3567, %v718
        %3619 = vmatpush.bf16.msra.mxu0 0
        %3620 = vmatpush.bf16.msra.mxu0 0
        %3621 = vmatpush.bf16.msra.mxu0 0
        %3622 = vmatpush.bf16.msra.mxu0 0
        %3623 = vmatpush.bf16.msra.mxu0 0
        %3624 = vmatpush.bf16.msra.mxu0 0
        %3625 = vmatpush.bf16.msra.mxu0 0
        %3626 = vmatpush.bf16.msra.mxu0 %v3617
        %3627 = vmatmul.bf16.gmra.mxu0 %v3569
        %v3628 = vpop.f32.mrf.mxu0
        %v3629 = vadd.f32 0.0, %v3628
        %v3630 = vpop.f32.mrf.mxu0
        %v3631 = vadd.f32 0.0, %v3630
        %3632 = vmatmul.bf16.gmra.mxu0 %v3572
        %v3633 = vpop.f32.mrf.mxu0
        %v3634 = vadd.f32 0.0, %v3633
        %v3635 = vpop.f32.mrf.mxu0
        %v3636 = vadd.f32 0.0, %v3635
        %3637 = vmatmul.bf16.gmra.mxu0 %v3575
        %v3638 = vpop.f32.mrf.mxu0
        %v3639 = vadd.f32 0.0, %v3638
        %v3640 = vpop.f32.mrf.mxu0
        %v3641 = vadd.f32 0.0, %v3640
        %3642 = vmatmul.bf16.gmra.mxu0 %v3578
        %v3643 = vpop.f32.mrf.mxu0
        %v3644 = vadd.f32 0.0, %v3643
        %v3645 = vpop.f32.mrf.mxu0
        %v3646 = vadd.f32 0.0, %v3645
        %3647 = vmatmul.bf16.gmra.mxu0 %v3581
        %v3648 = vpop.f32.mrf.mxu0
        %v3649 = vadd.f32 0.0, %v3648
        %v3650 = vpop.f32.mrf.mxu0
        %v3651 = vadd.f32 0.0, %v3650
        %3652 = vmatmul.bf16.gmra.mxu0 %v3584
        %v3653 = vpop.f32.mrf.mxu0
        %v3654 = vadd.f32 0.0, %v3653
        %v3655 = vpop.f32.mrf.mxu0
        %v3656 = vadd.f32 0.0, %v3655
        %3657 = vmatmul.bf16.gmra.mxu0 %v3587
        %v3658 = vpop.f32.mrf.mxu0
        %v3659 = vadd.f32 0.0, %v3658
        %v3660 = vpop.f32.mrf.mxu0
        %v3661 = vadd.f32 0.0, %v3660
        %3662 = vmatmul.bf16.gmra.mxu0 %v3590
        %v3663 = vpop.f32.mrf.mxu0
        %v3664 = vadd.f32 0.0, %v3663
        %v3665 = vpop.f32.mrf.mxu0
        %v3666 = vadd.f32 0.0, %v3665
        %3667 = vmatmul.bf16.gmra.mxu0 %v3593
        %v3668 = vpop.f32.mrf.mxu0
        %v3669 = vadd.f32 0.0, %v3668
        %v3670 = vpop.f32.mrf.mxu0
        %v3671 = vadd.f32 0.0, %v3670
        %3672 = vmatmul.bf16.gmra.mxu0 %v3596
        %v3673 = vpop.f32.mrf.mxu0
        %v3674 = vadd.f32 0.0, %v3673
        %v3675 = vpop.f32.mrf.mxu0
        %v3676 = vadd.f32 0.0, %v3675
        %3677 = vmatmul.bf16.gmra.mxu0 %v3599
        %v3678 = vpop.f32.mrf.mxu0
        %v3679 = vadd.f32 0.0, %v3678
        %v3680 = vpop.f32.mrf.mxu0
        %v3681 = vadd.f32 0.0, %v3680
        %3682 = vmatmul.bf16.gmra.mxu0 %v3602
        %v3683 = vpop.f32.mrf.mxu0
        %v3684 = vadd.f32 0.0, %v3683
        %v3685 = vpop.f32.mrf.mxu0
        %v3686 = vadd.f32 0.0, %v3685
        %3687 = vmatmul.bf16.gmra.mxu0 %v3605
        %v3688 = vpop.f32.mrf.mxu0
        %v3689 = vadd.f32 0.0, %v3688
        %v3690 = vpop.f32.mrf.mxu0
        %v3691 = vadd.f32 0.0, %v3690
        %3692 = vmatmul.bf16.gmra.mxu0 %v3608
        %v3693 = vpop.f32.mrf.mxu0
        %v3694 = vadd.f32 0.0, %v3693
        %v3695 = vpop.f32.mrf.mxu0
        %v3696 = vadd.f32 0.0, %v3695
        %3697 = vmatmul.bf16.gmra.mxu0 %v3611
        %v3698 = vpop.f32.mrf.mxu0
        %v3699 = vadd.f32 0.0, %v3698
        %v3700 = vpop.f32.mrf.mxu0
        %v3701 = vadd.f32 0.0, %v3700
        %3702 = vmatmul.bf16.gmra.mxu0 %v3614
        %v3703 = vpop.f32.mrf.mxu0
        %v3704 = vadd.f32 0.0, %v3703
        %v3705 = vpop.f32.mrf.mxu0
        %v3706 = vadd.f32 0.0, %v3705
        %3707 = vdwg.mxu0
        %v3708 = vadd.f32 %v3044, %v3629
        %v3709 = vadd.f32 %v3045, %v3631
        %v3710 = vadd.f32 %v3046, %v3634
        %v3711 = vadd.f32 %v3047, %v3636
        %v3712 = vadd.f32 %v3048, %v3639
        %v3713 = vadd.f32 %v3049, %v3641
        %v3714 = vadd.f32 %v3050, %v3644
        %v3715 = vadd.f32 %v3051, %v3646
        %v3716 = vadd.f32 %v3052, %v3649
        %v3717 = vadd.f32 %v3053, %v3651
        %v3718 = vadd.f32 %v3054, %v3654
        %v3719 = vadd.f32 %v3055, %v3656
        %v3720 = vadd.f32 %v3056, %v3659
        %v3721 = vadd.f32 %v3057, %v3661
        %v3722 = vadd.f32 %v3058, %v3664
        %v3723 = vadd.f32 %v3059, %v3666
        %v3724 = vadd.f32 %v3060, %v3669
        %v3725 = vadd.f32 %v3061, %v3671
        %v3726 = vadd.f32 %v3062, %v3674
        %v3727 = vadd.f32 %v3063, %v3676
        %v3728 = vadd.f32 %v3064, %v3679
        %v3729 = vadd.f32 %v3065, %v3681
        %v3730 = vadd.f32 %v3066, %v3684
        %v3731 = vadd.f32 %v3067, %v3686
        %v3732 = vadd.f32 %v3068, %v3689
        %v3733 = vadd.f32 %v3069, %v3691
        %v3734 = vadd.f32 %v3070, %v3694
        %v3735 = vadd.f32 %v3071, %v3696
        %v3736 = vadd.f32 %v3072, %v3699
        %v3737 = vadd.f32 %v3073, %v3701
        %v3738 = vadd.f32 %v3074, %v3704
        %v3739 = vadd.f32 %v3075, %v3706
        %v3740 = vld [vmem:[%s2786] sm:$0xe]
        %v3741 = vld [vmem:[%s2786 + $0xc] sm:$0xe]
        %v3742 = vld [vmem:[%s2786 + $0x18] sm:$0xe]
        %v3743 = vld [vmem:[%s2786 + $0x24] sm:$0xe]
        %v3744 = vld [vmem:[%s2786 + $0x30] sm:$0xe]
        %v3745 = vld [vmem:[%s2786 + $0x3c] sm:$0xe]
        %v3746 = vld [vmem:[%s2786 + $0x48] sm:$0xe]
        %v3747 = vld [vmem:[%s2786 + $0x54] sm:$0xe]
        %v3748 = vld [vmem:[%s2786 + $0x60] sm:$0xe]
        %v3749 = vld [vmem:[%s2786 + $0x6c] sm:$0xe]
        %v3750 = vld [vmem:[%s2786 + $0x78] sm:$0xe]
        %v3751 = vld [vmem:[%s2786 + $0x84] sm:$0xe]
        %v3752 = vld [vmem:[%s2786 + $0x90] sm:$0xe]
        %v3753 = vld [vmem:[%s2786 + $0x9c] sm:$0xe]
        %v3754 = vld [vmem:[%s2786 + $0xa8] sm:$0xe]
        %v3755 = vld [vmem:[%s2786 + $0xb4] sm:$0xe]
        %v3804 = vrot.slane %v3740, 5
        %v3805 = vrot.slane %v3804, 4
        %v3806 = vrot.slane %v3077, 5
        %v3807 = vsel %vm1081, %v3805, %v3806
        %v3808 = vrot.slane %v3806, 4
        %v3809 = vrot.slane %v3078, 5
        %v3810 = vsel %vm1081, %v3808, %v3809
        %v3811 = vrot.slane %v3741, 5
        %v3812 = vrot.slane %v3811, 4
        %v3813 = vrot.slane %v3080, 5
        %v3814 = vsel %vm1081, %v3812, %v3813
        %v3815 = vrot.slane %v3813, 4
        %v3816 = vrot.slane %v3081, 5
        %v3817 = vsel %vm1081, %v3815, %v3816
        %v3818 = vrot.slane %v3742, 5
        %v3819 = vrot.slane %v3818, 4
        %v3820 = vrot.slane %v3083, 5
        %v3821 = vsel %vm1081, %v3819, %v3820
        %v3822 = vrot.slane %v3820, 4
        %v3823 = vrot.slane %v3084, 5
        %v3824 = vsel %vm1081, %v3822, %v3823
        %v3825 = vrot.slane %v3743, 5
        %v3826 = vrot.slane %v3825, 4
        %v3827 = vrot.slane %v3086, 5
        %v3828 = vsel %vm1081, %v3826, %v3827
        %v3829 = vrot.slane %v3827, 4
        %v3830 = vrot.slane %v3087, 5
        %v3831 = vsel %vm1081, %v3829, %v3830
        %v3832 = vrot.slane %v3744, 5
        %v3833 = vrot.slane %v3832, 4
        %v3834 = vrot.slane %v3089, 5
        %v3835 = vsel %vm1081, %v3833, %v3834
        %v3836 = vrot.slane %v3834, 4
        %v3837 = vrot.slane %v3090, 5
        %v3838 = vsel %vm1081, %v3836, %v3837
        %v3839 = vrot.slane %v3745, 5
        %v3840 = vrot.slane %v3839, 4
        %v3841 = vrot.slane %v3092, 5
        %v3842 = vsel %vm1081, %v3840, %v3841
        %v3843 = vrot.slane %v3841, 4
        %v3844 = vrot.slane %v3093, 5
        %v3845 = vsel %vm1081, %v3843, %v3844
        %v3846 = vrot.slane %v3746, 5
        %v3847 = vrot.slane %v3846, 4
        %v3848 = vrot.slane %v3095, 5
        %v3849 = vsel %vm1081, %v3847, %v3848
        %v3850 = vrot.slane %v3848, 4
        %v3851 = vrot.slane %v3096, 5
        %v3852 = vsel %vm1081, %v3850, %v3851
        %v3853 = vrot.slane %v3747, 5
        %v3854 = vrot.slane %v3853, 4
        %v3855 = vrot.slane %v3098, 5
        %v3856 = vsel %vm1081, %v3854, %v3855
        %v3857 = vrot.slane %v3855, 4
        %v3858 = vrot.slane %v3099, 5
        %v3859 = vsel %vm1081, %v3857, %v3858
        %v3860 = vrot.slane %v3748, 5
        %v3861 = vrot.slane %v3860, 4
        %v3862 = vrot.slane %v3101, 5
        %v3863 = vsel %vm1081, %v3861, %v3862
        %v3864 = vrot.slane %v3862, 4
        %v3865 = vrot.slane %v3102, 5
        %v3866 = vsel %vm1081, %v3864, %v3865
        %v3867 = vrot.slane %v3749, 5
        %v3868 = vrot.slane %v3867, 4
        %v3869 = vrot.slane %v3104, 5
        %v3870 = vsel %vm1081, %v3868, %v3869
        %v3871 = vrot.slane %v3869, 4
        %v3872 = vrot.slane %v3105, 5
        %v3873 = vsel %vm1081, %v3871, %v3872
        %v3874 = vrot.slane %v3750, 5
        %v3875 = vrot.slane %v3874, 4
        %v3876 = vrot.slane %v3107, 5
        %v3877 = vsel %vm1081, %v3875, %v3876
        %v3878 = vrot.slane %v3876, 4
        %v3879 = vrot.slane %v3108, 5
        %v3880 = vsel %vm1081, %v3878, %v3879
        %v3881 = vrot.slane %v3751, 5
        %v3882 = vrot.slane %v3881, 4
        %v3883 = vrot.slane %v3110, 5
        %v3884 = vsel %vm1081, %v3882, %v3883
        %v3885 = vrot.slane %v3883, 4
        %v3886 = vrot.slane %v3111, 5
        %v3887 = vsel %vm1081, %v3885, %v3886
        %v3888 = vrot.slane %v3752, 5
        %v3889 = vrot.slane %v3888, 4
        %v3890 = vrot.slane %v3113, 5
        %v3891 = vsel %vm1081, %v3889, %v3890
        %v3892 = vrot.slane %v3890, 4
        %v3893 = vrot.slane %v3114, 5
        %v3894 = vsel %vm1081, %v3892, %v3893
        %v3895 = vrot.slane %v3753, 5
        %v3896 = vrot.slane %v3895, 4
        %v3897 = vrot.slane %v3116, 5
        %v3898 = vsel %vm1081, %v3896, %v3897
        %v3899 = vrot.slane %v3897, 4
        %v3900 = vrot.slane %v3117, 5
        %v3901 = vsel %vm1081, %v3899, %v3900
        %v3902 = vrot.slane %v3754, 5
        %v3903 = vrot.slane %v3902, 4
        %v3904 = vrot.slane %v3119, 5
        %v3905 = vsel %vm1081, %v3903, %v3904
        %v3906 = vrot.slane %v3904, 4
        %v3907 = vrot.slane %v3120, 5
        %v3908 = vsel %vm1081, %v3906, %v3907
        %v3909 = vrot.slane %v3755, 5
        %v3910 = vrot.slane %v3909, 4
        %v3911 = vrot.slane %v3122, 5
        %v3912 = vsel %vm1081, %v3910, %v3911
        %v3913 = vrot.slane %v3911, 4
        %v3914 = vrot.slane %v3123, 5
        %v3915 = vsel %vm1081, %v3913, %v3914
        %v3916 = vld [vmem:[%s1 + $0xc] sm:$0x3]
        %v3917 = vunpack.c.l.b16 %v3807
        %v3918 = vunpack.c.l.b16 %v3810
        %v3919 = vunpack.c.l.b16 %v3814
        %v3920 = vunpack.c.l.b16 %v3817
        %v3921 = vunpack.c.l.b16 %v3821
        %v3922 = vunpack.c.l.b16 %v3824
        %v3923 = vunpack.c.l.b16 %v3828
        %v3924 = vunpack.c.l.b16 %v3831
        %v3925 = vunpack.c.l.b16 %v3835
        %v3926 = vunpack.c.l.b16 %v3838
        %v3927 = vunpack.c.l.b16 %v3842
        %v3928 = vunpack.c.l.b16 %v3845
        %v3929 = vunpack.c.l.b16 %v3849
        %v3930 = vunpack.c.l.b16 %v3852
        %v3931 = vunpack.c.l.b16 %v3856
        %v3932 = vunpack.c.l.b16 %v3859
        %v3933 = vunpack.c.l.b16 %v3863
        %v3934 = vunpack.c.l.b16 %v3866
        %v3935 = vunpack.c.l.b16 %v3870
        %v3936 = vunpack.c.l.b16 %v3873
        %v3937 = vunpack.c.l.b16 %v3877
        %v3938 = vunpack.c.l.b16 %v3880
        %v3939 = vunpack.c.l.b16 %v3884
        %v3940 = vunpack.c.l.b16 %v3887
        %v3941 = vunpack.c.l.b16 %v3891
        %v3942 = vunpack.c.l.b16 %v3894
        %v3943 = vunpack.c.l.b16 %v3898
        %v3944 = vunpack.c.l.b16 %v3901
        %v3945 = vunpack.c.l.b16 %v3905
        %v3946 = vunpack.c.l.b16 %v3908
        %v3947 = vunpack.c.l.b16 %v3912
        %v3948 = vunpack.c.l.b16 %v3915
        %v3949 = vpack.c.b16 %v3918, %v3917
        %v3950 = vpack.c.b16 %v3920, %v3919
        %v3951 = vpack.c.b16 %v3922, %v3921
        %v3952 = vpack.c.b16 %v3924, %v3923
        %v3953 = vpack.c.b16 %v3926, %v3925
        %v3954 = vpack.c.b16 %v3928, %v3927
        %v3955 = vpack.c.b16 %v3930, %v3929
        %v3956 = vpack.c.b16 %v3932, %v3931
        %v3957 = vpack.c.b16 %v3934, %v3933
        %v3958 = vpack.c.b16 %v3936, %v3935
        %v3959 = vpack.c.b16 %v3938, %v3937
        %v3960 = vpack.c.b16 %v3940, %v3939
        %v3961 = vpack.c.b16 %v3942, %v3941
        %v3962 = vpack.c.b16 %v3944, %v3943
        %v3963 = vpack.c.b16 %v3946, %v3945
        %v3964 = vpack.c.b16 %v3948, %v3947
        %v3966 = vsel %vm666, %v3949, 0
        %v3969 = vsel %vm666, %v3950, 0
        %v3972 = vsel %vm666, %v3951, 0
        %v3975 = vsel %vm666, %v3952, 0
        %v3978 = vsel %vm666, %v3953, 0
        %v3981 = vsel %vm666, %v3954, 0
        %v3984 = vsel %vm666, %v3955, 0
        %v3987 = vsel %vm666, %v3956, 0
        %v3990 = vsel %vm666, %v3957, 0
        %v3993 = vsel %vm666, %v3958, 0
        %v3996 = vsel %vm666, %v3959, 0
        %v3999 = vsel %vm666, %v3960, 0
        %v4002 = vsel %vm666, %v3961, 0
        %v4005 = vsel %vm666, %v3962, 0
        %v4008 = vsel %vm666, %v3963, 0
        %v4011 = vsel %vm666, %v3964, 0
        %v4014 = vand.u32 %v3916, %v718
        %4016 = vmatpush.bf16.msra.mxu0 0
        %4017 = vmatpush.bf16.msra.mxu0 0
        %4018 = vmatpush.bf16.msra.mxu0 0
        %4019 = vmatpush.bf16.msra.mxu0 0
        %4020 = vmatpush.bf16.msra.mxu0 0
        %4021 = vmatpush.bf16.msra.mxu0 0
        %4022 = vmatpush.bf16.msra.mxu0 0
        %4023 = vmatpush.bf16.msra.mxu0 %v4014
        %4024 = vmatmul.bf16.gmra.mxu0 %v3966
        %v4025 = vpop.f32.mrf.mxu0
        %v4026 = vadd.f32 0.0, %v4025
        %v4027 = vpop.f32.mrf.mxu0
        %v4028 = vadd.f32 0.0, %v4027
        %4029 = vmatmul.bf16.gmra.mxu0 %v3969
        %v4030 = vpop.f32.mrf.mxu0
        %v4031 = vadd.f32 0.0, %v4030
        %v4032 = vpop.f32.mrf.mxu0
        %v4033 = vadd.f32 0.0, %v4032
        %4034 = vmatmul.bf16.gmra.mxu0 %v3972
        %v4035 = vpop.f32.mrf.mxu0
        %v4036 = vadd.f32 0.0, %v4035
        %v4037 = vpop.f32.mrf.mxu0
        %v4038 = vadd.f32 0.0, %v4037
        %4039 = vmatmul.bf16.gmra.mxu0 %v3975
        %v4040 = vpop.f32.mrf.mxu0
        %v4041 = vadd.f32 0.0, %v4040
        %v4042 = vpop.f32.mrf.mxu0
        %v4043 = vadd.f32 0.0, %v4042
        %4044 = vmatmul.bf16.gmra.mxu0 %v3978
        %v4045 = vpop.f32.mrf.mxu0
        %v4046 = vadd.f32 0.0, %v4045
        %v4047 = vpop.f32.mrf.mxu0
        %v4048 = vadd.f32 0.0, %v4047
        %4049 = vmatmul.bf16.gmra.mxu0 %v3981
        %v4050 = vpop.f32.mrf.mxu0
        %v4051 = vadd.f32 0.0, %v4050
        %v4052 = vpop.f32.mrf.mxu0
        %v4053 = vadd.f32 0.0, %v4052
        %4054 = vmatmul.bf16.gmra.mxu0 %v3984
        %v4055 = vpop.f32.mrf.mxu0
        %v4056 = vadd.f32 0.0, %v4055
        %v4057 = vpop.f32.mrf.mxu0
        %v4058 = vadd.f32 0.0, %v4057
        %4059 = vmatmul.bf16.gmra.mxu0 %v3987
        %v4060 = vpop.f32.mrf.mxu0
        %v4061 = vadd.f32 0.0, %v4060
        %v4062 = vpop.f32.mrf.mxu0
        %v4063 = vadd.f32 0.0, %v4062
        %4064 = vmatmul.bf16.gmra.mxu0 %v3990
        %v4065 = vpop.f32.mrf.mxu0
        %v4066 = vadd.f32 0.0, %v4065
        %v4067 = vpop.f32.mrf.mxu0
        %v4068 = vadd.f32 0.0, %v4067
        %4069 = vmatmul.bf16.gmra.mxu0 %v3993
        %v4070 = vpop.f32.mrf.mxu0
        %v4071 = vadd.f32 0.0, %v4070
        %v4072 = vpop.f32.mrf.mxu0
        %v4073 = vadd.f32 0.0, %v4072
        %4074 = vmatmul.bf16.gmra.mxu0 %v3996
        %v4075 = vpop.f32.mrf.mxu0
        %v4076 = vadd.f32 0.0, %v4075
        %v4077 = vpop.f32.mrf.mxu0
        %v4078 = vadd.f32 0.0, %v4077
        %4079 = vmatmul.bf16.gmra.mxu0 %v3999
        %v4080 = vpop.f32.mrf.mxu0
        %v4081 = vadd.f32 0.0, %v4080
        %v4082 = vpop.f32.mrf.mxu0
        %v4083 = vadd.f32 0.0, %v4082
        %4084 = vmatmul.bf16.gmra.mxu0 %v4002
        %v4085 = vpop.f32.mrf.mxu0
        %v4086 = vadd.f32 0.0, %v4085
        %v4087 = vpop.f32.mrf.mxu0
        %v4088 = vadd.f32 0.0, %v4087
        %4089 = vmatmul.bf16.gmra.mxu0 %v4005
        %v4090 = vpop.f32.mrf.mxu0
        %v4091 = vadd.f32 0.0, %v4090
        %v4092 = vpop.f32.mrf.mxu0
        %v4093 = vadd.f32 0.0, %v4092
        %4094 = vmatmul.bf16.gmra.mxu0 %v4008
        %v4095 = vpop.f32.mrf.mxu0
        %v4096 = vadd.f32 0.0, %v4095
        %v4097 = vpop.f32.mrf.mxu0
        %v4098 = vadd.f32 0.0, %v4097
        %4099 = vmatmul.bf16.gmra.mxu0 %v4011
        %v4100 = vpop.f32.mrf.mxu0
        %v4101 = vadd.f32 0.0, %v4100
        %v4102 = vpop.f32.mrf.mxu0
        %v4103 = vadd.f32 0.0, %v4102
        %4104 = vdwg.mxu0
        %v4105 = vadd.f32 %v3708, %v4026
        %v4106 = vadd.f32 %v3709, %v4028
        %v4107 = vadd.f32 %v3710, %v4031
        %v4108 = vadd.f32 %v3711, %v4033
        %v4109 = vadd.f32 %v3712, %v4036
        %v4110 = vadd.f32 %v3713, %v4038
        %v4111 = vadd.f32 %v3714, %v4041
        %v4112 = vadd.f32 %v3715, %v4043
        %v4113 = vadd.f32 %v3716, %v4046
        %v4114 = vadd.f32 %v3717, %v4048
        %v4115 = vadd.f32 %v3718, %v4051
        %v4116 = vadd.f32 %v3719, %v4053
        %v4117 = vadd.f32 %v3720, %v4056
        %v4118 = vadd.f32 %v3721, %v4058
        %v4119 = vadd.f32 %v3722, %v4061
        %v4120 = vadd.f32 %v3723, %v4063
        %v4121 = vadd.f32 %v3724, %v4066
        %v4122 = vadd.f32 %v3725, %v4068
        %v4123 = vadd.f32 %v3726, %v4071
        %v4124 = vadd.f32 %v3727, %v4073
        %v4125 = vadd.f32 %v3728, %v4076
        %v4126 = vadd.f32 %v3729, %v4078
        %v4127 = vadd.f32 %v3730, %v4081
        %v4128 = vadd.f32 %v3731, %v4083
        %v4129 = vadd.f32 %v3732, %v4086
        %v4130 = vadd.f32 %v3733, %v4088
        %v4131 = vadd.f32 %v3734, %v4091
        %v4132 = vadd.f32 %v3735, %v4093
        %v4133 = vadd.f32 %v3736, %v4096
        %v4134 = vadd.f32 %v3737, %v4098
        %v4135 = vadd.f32 %v3738, %v4101
        %v4136 = vadd.f32 %v3739, %v4103
        %v4137 = vld [vmem:[%s2] sm:$0x1]
        %v4139 = vperm.slane %v4137, 0
        %v4141 = vadd.f32 %v4105, %v4139
        %v4142 = vadd.f32 %v4106, %v4139
        %v4143 = vadd.f32 %v4107, %v4139
        %v4144 = vadd.f32 %v4108, %v4139
        %v4145 = vadd.f32 %v4109, %v4139
        %v4146 = vadd.f32 %v4110, %v4139
        %v4147 = vadd.f32 %v4111, %v4139
        %v4148 = vadd.f32 %v4112, %v4139
        %v4149 = vadd.f32 %v4113, %v4139
        %v4150 = vadd.f32 %v4114, %v4139
        %v4151 = vadd.f32 %v4115, %v4139
        %v4152 = vadd.f32 %v4116, %v4139
        %v4153 = vadd.f32 %v4117, %v4139
        %v4154 = vadd.f32 %v4118, %v4139
        %v4155 = vadd.f32 %v4119, %v4139
        %v4156 = vadd.f32 %v4120, %v4139
        %v4157 = vadd.f32 %v4121, %v4139
        %v4158 = vadd.f32 %v4122, %v4139
        %v4159 = vadd.f32 %v4123, %v4139
        %v4160 = vadd.f32 %v4124, %v4139
        %v4161 = vadd.f32 %v4125, %v4139
        %v4162 = vadd.f32 %v4126, %v4139
        %v4163 = vadd.f32 %v4127, %v4139
        %v4164 = vadd.f32 %v4128, %v4139
        %v4165 = vadd.f32 %v4129, %v4139
        %v4166 = vadd.f32 %v4130, %v4139
        %v4167 = vadd.f32 %v4131, %v4139
        %v4168 = vadd.f32 %v4132, %v4139
        %v4169 = vadd.f32 %v4133, %v4139
        %v4170 = vadd.f32 %v4134, %v4139
        %v4171 = vadd.f32 %v4135, %v4139
        %v4172 = vadd.f32 %v4136, %v4139
        %vm4173 = vcmp.ge.f32.partialorder %v4141, 0.0
        %vm4174 = vcmp.ge.f32.partialorder %v4142, 0.0
        %vm4175 = vcmp.ge.f32.partialorder %v4143, 0.0
        %vm4176 = vcmp.ge.f32.partialorder %v4144, 0.0
        %vm4177 = vcmp.ge.f32.partialorder %v4145, 0.0
        %vm4178 = vcmp.ge.f32.partialorder %v4146, 0.0
        %vm4179 = vcmp.ge.f32.partialorder %v4147, 0.0
        %vm4180 = vcmp.ge.f32.partialorder %v4148, 0.0
        %vm4181 = vcmp.ge.f32.partialorder %v4149, 0.0
        %vm4182 = vcmp.ge.f32.partialorder %v4150, 0.0
        %vm4183 = vcmp.ge.f32.partialorder %v4151, 0.0
        %vm4184 = vcmp.ge.f32.partialorder %v4152, 0.0
        %vm4185 = vcmp.ge.f32.partialorder %v4153, 0.0
        %vm4186 = vcmp.ge.f32.partialorder %v4154, 0.0
        %vm4187 = vcmp.ge.f32.partialorder %v4155, 0.0
        %vm4188 = vcmp.ge.f32.partialorder %v4156, 0.0
        %vm4189 = vcmp.ge.f32.partialorder %v4157, 0.0
        %vm4190 = vcmp.ge.f32.partialorder %v4158, 0.0
        %vm4191 = vcmp.ge.f32.partialorder %v4159, 0.0
        %vm4192 = vcmp.ge.f32.partialorder %v4160, 0.0
        %vm4193 = vcmp.ge.f32.partialorder %v4161, 0.0
        %vm4194 = vcmp.ge.f32.partialorder %v4162, 0.0
        %vm4195 = vcmp.ge.f32.partialorder %v4163, 0.0
        %vm4196 = vcmp.ge.f32.partialorder %v4164, 0.0
        %vm4197 = vcmp.ge.f32.partialorder %v4165, 0.0
        %vm4198 = vcmp.ge.f32.partialorder %v4166, 0.0
        %vm4199 = vcmp.ge.f32.partialorder %v4167, 0.0
        %vm4200 = vcmp.ge.f32.partialorder %v4168, 0.0
        %vm4201 = vcmp.ge.f32.partialorder %v4169, 0.0
        %vm4202 = vcmp.ge.f32.partialorder %v4170, 0.0
        %vm4203 = vcmp.ge.f32.partialorder %v4171, 0.0
        %vm4204 = vcmp.ge.f32.partialorder %v4172, 0.0
        %v4205 = vmul.f32 %v4141, 0.1
        %v4206 = vmul.f32 %v4142, 0.1
        %v4207 = vmul.f32 %v4143, 0.1
        %v4208 = vmul.f32 %v4144, 0.1
        %v4209 = vmul.f32 %v4145, 0.1
        %v4210 = vmul.f32 %v4146, 0.1
        %v4211 = vmul.f32 %v4147, 0.1
        %v4212 = vmul.f32 %v4148, 0.1
        %v4213 = vmul.f32 %v4149, 0.1
        %v4214 = vmul.f32 %v4150, 0.1
        %v4215 = vmul.f32 %v4151, 0.1
        %v4216 = vmul.f32 %v4152, 0.1
        %v4217 = vmul.f32 %v4153, 0.1
        %v4218 = vmul.f32 %v4154, 0.1
        %v4219 = vmul.f32 %v4155, 0.1
        %v4220 = vmul.f32 %v4156, 0.1
        %v4221 = vmul.f32 %v4157, 0.1
        %v4222 = vmul.f32 %v4158, 0.1
        %v4223 = vmul.f32 %v4159, 0.1
        %v4224 = vmul.f32 %v4160, 0.1
        %v4225 = vmul.f32 %v4161, 0.1
        %v4226 = vmul.f32 %v4162, 0.1
        %v4227 = vmul.f32 %v4163, 0.1
        %v4228 = vmul.f32 %v4164, 0.1
        %v4229 = vmul.f32 %v4165, 0.1
        %v4230 = vmul.f32 %v4166, 0.1
        %v4231 = vmul.f32 %v4167, 0.1
        %v4232 = vmul.f32 %v4168, 0.1
        %v4233 = vmul.f32 %v4169, 0.1
        %v4234 = vmul.f32 %v4170, 0.1
        %v4235 = vmul.f32 %v4171, 0.1
        %v4236 = vmul.f32 %v4172, 0.1
        %v4237 = vsel %vm4173, %v4141, %v4205
        %v4238 = vsel %vm4174, %v4142, %v4206
        %v4239 = vsel %vm4175, %v4143, %v4207
        %v4240 = vsel %vm4176, %v4144, %v4208
        %v4241 = vsel %vm4177, %v4145, %v4209
        %v4242 = vsel %vm4178, %v4146, %v4210
        %v4243 = vsel %vm4179, %v4147, %v4211
        %v4244 = vsel %vm4180, %v4148, %v4212
        %v4245 = vsel %vm4181, %v4149, %v4213
        %v4246 = vsel %vm4182, %v4150, %v4214
        %v4247 = vsel %vm4183, %v4151, %v4215
        %v4248 = vsel %vm4184, %v4152, %v4216
        %v4249 = vsel %vm4185, %v4153, %v4217
        %v4250 = vsel %vm4186, %v4154, %v4218
        %v4251 = vsel %vm4187, %v4155, %v4219
        %v4252 = vsel %vm4188, %v4156, %v4220
        %v4253 = vsel %vm4189, %v4157, %v4221
        %v4254 = vsel %vm4190, %v4158, %v4222
        %v4255 = vsel %vm4191, %v4159, %v4223
        %v4256 = vsel %vm4192, %v4160, %v4224
        %v4257 = vsel %vm4193, %v4161, %v4225
        %v4258 = vsel %vm4194, %v4162, %v4226
        %v4259 = vsel %vm4195, %v4163, %v4227
        %v4260 = vsel %vm4196, %v4164, %v4228
        %v4261 = vsel %vm4197, %v4165, %v4229
        %v4262 = vsel %vm4198, %v4166, %v4230
        %v4263 = vsel %vm4199, %v4167, %v4231
        %v4264 = vsel %vm4200, %v4168, %v4232
        %v4265 = vsel %vm4201, %v4169, %v4233
        %v4266 = vsel %vm4202, %v4170, %v4234
        %v4267 = vsel %vm4203, %v4171, %v4235
        %v4268 = vsel %vm4204, %v4172, %v4236
        %v4269 = vpack.c.bf16 %v4237, %v4237
        %v4270 = vpack.c.bf16 %v4238, %v4238
        %v4271 = vpack.c.bf16 %v4239, %v4239
        %v4272 = vpack.c.bf16 %v4240, %v4240
        %v4273 = vpack.c.bf16 %v4241, %v4241
        %v4274 = vpack.c.bf16 %v4242, %v4242
        %v4275 = vpack.c.bf16 %v4243, %v4243
        %v4276 = vpack.c.bf16 %v4244, %v4244
        %v4277 = vpack.c.bf16 %v4245, %v4245
        %v4278 = vpack.c.bf16 %v4246, %v4246
        %v4279 = vpack.c.bf16 %v4247, %v4247
        %v4280 = vpack.c.bf16 %v4248, %v4248
        %v4281 = vpack.c.bf16 %v4249, %v4249
        %v4282 = vpack.c.bf16 %v4250, %v4250
        %v4283 = vpack.c.bf16 %v4251, %v4251
        %v4284 = vpack.c.bf16 %v4252, %v4252
        %v4285 = vpack.c.bf16 %v4253, %v4253
        %v4286 = vpack.c.bf16 %v4254, %v4254
        %v4287 = vpack.c.bf16 %v4255, %v4255
        %v4288 = vpack.c.bf16 %v4256, %v4256
        %v4289 = vpack.c.bf16 %v4257, %v4257
        %v4290 = vpack.c.bf16 %v4258, %v4258
        %v4291 = vpack.c.bf16 %v4259, %v4259
        %v4292 = vpack.c.bf16 %v4260, %v4260
        %v4293 = vpack.c.bf16 %v4261, %v4261
        %v4294 = vpack.c.bf16 %v4262, %v4262
        %v4295 = vpack.c.bf16 %v4263, %v4263
        %v4296 = vpack.c.bf16 %v4264, %v4264
        %v4297 = vpack.c.bf16 %v4265, %v4265
        %v4298 = vpack.c.bf16 %v4266, %v4266
        %v4299 = vpack.c.bf16 %v4267, %v4267
        %v4300 = vpack.c.bf16 %v4268, %v4268
        %vm4301 = vcmask 125952
        %4302 = vst.msk [vmem:[%s163] sm:$0xf] %vm4301, %v4269
        %4303 = vst.msk [vmem:[%s163 + $0x4] sm:$0xf] %vm4301, %v4270
        %4304 = vst.msk [vmem:[%s163 + $0x8] sm:$0xf] %vm4301, %v4271
        %4305 = vst.msk [vmem:[%s163 + $0xc] sm:$0xf] %vm4301, %v4272
        %4306 = vst.msk [vmem:[%s163 + $0x10] sm:$0xf] %vm4301, %v4273
        %4307 = vst.msk [vmem:[%s163 + $0x14] sm:$0xf] %vm4301, %v4274
        %4308 = vst.msk [vmem:[%s163 + $0x18] sm:$0xf] %vm4301, %v4275
        %4309 = vst.msk [vmem:[%s163 + $0x1c] sm:$0xf] %vm4301, %v4276
        %4310 = vst.msk [vmem:[%s163 + $0x20] sm:$0xf] %vm4301, %v4277
        %4311 = vst.msk [vmem:[%s163 + $0x24] sm:$0xf] %vm4301, %v4278
        %4312 = vst.msk [vmem:[%s163 + $0x28] sm:$0xf] %vm4301, %v4279
        %4313 = vst.msk [vmem:[%s163 + $0x2c] sm:$0xf] %vm4301, %v4280
        %4314 = vst.msk [vmem:[%s163 + $0x30] sm:$0xf] %vm4301, %v4281
        %4315 = vst.msk [vmem:[%s163 + $0x34] sm:$0xf] %vm4301, %v4282
        %4316 = vst.msk [vmem:[%s163 + $0x38] sm:$0xf] %vm4301, %v4283
        %4317 = vst.msk [vmem:[%s163 + $0x3c] sm:$0xf] %vm4301, %v4284
        %4318 = vst.msk [vmem:[%s163 + $0x40] sm:$0xf] %vm4301, %v4285
        %4319 = vst.msk [vmem:[%s163 + $0x44] sm:$0xf] %vm4301, %v4286
        %4320 = vst.msk [vmem:[%s163 + $0x48] sm:$0xf] %vm4301, %v4287
        %4321 = vst.msk [vmem:[%s163 + $0x4c] sm:$0xf] %vm4301, %v4288
        %4322 = vst.msk [vmem:[%s163 + $0x50] sm:$0xf] %vm4301, %v4289
        %4323 = vst.msk [vmem:[%s163 + $0x54] sm:$0xf] %vm4301, %v4290
        %4324 = vst.msk [vmem:[%s163 + $0x58] sm:$0xf] %vm4301, %v4291
        %4325 = vst.msk [vmem:[%s163 + $0x5c] sm:$0xf] %vm4301, %v4292
        %4326 = vst.msk [vmem:[%s163 + $0x60] sm:$0xf] %vm4301, %v4293
        %4327 = vst.msk [vmem:[%s163 + $0x64] sm:$0xf] %vm4301, %v4294
        %4328 = vst.msk [vmem:[%s163 + $0x68] sm:$0xf] %vm4301, %v4295
        %4329 = vst.msk [vmem:[%s163 + $0x6c] sm:$0xf] %vm4301, %v4296
        %4330 = vst.msk [vmem:[%s163 + $0x70] sm:$0xf] %vm4301, %v4297
        %4331 = vst.msk [vmem:[%s163 + $0x74] sm:$0xf] %vm4301, %v4298
        %4332 = vst.msk [vmem:[%s163 + $0x78] sm:$0xf] %vm4301, %v4299
        %4333 = vst.msk [vmem:[%s163 + $0x7c] sm:$0xf] %vm4301, %v4300
        %s4334 = sand.u32 %s93, 1
        %s4335 = scalar_lea.sflag [#allocation3], %s4334
        %s4336 = sand.u32 %s93, 1
        %s4337 = smul.addr %s4336, 128
        %s4338 = scalar_lea.vmem [#allocation2], %s4337
        // Predicated region
        $region33: #{tpu_custom_call.1} parent=31 // pred_check
          %p4339 = pneg %p103
        $region34: #{tpu_custom_call.1} parent=31 // pred_check_branch
          %4341 = sbr.rel (%p4339) target = $region36
        $region35: #{tpu_custom_call.1} parent=31 // pred_region
          %4343 = vsyncadd %s4335, 0
          %s4344 = smul.addr %s17, 32
          %s4345 = smul.addr %s4344, 4
          %s4346 = scalar_lea.hbm %s3, %s4345
          %s4347 = sshll.u32 %s4338, 4
          %s4348 = int_to_ptr.vmem [resolvable:$true] %s4347
          %s4349 = sshll.u32 %s4346, 4
          %s4350 = int_to_ptr.hbm [resolvable:$true] %s4349
          %4355 = dma.vmem_to_hbm [thread:$0]  %s4348, 2048, %s4350, %s4335, 64, 64, 4
        $region36: #{tpu_custom_call.1} parent=31 // pred_fallthru
          _
      $region32: #{tpu_custom_call.1} parent=5 // pred_fallthru
        _
      %p4356 = scmp.le.s32.totalorder 2, %s12
      // Predicated region
      $region37: #{tpu_custom_call.1} parent=5 // pred_check
        %p4357 = pneg %p4356
      $region38: #{tpu_custom_call.1} parent=5 // pred_check_branch
        %4359 = sbr.rel (%p4357) target = $region40
      $region39: #{tpu_custom_call.1} parent=5 // pred_region
        %s4360 = ssub.s32 %s12, 2
        // Predicated region
        $region41: #{tpu_custom_call.1} parent=39 // pred_check
          %p4361 = pneg %p109
        $region42: #{tpu_custom_call.1} parent=39 // pred_check_branch
          %4363 = sbr.rel (%p4361) target = $region44
        $region43: #{tpu_custom_call.1} parent=39 // pred_region
          %s4364 = sand.u32 %s94, 1
          %s4365 = scalar_lea.sflag [#allocation3], %s4364
          %s4366 = sand.u32 %s94, 1
          %s4367 = smul.addr %s4366, 128
          %s4368 = scalar_lea.vmem [#allocation2], %s4367
          %4370 = dma.done %s4365, 2048
        $region44: #{tpu_custom_call.1} parent=39 // pred_fallthru
          _
      $region40: #{tpu_custom_call.1} parent=5 // pred_fallthru
        _
    $region6: #{tpu_custom_call.1} parent=1 // loop_footer
      %s16 = sadd.s32 1, %s12
    $region7: #{tpu_custom_call.1} parent=1 // loop_footer_branch
      %11 = sbr.rel target = $region3
    $region8: #{tpu_custom_call.1} parent=1 // loop_exit
      _
    %4371 = vsyncpa [#allocation3], 1
    %s4372 = scalar_lea.sflag [#allocation3], 1
    %4373 = vsyncpa %s4372, 1

</llo_original>
